<compile_context>
chip_gen: v7x
topology: tpu7x:2x2x1
jax: 0.10.0
libtpu: 0.0.40
codegen_flags: <defaults>
</compile_context>

<pallas_src>
import functools

import jax
import jax.numpy as jnp
from jax.experimental import pallas as pl
from jax.experimental.pallas import tpu as pltpu

EPS = 1e-5


def _conv3x3_rows(xpad, wcat):
    """3x3 'same' conv over one row tile.

    xpad : (TH+2, W, C) f32 rows (1-row halo included, border rows pre-zeroed)
    wcat : (3, 3*C, C) bf16 with wcat[kw, kh*C + ci, co] = W_torch[co, ci, kh, kw]
    returns (TH, W, C) f32
    """
    thp2, w_dim, c = xpad.shape
    th = thp2 - 2
    # Stack the three kh-shifted row windows on the lane axis -> contraction 3C.
    xcat = jnp.concatenate([xpad[0:th], xpad[1:th + 1], xpad[2:th + 2]],
                           axis=-1)                           # (TH, W, 3C)
    x2 = xcat.reshape(th * w_dim, 3 * c).astype(jnp.bfloat16)
    zcol = jnp.zeros((th, 1, c), jnp.float32)
    acc = jnp.zeros((th, w_dim, c), jnp.float32)
    for kw in range(3):
        t = jnp.dot(x2, wcat[kw], preferred_element_type=jnp.float32)
        t = t.reshape(th, w_dim, c)
        # tap kw contributes x[., w + kw - 1] to out[., w] -> shift the result.
        if kw == 0:      # out[:, w] += t[:, w - 1]
            t = jnp.concatenate([zcol, t[:, :w_dim - 1, :]], axis=1)
        elif kw == 2:    # out[:, w] += t[:, w + 1]
            t = jnp.concatenate([t[:, 1:, :], zcol], axis=1)
        acc = acc + t
    return acc


def _conv_block_kernel(*refs, tile_rows, fuse_bn_relu):
    """conv3x3 over one (n, row-tile) block + per-tile BN partial statistics.

    fuse_bn_relu=False: refs = (x_c, x_top, x_bot, wcat, y, stats)
    fuse_bn_relu=True : refs = (x_c, x_top, x_bot, wcat, affine, y, stats)
                        and the conv input is relu(x * scale + shift).
    """
    if fuse_bn_relu:
        xc_ref, xt_ref, xb_ref, w_ref, ab_ref, y_ref, st_ref = refs
    else:
        xc_ref, xt_ref, xb_ref, w_ref, y_ref, st_ref = refs

    th = tile_rows
    i = pl.program_id(1)
    n_tiles = pl.num_programs(1)

    # (TH+2, W, C): one halo row above + tile rows + one halo row below.
    xpad = jnp.concatenate([xt_ref[0], xc_ref[0], xb_ref[0]], axis=0)

    if fuse_bn_relu:
        scale = ab_ref[0]                                  # (C,)
        shift = ab_ref[1]
        xpad = jnp.maximum(xpad * scale + shift, 0.0)      # BN1 + ReLU (pointwise)

    # Zero the halo rows that fall outside the image (the conv's zero padding).
    rows = jax.lax.broadcasted_iota(jnp.int32, (th + 2, 1, 1), 0)
    keep = jnp.logical_and(jnp.logical_or(rows != 0, i > 0),
                           jnp.logical_or(rows != th + 1, i < n_tiles - 1))
    xpad = jnp.where(keep, xpad, 0.0)

    y = _conv3x3_rows(xpad, w_ref[...])                    # (TH, W, C) f32
    y_ref[...] = y[None]

    # Per-tile BatchNorm partials: sum and *centered* sum of squares
    # (combined globally via the parallel-variance formula -> numerically
    # robust, no E[x^2] - E[x]^2 cancellation).
    w_dim = y.shape[1]
    c = y.shape[2]
    cnt = th * w_dim
    s = jnp.sum(y, axis=(0, 1))                            # (C,)
    m = s * (1.0 / cnt)
    css = jnp.sum((y - m) ** 2, axis=(0, 1))               # (C,)
    st_ref[...] = jnp.concatenate([s[None, :], css[None, :]],
                                  axis=0).reshape(1, 1, 2, c)


def _bn_residual_kernel(x_ref, g_ref, ab_ref, o_ref):
    """out = BN2(g) + x  (lane-dense elementwise)."""
    scale = ab_ref[0]
    shift = ab_ref[1]
    o_ref[...] = g_ref[...] * scale + shift + x_ref[...]


def _pack_conv_weights(w_oihw):
    """(O, I, 3, 3) -> (3, 3*C, C) bf16 with wcat[kw, kh*C+ci, co] = w[co,ci,kh,kw]."""
    o, i, kh, kw = w_oihw.shape
    assert (kh, kw) == (3, 3), "only 3x3 kernels supported"
    w = jnp.transpose(w_oihw, (3, 2, 1, 0))                # (KW, KH, I, O)
    return w.reshape(kw, kh * i, o).astype(jnp.bfloat16)


def _combine_stats(stats, n_tile, n_total):
    """Chan et al. parallel combination of per-tile (sum, centered sumsq)."""
    s = stats[:, :, 0, :]                                  # (N, T, C)
    css = stats[:, :, 1, :]
    mean = jnp.sum(s, axis=(0, 1)) / n_total               # (C,)
    m_t = s / n_tile
    var = (jnp.sum(css, axis=(0, 1))
           + n_tile * jnp.sum((m_t - mean) ** 2, axis=(0, 1))) / n_total
    return mean, var


def _bn_affine(mean, var, gamma, beta):
    scale = gamma * jax.lax.rsqrt(var + EPS)
    shift = beta - mean * scale
    return jnp.stack([scale, shift], axis=0).astype(jnp.float32)   # (2, C)


def residual_layer_forward_nhwc(x_nhwc, w1_oihw, w2_oihw, gamma, beta, *,
                                tile_rows=8):
    """ResidualLayer forward, NHWC in / NHWC out (preferred layout)."""
    n, h, w, c = x_nhwc.shape
    tile_rows = min(tile_rows, h)
    assert h % tile_rows == 0, "H must be divisible by tile_rows"
    t = h // tile_rows

    x = x_nhwc.astype(jnp.float32)
    w1cat = _pack_conv_weights(w1_oihw)
    w2cat = _pack_conv_weights(w2_oihw)
    gamma = gamma.reshape(c).astype(jnp.float32)
    beta = beta.reshape(c).astype(jnp.float32)

    grid = (n, t)
    cp = pltpu.CompilerParams(
        dimension_semantics=("parallel", "parallel"),      # megacore / v7x 2 TCs
        vmem_limit_bytes=32 * 1024 * 1024)                 # safe on v5e/v6e/v7x

    # Row tile + two index-clamped single-row halo blocks (no wrapper padding).
    center = pl.BlockSpec((1, tile_rows, w, c), lambda ni, ti: (ni, ti, 0, 0))
    halo_top = pl.BlockSpec(
        (1, 1, w, c),
        lambda ni, ti: (ni, jnp.maximum(ti * tile_rows - 1, 0), 0, 0))
    halo_bot = pl.BlockSpec(
        (1, 1, w, c),
        lambda ni, ti: (ni, jnp.minimum((ti + 1) * tile_rows, h - 1), 0, 0))
    # Weights / BN affine params: constant index_map -> resident in VMEM.
    w_spec = pl.BlockSpec((3, 3 * c, c), lambda ni, ti: (0, 0, 0))
    ab_spec = pl.BlockSpec((2, c), lambda ni, ti: (0, 0))
    stats_spec = pl.BlockSpec((1, 1, 2, c), lambda ni, ti: (ni, ti, 0, 0))

    y_shape = jax.ShapeDtypeStruct((n, h, w, c), jnp.float32)
    stats_shape = jax.ShapeDtypeStruct((n, t, 2, c), jnp.float32)

    n_tile = tile_rows * w
    n_total = n * h * w

    # ---- pass A: conv1 + partial stats -------------------------------------
    h1, st1 = pl.pallas_call(
        functools.partial(_conv_block_kernel, tile_rows=tile_rows,
                          fuse_bn_relu=False),
        grid=grid,
        in_specs=[center, halo_top, halo_bot, w_spec],
        out_specs=(center, stats_spec),
        out_shape=(y_shape, stats_shape),
        compiler_params=cp,
    )(x, x, x, w1cat)

    mean1, var1 = _combine_stats(st1, n_tile, n_total)
    ab1 = _bn_affine(mean1, var1, gamma, beta)

    # ---- pass B: BN1 + ReLU + conv2 + partial stats ------------------------
    g, st2 = pl.pallas_call(
        functools.partial(_conv_block_kernel, tile_rows=tile_rows,
                          fuse_bn_relu=True),
        grid=grid,
        in_specs=[center, halo_top, halo_bot, w_spec, ab_spec],
        out_specs=(center, stats_spec),
        out_shape=(y_shape, stats_shape),
        compiler_params=cp,
    )(h1, h1, h1, w2cat, ab1)

    mean2, var2 = _combine_stats(st2, n_tile, n_total)
    ab2 = _bn_affine(mean2, var2, gamma, beta)

    # ---- pass C: BN2 + residual add ----------------------------------------
    out = pl.pallas_call(
        _bn_residual_kernel,
        grid=grid,
        in_specs=[center, center, ab_spec],
        out_specs=center,
        out_shape=y_shape,
        compiler_params=cp,
    )(x, g, ab2)

    return out


@functools.partial(jax.jit, static_argnames=("tile_rows",))
def residual_layer_forward(x_nchw, w1_oihw, w2_oihw, gamma, beta, *,
                           tile_rows=8):
    """PyTorch-layout (NCHW) entry point matching ResidualLayer.forward.

    Prefer residual_layer_forward_nhwc end-to-end to avoid the two
    full-tensor layout transposes below (wrapper-side HBM traffic).
    """
    x = jnp.transpose(x_nchw, (0, 2, 3, 1))
    y = residual_layer_forward_nhwc(x, w1_oihw, w2_oihw, gamma, beta,
                                    tile_rows=tile_rows)
    return jnp.transpose(y, (0, 3, 1, 2))


def _reference_nchw(x, w1, w2, gamma, beta):
    """Pure-JAX reference (bf16 matmul operands, f32 accumulation, training-mode
    BatchNorm with shared affine params) for the correctness check."""
    def conv(a, w):
        return jax.lax.conv_general_dilated(
            a.astype(jnp.bfloat16), w.astype(jnp.bfloat16),
            window_strides=(1, 1), padding="SAME",
            dimension_numbers=("NCHW", "OIHW", "NCHW"),
            preferred_element_type=jnp.float32)

    def bn(y):
        mean = jnp.mean(y, axis=(0, 2, 3), keepdims=True)
        var = jnp.mean((y - mean) ** 2, axis=(0, 2, 3), keepdims=True)
        g = gamma.reshape(1, -1, 1, 1)
        b = beta.reshape(1, -1, 1, 1)
        return (y - mean) * jax.lax.rsqrt(var + EPS) * g + b

    hid = jax.nn.relu(bn(conv(x, w1)))
    out = bn(conv(hid, w2))
    return out + x                       # final_relu=False path


if __name__ == "__main__":
    key = jax.random.PRNGKey(0)
    k1, k2, k3, k4, k5 = jax.random.split(key, 5)

    # Small demo shapes. C=128 keeps channels lane-dense (per perf review);
    # the kernels remain correct for any C (block last dim = full C).
    N, C, H, W = 2, 128, 16, 16

    x = jax.random.normal(k1, (N, C, H, W), jnp.float32)
    # Conv2d weights, PyTorch layout (C_out, C_in, KH, KW), bias=False.
    w1 = 0.1 * jax.random.normal(k2, (C, C, 3, 3), jnp.float32)
    w2 = 0.1 * jax.random.normal(k3, (C, C, 3, 3), jnp.float32)
    # Shared BatchNorm2d affine parameters (same norm_layer instance twice).
    gamma = 1.0 + 0.1 * jax.random.normal(k4, (C,), jnp.float32)
    beta = 0.1 * jax.random.normal(k5, (C,), jnp.float32)

    out = residual_layer_forward(x, w1, w2, gamma, beta, tile_rows=8)
    out = jax.block_until_ready(out)

    ref = _reference_nchw(x, w1, w2, gamma, beta)
    max_err = float(jnp.max(jnp.abs(out - ref)))
    assert max_err < 1e-2, f"mismatch vs reference: max abs err = {max_err}"
    print("KERNEL_OK")
</pallas_src>

<mosaic_0001>
module attributes {stable_mosaic.version = 11 : i64} {
  func.func @_conv_block_kernel(%arg0: i32, %arg1: i32, %arg2: memref<1x8x16x128xf32, #tpu.memory_space<vmem>>, %arg3: memref<1x1x16x128xf32, #tpu.memory_space<vmem>>, %arg4: memref<1x1x16x128xf32, #tpu.memory_space<vmem>>, %arg5: memref<3x384x128xbf16, #tpu.memory_space<vmem>>, %arg6: memref<1x8x16x128xf32, #tpu.memory_space<vmem>>, %arg7: memref<1x1x2x128xf32, #tpu.memory_space<vmem>>) attributes {dimension_semantics = [#tpu.dimension_semantics<parallel>, #tpu.dimension_semantics<parallel>], iteration_bounds = array<i64: 2, 2>, scalar_prefetch = 0 : i64, scratch_operands = 0 : i64, tpu.core_type = #tpu.core_type<tc>, window_params = [{transform_indices = @transform_0, window_bounds = array<i64: 1, 8, 16, 128>}, {transform_indices = @transform_1, window_bounds = array<i64: 1, 1, 16, 128>}, {transform_indices = @transform_2, window_bounds = array<i64: 1, 1, 16, 128>}, {pipeline_mode = #tpu.pipeline_mode<synchronous>, transform_indices = @transform_3, window_bounds = array<i64: 3, 384, 128>}, {transform_indices = @transform_4, window_bounds = array<i64: 1, 8, 16, 128>}, {transform_indices = @transform_5, window_bounds = array<i64: 1, 1, 2, 128>}]} {
    %c0 = arith.constant 0 : index
    %c0_0 = arith.constant 0 : index
    %c0_1 = arith.constant 0 : index
    %c0_2 = arith.constant 0 : index
    %0 = vector.load %arg3[%c0, %c0_0, %c0_1, %c0_2] : memref<1x1x16x128xf32, #tpu.memory_space<vmem>>, vector<1x1x16x128xf32>
    %1 = vector.shape_cast %0 : vector<1x1x16x128xf32> to vector<1x16x128xf32>
    %c0_3 = arith.constant 0 : index
    %c0_4 = arith.constant 0 : index
    %c0_5 = arith.constant 0 : index
    %c0_6 = arith.constant 0 : index
    %2 = vector.load %arg2[%c0_3, %c0_4, %c0_5, %c0_6] : memref<1x8x16x128xf32, #tpu.memory_space<vmem>>, vector<1x8x16x128xf32>
    %3 = vector.shape_cast %2 : vector<1x8x16x128xf32> to vector<8x16x128xf32>
    %c0_7 = arith.constant 0 : index
    %c0_8 = arith.constant 0 : index
    %c0_9 = arith.constant 0 : index
    %c0_10 = arith.constant 0 : index
    %4 = vector.load %arg4[%c0_7, %c0_8, %c0_9, %c0_10] : memref<1x1x16x128xf32, #tpu.memory_space<vmem>>, vector<1x1x16x128xf32>
    %5 = vector.shape_cast %4 : vector<1x1x16x128xf32> to vector<1x16x128xf32>
    %6 = tpu.concatenate %1, %3, %5 in 0 : vector<1x16x128xf32>, vector<8x16x128xf32>, vector<1x16x128xf32> -> vector<10x16x128xf32>
    %7 = tpu.iota {dimensions = array<i32: 0>} : vector<10x1x1xi32>
    %c0_i32 = arith.constant 0 : i32
    %8 = vector.broadcast %c0_i32 : i32 to vector<10x1x1xi32>
    %9 = arith.cmpi ne, %7, %8 : vector<10x1x1xi32>
    %c0_i32_11 = arith.constant 0 : i32
    %10 = arith.cmpi sgt, %arg1, %c0_i32_11 : i32
    %11 = vector.broadcast %10 : i1 to vector<10x1x1xi1>
    %12 = arith.ori %9, %11 : vector<10x1x1xi1>
    %c9_i32 = arith.constant 9 : i32
    %13 = vector.broadcast %c9_i32 : i32 to vector<10x1x1xi32>
    %14 = arith.cmpi ne, %7, %13 : vector<10x1x1xi32>
    %c1_i32 = arith.constant 1 : i32
    %15 = arith.cmpi slt, %arg1, %c1_i32 : i32
    %16 = vector.broadcast %15 : i1 to vector<10x1x1xi1>
    %17 = arith.ori %14, %16 : vector<10x1x1xi1>
    %18 = arith.andi %12, %17 : vector<10x1x1xi1>
    %cst = arith.constant 0.000000e+00 : f32
    %19 = vector.shape_cast %18 : vector<10x1x1xi1> to vector<10x1x1xi1>
    %20 = vector.broadcast %19 : vector<10x1x1xi1> to vector<10x16x128xi1>
    %21 = vector.broadcast %cst : f32 to vector<10x16x128xf32>
    %22 = arith.select %20, %6, %21 : vector<10x16x128xi1>, vector<10x16x128xf32>
    %c0_12 = arith.constant 0 : index
    %c0_13 = arith.constant 0 : index
    %c0_14 = arith.constant 0 : index
    %23 = vector.load %arg5[%c0_12, %c0_13, %c0_14] : memref<3x384x128xbf16, #tpu.memory_space<vmem>>, vector<3x384x128xbf16>
    %24 = vector.extract_strided_slice %22 {offsets = [0, 0, 0], sizes = [8, 16, 128], strides = [1, 1, 1]} : vector<10x16x128xf32> to vector<8x16x128xf32>
    %25 = vector.extract_strided_slice %22 {offsets = [1, 0, 0], sizes = [8, 16, 128], strides = [1, 1, 1]} : vector<10x16x128xf32> to vector<8x16x128xf32>
    %26 = vector.extract_strided_slice %22 {offsets = [2, 0, 0], sizes = [8, 16, 128], strides = [1, 1, 1]} : vector<10x16x128xf32> to vector<8x16x128xf32>
    %27 = tpu.concatenate %24, %25, %26 in 2 : vector<8x16x128xf32>, vector<8x16x128xf32>, vector<8x16x128xf32> -> vector<8x16x384xf32>
    %28 = vector.shape_cast %27 : vector<8x16x384xf32> to vector<128x384xf32>
    %29 = arith.truncf %28 : vector<128x384xf32> to vector<128x384xbf16>
    %cst_15 = arith.constant 0.000000e+00 : f32
    %30 = vector.broadcast %cst_15 : f32 to vector<8x1x128xf32>
    %cst_16 = arith.constant 0.000000e+00 : f32
    %31 = vector.broadcast %cst_16 : f32 to vector<8x16x128xf32>
    %32 = vector.extract_strided_slice %23 {offsets = [0, 0, 0], sizes = [1, 384, 128], strides = [1, 1, 1]} : vector<3x384x128xbf16> to vector<1x384x128xbf16>
    %33 = vector.shape_cast %32 : vector<1x384x128xbf16> to vector<384x128xbf16>
    %cst_17 = arith.constant dense<0.000000e+00> : vector<128x128xf32>
    %34 = tpu.matmul %29, %33, %cst_17 {dimension_numbers = #tpu.dot_dimension_numbers<[1], [0], [0], [1], [0, 0, 1, 1], [], []>} : vector<128x384xbf16>, vector<384x128xbf16>, vector<128x128xf32> -> vector<128x128xf32>
    %35 = vector.shape_cast %34 : vector<128x128xf32> to vector<8x16x128xf32>
    %36 = vector.extract_strided_slice %35 {offsets = [0, 0, 0], sizes = [8, 15, 128], strides = [1, 1, 1]} : vector<8x16x128xf32> to vector<8x15x128xf32>
    %37 = tpu.concatenate %30, %36 in 1 : vector<8x1x128xf32>, vector<8x15x128xf32> -> vector<8x16x128xf32>
    %38 = arith.addf %31, %37 : vector<8x16x128xf32>
    %39 = vector.extract_strided_slice %23 {offsets = [1, 0, 0], sizes = [1, 384, 128], strides = [1, 1, 1]} : vector<3x384x128xbf16> to vector<1x384x128xbf16>
    %40 = vector.shape_cast %39 : vector<1x384x128xbf16> to vector<384x128xbf16>
    %cst_18 = arith.constant dense<0.000000e+00> : vector<128x128xf32>
    %41 = tpu.matmul %29, %40, %cst_18 {dimension_numbers = #tpu.dot_dimension_numbers<[1], [0], [0], [1], [0, 0, 1, 1], [], []>} : vector<128x384xbf16>, vector<384x128xbf16>, vector<128x128xf32> -> vector<128x128xf32>
    %42 = vector.shape_cast %41 : vector<128x128xf32> to vector<8x16x128xf32>
    %43 = arith.addf %38, %42 : vector<8x16x128xf32>
    %44 = vector.extract_strided_slice %23 {offsets = [2, 0, 0], sizes = [1, 384, 128], strides = [1, 1, 1]} : vector<3x384x128xbf16> to vector<1x384x128xbf16>
    %45 = vector.shape_cast %44 : vector<1x384x128xbf16> to vector<384x128xbf16>
    %cst_19 = arith.constant dense<0.000000e+00> : vector<128x128xf32>
    %46 = tpu.matmul %29, %45, %cst_19 {dimension_numbers = #tpu.dot_dimension_numbers<[1], [0], [0], [1], [0, 0, 1, 1], [], []>} : vector<128x384xbf16>, vector<384x128xbf16>, vector<128x128xf32> -> vector<128x128xf32>
    %47 = vector.shape_cast %46 : vector<128x128xf32> to vector<8x16x128xf32>
    %48 = vector.extract_strided_slice %47 {offsets = [0, 1, 0], sizes = [8, 15, 128], strides = [1, 1, 1]} : vector<8x16x128xf32> to vector<8x15x128xf32>
    %49 = tpu.concatenate %48, %30 in 1 : vector<8x15x128xf32>, vector<8x1x128xf32> -> vector<8x16x128xf32>
    %50 = arith.addf %43, %49 : vector<8x16x128xf32>
    %51 = vector.shape_cast %50 : vector<8x16x128xf32> to vector<1x8x16x128xf32>
    %c0_20 = arith.constant 0 : index
    %c0_21 = arith.constant 0 : index
    %c0_22 = arith.constant 0 : index
    %c0_23 = arith.constant 0 : index
    %52 = vector.load %arg6[%c0_20, %c0_21, %c0_22, %c0_23] : memref<1x8x16x128xf32, #tpu.memory_space<vmem>>, vector<1x8x16x128xf32>
    tpu.vector_store %arg6[%c0_20, %c0_21, %c0_22, %c0_23], %51 {strides = array<i32>} : memref<1x8x16x128xf32, #tpu.memory_space<vmem>>, vector<1x8x16x128xf32>,
    %cst_24 = arith.constant dense<0.000000e+00> : vector<128xf32>
    %53 = vector.multi_reduction <add>, %50, %cst_24 [0, 1] : vector<8x16x128xf32> to vector<128xf32>
    %cst_25 = arith.constant 7.812500e-03 : f32
    %54 = vector.broadcast %cst_25 : f32 to vector<128xf32>
    %55 = arith.mulf %53, %54 : vector<128xf32>
    %56 = vector.shape_cast %55 : vector<128xf32> to vector<1x1x128xf32>
    %57 = vector.broadcast %56 : vector<1x1x128xf32> to vector<8x16x128xf32>
    %58 = arith.subf %50, %57 : vector<8x16x128xf32>
    %59 = arith.mulf %58, %58 : vector<8x16x128xf32>
    %cst_26 = arith.constant dense<0.000000e+00> : vector<128xf32>
    %60 = vector.multi_reduction <add>, %59, %cst_26 [0, 1] : vector<8x16x128xf32> to vector<128xf32>
    %61 = vector.shape_cast %53 : vector<128xf32> to vector<1x128xf32>
    %62 = vector.shape_cast %60 : vector<128xf32> to vector<1x128xf32>
    %63 = tpu.concatenate %61, %62 in 0 : vector<1x128xf32>, vector<1x128xf32> -> vector<2x128xf32>
    %64 = vector.shape_cast %63 : vector<2x128xf32> to vector<1x1x2x128xf32>
    %c0_27 = arith.constant 0 : index
    %c0_28 = arith.constant 0 : index
    %c0_29 = arith.constant 0 : index
    %c0_30 = arith.constant 0 : index
    %65 = vector.load %arg7[%c0_27, %c0_28, %c0_29, %c0_30] : memref<1x1x2x128xf32, #tpu.memory_space<vmem>>, vector<1x1x2x128xf32>
    tpu.vector_store %arg7[%c0_27, %c0_28, %c0_29, %c0_30], %64 {strides = array<i32>} : memref<1x1x2x128xf32, #tpu.memory_space<vmem>>, vector<1x1x2x128xf32>,
    return
  }
  func.func @transform_0(%arg0: i32, %arg1: i32) -> (i32, i32, i32, i32) {
    %c0_i32 = arith.constant 0 : i32
    %c0_i32_0 = arith.constant 0 : i32
    %c0_i32_1 = arith.constant 0 : i32
    return %arg0, %arg1, %c0_i32, %c0_i32_0 : i32, i32, i32, i32
  }
  func.func @transform_1(%arg0: i32, %arg1: i32) -> (i32, i32, i32, i32) {
    %c8_i32 = arith.constant 8 : i32
    %0 = arith.muli %arg1, %c8_i32 : i32
    %c1_i32 = arith.constant 1 : i32
    %1 = arith.subi %0, %c1_i32 : i32
    %c0_i32 = arith.constant 0 : i32
    %2 = arith.maxsi %1, %c0_i32 : i32
    %c0_i32_0 = arith.constant 0 : i32
    %c0_i32_1 = arith.constant 0 : i32
    %c0_i32_2 = arith.constant 0 : i32
    return %arg0, %2, %c0_i32_0, %c0_i32_1 : i32, i32, i32, i32
  }
  func.func @transform_2(%arg0: i32, %arg1: i32) -> (i32, i32, i32, i32) {
    %c1_i32 = arith.constant 1 : i32
    %0 = arith.addi %arg1, %c1_i32 : i32
    %c8_i32 = arith.constant 8 : i32
    %1 = arith.muli %0, %c8_i32 : i32
    %c15_i32 = arith.constant 15 : i32
    %2 = arith.minsi %1, %c15_i32 : i32
    %c0_i32 = arith.constant 0 : i32
    %c0_i32_0 = arith.constant 0 : i32
    %c0_i32_1 = arith.constant 0 : i32
    return %arg0, %2, %c0_i32, %c0_i32_0 : i32, i32, i32, i32
  }
  func.func @transform_3(%arg0: i32, %arg1: i32) -> (i32, i32, i32) {
    %c0_i32 = arith.constant 0 : i32
    %c0_i32_0 = arith.constant 0 : i32
    %c0_i32_1 = arith.constant 0 : i32
    %c0_i32_2 = arith.constant 0 : i32
    return %c0_i32, %c0_i32_0, %c0_i32_1 : i32, i32, i32
  }
  func.func @transform_4(%arg0: i32, %arg1: i32) -> (i32, i32, i32, i32) {
    %c0_i32 = arith.constant 0 : i32
    %c0_i32_0 = arith.constant 0 : i32
    %c0_i32_1 = arith.constant 0 : i32
    return %arg0, %arg1, %c0_i32, %c0_i32_0 : i32, i32, i32, i32
  }
  func.func @transform_5(%arg0: i32, %arg1: i32) -> (i32, i32, i32, i32) {
    %c0_i32 = arith.constant 0 : i32
    %c0_i32_0 = arith.constant 0 : i32
    %c0_i32_1 = arith.constant 0 : i32
    return %arg0, %arg1, %c0_i32, %c0_i32_0 : i32, i32, i32, i32
  }
}

module attributes {stable_mosaic.version = 11 : i64} {
  func.func @_conv_block_kernel(%arg0: i32, %arg1: i32, %arg2: memref<1x8x16x128xf32, #tpu.memory_space<vmem>>, %arg3: memref<1x1x16x128xf32, #tpu.memory_space<vmem>>, %arg4: memref<1x1x16x128xf32, #tpu.memory_space<vmem>>, %arg5: memref<3x384x128xbf16, #tpu.memory_space<vmem>>, %arg6: memref<2x128xf32, #tpu.memory_space<vmem>>, %arg7: memref<1x8x16x128xf32, #tpu.memory_space<vmem>>, %arg8: memref<1x1x2x128xf32, #tpu.memory_space<vmem>>) attributes {dimension_semantics = [#tpu.dimension_semantics<parallel>, #tpu.dimension_semantics<parallel>], iteration_bounds = array<i64: 2, 2>, scalar_prefetch = 0 : i64, scratch_operands = 0 : i64, tpu.core_type = #tpu.core_type<tc>, window_params = [{transform_indices = @transform_0, window_bounds = array<i64: 1, 8, 16, 128>}, {transform_indices = @transform_1, window_bounds = array<i64: 1, 1, 16, 128>}, {transform_indices = @transform_2, window_bounds = array<i64: 1, 1, 16, 128>}, {pipeline_mode = #tpu.pipeline_mode<synchronous>, transform_indices = @transform_3, window_bounds = array<i64: 3, 384, 128>}, {pipeline_mode = #tpu.pipeline_mode<synchronous>, transform_indices = @transform_4, window_bounds = array<i64: 2, 128>}, {transform_indices = @transform_5, window_bounds = array<i64: 1, 8, 16, 128>}, {transform_indices = @transform_6, window_bounds = array<i64: 1, 1, 2, 128>}]} {
    %c0 = arith.constant 0 : index
    %c0_0 = arith.constant 0 : index
    %c0_1 = arith.constant 0 : index
    %c0_2 = arith.constant 0 : index
    %0 = vector.load %arg3[%c0, %c0_0, %c0_1, %c0_2] : memref<1x1x16x128xf32, #tpu.memory_space<vmem>>, vector<1x1x16x128xf32>
    %1 = vector.shape_cast %0 : vector<1x1x16x128xf32> to vector<1x16x128xf32>
    %c0_3 = arith.constant 0 : index
    %c0_4 = arith.constant 0 : index
    %c0_5 = arith.constant 0 : index
    %c0_6 = arith.constant 0 : index
    %2 = vector.load %arg2[%c0_3, %c0_4, %c0_5, %c0_6] : memref<1x8x16x128xf32, #tpu.memory_space<vmem>>, vector<1x8x16x128xf32>
    %3 = vector.shape_cast %2 : vector<1x8x16x128xf32> to vector<8x16x128xf32>
    %c0_7 = arith.constant 0 : index
    %c0_8 = arith.constant 0 : index
    %c0_9 = arith.constant 0 : index
    %c0_10 = arith.constant 0 : index
    %4 = vector.load %arg4[%c0_7, %c0_8, %c0_9, %c0_10] : memref<1x1x16x128xf32, #tpu.memory_space<vmem>>, vector<1x1x16x128xf32>
    %5 = vector.shape_cast %4 : vector<1x1x16x128xf32> to vector<1x16x128xf32>
    %6 = tpu.concatenate %1, %3, %5 in 0 : vector<1x16x128xf32>, vector<8x16x128xf32>, vector<1x16x128xf32> -> vector<10x16x128xf32>
    %c0_11 = arith.constant 0 : index
    %c0_12 = arith.constant 0 : index
    %7 = vector.load %arg6[%c0_11, %c0_12] : memref<2x128xf32, #tpu.memory_space<vmem>>, vector<1x128xf32>
    %8 = vector.shape_cast %7 : vector<1x128xf32> to vector<128xf32>
    %c1 = arith.constant 1 : index
    %c0_13 = arith.constant 0 : index
    %9 = vector.load %arg6[%c1, %c0_13] : memref<2x128xf32, #tpu.memory_space<vmem>>, vector<1x128xf32>
    %10 = vector.shape_cast %9 : vector<1x128xf32> to vector<128xf32>
    %11 = vector.shape_cast %8 : vector<128xf32> to vector<1x1x128xf32>
    %12 = vector.broadcast %11 : vector<1x1x128xf32> to vector<10x16x128xf32>
    %13 = arith.mulf %6, %12 : vector<10x16x128xf32>
    %14 = vector.shape_cast %10 : vector<128xf32> to vector<1x1x128xf32>
    %15 = vector.broadcast %14 : vector<1x1x128xf32> to vector<10x16x128xf32>
    %16 = arith.addf %13, %15 : vector<10x16x128xf32>
    %cst = arith.constant 0.000000e+00 : f32
    %17 = vector.broadcast %cst : f32 to vector<10x16x128xf32>
    %18 = arith.maximumf %16, %17 : vector<10x16x128xf32>
    %19 = tpu.iota {dimensions = array<i32: 0>} : vector<10x1x1xi32>
    %c0_i32 = arith.constant 0 : i32
    %20 = vector.broadcast %c0_i32 : i32 to vector<10x1x1xi32>
    %21 = arith.cmpi ne, %19, %20 : vector<10x1x1xi32>
    %c0_i32_14 = arith.constant 0 : i32
    %22 = arith.cmpi sgt, %arg1, %c0_i32_14 : i32
    %23 = vector.broadcast %22 : i1 to vector<10x1x1xi1>
    %24 = arith.ori %21, %23 : vector<10x1x1xi1>
    %c9_i32 = arith.constant 9 : i32
    %25 = vector.broadcast %c9_i32 : i32 to vector<10x1x1xi32>
    %26 = arith.cmpi ne, %19, %25 : vector<10x1x1xi32>
    %c1_i32 = arith.constant 1 : i32
    %27 = arith.cmpi slt, %arg1, %c1_i32 : i32
    %28 = vector.broadcast %27 : i1 to vector<10x1x1xi1>
    %29 = arith.ori %26, %28 : vector<10x1x1xi1>
    %30 = arith.andi %24, %29 : vector<10x1x1xi1>
    %cst_15 = arith.constant 0.000000e+00 : f32
    %31 = vector.shape_cast %30 : vector<10x1x1xi1> to vector<10x1x1xi1>
    %32 = vector.broadcast %31 : vector<10x1x1xi1> to vector<10x16x128xi1>
    %33 = vector.broadcast %cst_15 : f32 to vector<10x16x128xf32>
    %34 = arith.select %32, %18, %33 : vector<10x16x128xi1>, vector<10x16x128xf32>
    %c0_16 = arith.constant 0 : index
    %c0_17 = arith.constant 0 : index
    %c0_18 = arith.constant 0 : index
    %35 = vector.load %arg5[%c0_16, %c0_17, %c0_18] : memref<3x384x128xbf16, #tpu.memory_space<vmem>>, vector<3x384x128xbf16>
    %36 = vector.extract_strided_slice %34 {offsets = [0, 0, 0], sizes = [8, 16, 128], strides = [1, 1, 1]} : vector<10x16x128xf32> to vector<8x16x128xf32>
    %37 = vector.extract_strided_slice %34 {offsets = [1, 0, 0], sizes = [8, 16, 128], strides = [1, 1, 1]} : vector<10x16x128xf32> to vector<8x16x128xf32>
    %38 = vector.extract_strided_slice %34 {offsets = [2, 0, 0], sizes = [8, 16, 128], strides = [1, 1, 1]} : vector<10x16x128xf32> to vector<8x16x128xf32>
    %39 = tpu.concatenate %36, %37, %38 in 2 : vector<8x16x128xf32>, vector<8x16x128xf32>, vector<8x16x128xf32> -> vector<8x16x384xf32>
    %40 = vector.shape_cast %39 : vector<8x16x384xf32> to vector<128x384xf32>
    %41 = arith.truncf %40 : vector<128x384xf32> to vector<128x384xbf16>
    %cst_19 = arith.constant 0.000000e+00 : f32
    %42 = vector.broadcast %cst_19 : f32 to vector<8x1x128xf32>
    %cst_20 = arith.constant 0.000000e+00 : f32
    %43 = vector.broadcast %cst_20 : f32 to vector<8x16x128xf32>
    %44 = vector.extract_strided_slice %35 {offsets = [0, 0, 0], sizes = [1, 384, 128], strides = [1, 1, 1]} : vector<3x384x128xbf16> to vector<1x384x128xbf16>
    %45 = vector.shape_cast %44 : vector<1x384x128xbf16> to vector<384x128xbf16>
    %cst_21 = arith.constant dense<0.000000e+00> : vector<128x128xf32>
    %46 = tpu.matmul %41, %45, %cst_21 {dimension_numbers = #tpu.dot_dimension_numbers<[1], [0], [0], [1], [0, 0, 1, 1], [], []>} : vector<128x384xbf16>, vector<384x128xbf16>, vector<128x128xf32> -> vector<128x128xf32>
    %47 = vector.shape_cast %46 : vector<128x128xf32> to vector<8x16x128xf32>
    %48 = vector.extract_strided_slice %47 {offsets = [0, 0, 0], sizes = [8, 15, 128], strides = [1, 1, 1]} : vector<8x16x128xf32> to vector<8x15x128xf32>
    %49 = tpu.concatenate %42, %48 in 1 : vector<8x1x128xf32>, vector<8x15x128xf32> -> vector<8x16x128xf32>
    %50 = arith.addf %43, %49 : vector<8x16x128xf32>
    %51 = vector.extract_strided_slice %35 {offsets = [1, 0, 0], sizes = [1, 384, 128], strides = [1, 1, 1]} : vector<3x384x128xbf16> to vector<1x384x128xbf16>
    %52 = vector.shape_cast %51 : vector<1x384x128xbf16> to vector<384x128xbf16>
    %cst_22 = arith.constant dense<0.000000e+00> : vector<128x128xf32>
    %53 = tpu.matmul %41, %52, %cst_22 {dimension_numbers = #tpu.dot_dimension_numbers<[1], [0], [0], [1], [0, 0, 1, 1], [], []>} : vector<128x384xbf16>, vector<384x128xbf16>, vector<128x128xf32> -> vector<128x128xf32>
    %54 = vector.shape_cast %53 : vector<128x128xf32> to vector<8x16x128xf32>
    %55 = arith.addf %50, %54 : vector<8x16x128xf32>
    %56 = vector.extract_strided_slice %35 {offsets = [2, 0, 0], sizes = [1, 384, 128], strides = [1, 1, 1]} : vector<3x384x128xbf16> to vector<1x384x128xbf16>
    %57 = vector.shape_cast %56 : vector<1x384x128xbf16> to vector<384x128xbf16>
    %cst_23 = arith.constant dense<0.000000e+00> : vector<128x128xf32>
    %58 = tpu.matmul %41, %57, %cst_23 {dimension_numbers = #tpu.dot_dimension_numbers<[1], [0], [0], [1], [0, 0, 1, 1], [], []>} : vector<128x384xbf16>, vector<384x128xbf16>, vector<128x128xf32> -> vector<128x128xf32>
    %59 = vector.shape_cast %58 : vector<128x128xf32> to vector<8x16x128xf32>
    %60 = vector.extract_strided_slice %59 {offsets = [0, 1, 0], sizes = [8, 15, 128], strides = [1, 1, 1]} : vector<8x16x128xf32> to vector<8x15x128xf32>
    %61 = tpu.concatenate %60, %42 in 1 : vector<8x15x128xf32>, vector<8x1x128xf32> -> vector<8x16x128xf32>
    %62 = arith.addf %55, %61 : vector<8x16x128xf32>
    %63 = vector.shape_cast %62 : vector<8x16x128xf32> to vector<1x8x16x128xf32>
    %c0_24 = arith.constant 0 : index
    %c0_25 = arith.constant 0 : index
    %c0_26 = arith.constant 0 : index
    %c0_27 = arith.constant 0 : index
    %64 = vector.load %arg7[%c0_24, %c0_25, %c0_26, %c0_27] : memref<1x8x16x128xf32, #tpu.memory_space<vmem>>, vector<1x8x16x128xf32>
    tpu.vector_store %arg7[%c0_24, %c0_25, %c0_26, %c0_27], %63 {strides = array<i32>} : memref<1x8x16x128xf32, #tpu.memory_space<vmem>>, vector<1x8x16x128xf32>,
    %cst_28 = arith.constant dense<0.000000e+00> : vector<128xf32>
    %65 = vector.multi_reduction <add>, %62, %cst_28 [0, 1] : vector<8x16x128xf32> to vector<128xf32>
    %cst_29 = arith.constant 7.812500e-03 : f32
    %66 = vector.broadcast %cst_29 : f32 to vector<128xf32>
    %67 = arith.mulf %65, %66 : vector<128xf32>
    %68 = vector.shape_cast %67 : vector<128xf32> to vector<1x1x128xf32>
    %69 = vector.broadcast %68 : vector<1x1x128xf32> to vector<8x16x128xf32>
    %70 = arith.subf %62, %69 : vector<8x16x128xf32>
    %71 = arith.mulf %70, %70 : vector<8x16x128xf32>
    %cst_30 = arith.constant dense<0.000000e+00> : vector<128xf32>
    %72 = vector.multi_reduction <add>, %71, %cst_30 [0, 1] : vector<8x16x128xf32> to vector<128xf32>
    %73 = vector.shape_cast %65 : vector<128xf32> to vector<1x128xf32>
    %74 = vector.shape_cast %72 : vector<128xf32> to vector<1x128xf32>
    %75 = tpu.concatenate %73, %74 in 0 : vector<1x128xf32>, vector<1x128xf32> -> vector<2x128xf32>
    %76 = vector.shape_cast %75 : vector<2x128xf32> to vector<1x1x2x128xf32>
    %c0_31 = arith.constant 0 : index
    %c0_32 = arith.constant 0 : index
    %c0_33 = arith.constant 0 : index
    %c0_34 = arith.constant 0 : index
    %77 = vector.load %arg8[%c0_31, %c0_32, %c0_33, %c0_34] : memref<1x1x2x128xf32, #tpu.memory_space<vmem>>, vector<1x1x2x128xf32>
    tpu.vector_store %arg8[%c0_31, %c0_32, %c0_33, %c0_34], %76 {strides = array<i32>} : memref<1x1x2x128xf32, #tpu.memory_space<vmem>>, vector<1x1x2x128xf32>,
    return
  }
  func.func @transform_0(%arg0: i32, %arg1: i32) -> (i32, i32, i32, i32) {
    %c0_i32 = arith.constant 0 : i32
    %c0_i32_0 = arith.constant 0 : i32
    %c0_i32_1 = arith.constant 0 : i32
    return %arg0, %arg1, %c0_i32, %c0_i32_0 : i32, i32, i32, i32
  }
  func.func @transform_1(%arg0: i32, %arg1: i32) -> (i32, i32, i32, i32) {
    %c8_i32 = arith.constant 8 : i32
    %0 = arith.muli %arg1, %c8_i32 : i32
    %c1_i32 = arith.constant 1 : i32
    %1 = arith.subi %0, %c1_i32 : i32
    %c0_i32 = arith.constant 0 : i32
    %2 = arith.maxsi %1, %c0_i32 : i32
    %c0_i32_0 = arith.constant 0 : i32
    %c0_i32_1 = arith.constant 0 : i32
    %c0_i32_2 = arith.constant 0 : i32
    return %arg0, %2, %c0_i32_0, %c0_i32_1 : i32, i32, i32, i32
  }
  func.func @transform_2(%arg0: i32, %arg1: i32) -> (i32, i32, i32, i32) {
    %c1_i32 = arith.constant 1 : i32
    %0 = arith.addi %arg1, %c1_i32 : i32
    %c8_i32 = arith.constant 8 : i32
    %1 = arith.muli %0, %c8_i32 : i32
    %c15_i32 = arith.constant 15 : i32
    %2 = arith.minsi %1, %c15_i32 : i32
    %c0_i32 = arith.constant 0 : i32
    %c0_i32_0 = arith.constant 0 : i32
    %c0_i32_1 = arith.constant 0 : i32
    return %arg0, %2, %c0_i32, %c0_i32_0 : i32, i32, i32, i32
  }
  func.func @transform_3(%arg0: i32, %arg1: i32) -> (i32, i32, i32) {
    %c0_i32 = arith.constant 0 : i32
    %c0_i32_0 = arith.constant 0 : i32
    %c0_i32_1 = arith.constant 0 : i32
    %c0_i32_2 = arith.constant 0 : i32
    return %c0_i32, %c0_i32_0, %c0_i32_1 : i32, i32, i32
  }
  func.func @transform_4(%arg0: i32, %arg1: i32) -> (i32, i32) {
    %c0_i32 = arith.constant 0 : i32
    %c0_i32_0 = arith.constant 0 : i32
    %c0_i32_1 = arith.constant 0 : i32
    return %c0_i32, %c0_i32_0 : i32, i32
  }
  func.func @transform_5(%arg0: i32, %arg1: i32) -> (i32, i32, i32, i32) {
    %c0_i32 = arith.constant 0 : i32
    %c0_i32_0 = arith.constant 0 : i32
    %c0_i32_1 = arith.constant 0 : i32
    return %arg0, %arg1, %c0_i32, %c0_i32_0 : i32, i32, i32, i32
  }
  func.func @transform_6(%arg0: i32, %arg1: i32) -> (i32, i32, i32, i32) {
    %c0_i32 = arith.constant 0 : i32
    %c0_i32_0 = arith.constant 0 : i32
    %c0_i32_1 = arith.constant 0 : i32
    return %arg0, %arg1, %c0_i32, %c0_i32_0 : i32, i32, i32, i32
  }
}

module attributes {stable_mosaic.version = 11 : i64} {
  func.func @_bn_residual_kernel(%arg0: i32, %arg1: i32, %arg2: memref<1x8x16x128xf32, #tpu.memory_space<vmem>>, %arg3: memref<1x8x16x128xf32, #tpu.memory_space<vmem>>, %arg4: memref<2x128xf32, #tpu.memory_space<vmem>>, %arg5: memref<1x8x16x128xf32, #tpu.memory_space<vmem>>) attributes {dimension_semantics = [#tpu.dimension_semantics<parallel>, #tpu.dimension_semantics<parallel>], iteration_bounds = array<i64: 2, 2>, scalar_prefetch = 0 : i64, scratch_operands = 0 : i64, tpu.core_type = #tpu.core_type<tc>, window_params = [{transform_indices = @transform_0, window_bounds = array<i64: 1, 8, 16, 128>}, {transform_indices = @transform_1, window_bounds = array<i64: 1, 8, 16, 128>}, {pipeline_mode = #tpu.pipeline_mode<synchronous>, transform_indices = @transform_2, window_bounds = array<i64: 2, 128>}, {transform_indices = @transform_3, window_bounds = array<i64: 1, 8, 16, 128>}]} {
    %c0 = arith.constant 0 : index
    %c0_0 = arith.constant 0 : index
    %0 = vector.load %arg4[%c0, %c0_0] : memref<2x128xf32, #tpu.memory_space<vmem>>, vector<1x128xf32>
    %1 = vector.shape_cast %0 : vector<1x128xf32> to vector<128xf32>
    %c1 = arith.constant 1 : index
    %c0_1 = arith.constant 0 : index
    %2 = vector.load %arg4[%c1, %c0_1] : memref<2x128xf32, #tpu.memory_space<vmem>>, vector<1x128xf32>
    %3 = vector.shape_cast %2 : vector<1x128xf32> to vector<128xf32>
    %c0_2 = arith.constant 0 : index
    %c0_3 = arith.constant 0 : index
    %c0_4 = arith.constant 0 : index
    %c0_5 = arith.constant 0 : index
    %4 = vector.load %arg3[%c0_2, %c0_3, %c0_4, %c0_5] : memref<1x8x16x128xf32, #tpu.memory_space<vmem>>, vector<1x8x16x128xf32>
    %5 = vector.shape_cast %1 : vector<128xf32> to vector<1x1x1x128xf32>
    %6 = vector.broadcast %5 : vector<1x1x1x128xf32> to vector<1x8x16x128xf32>
    %7 = arith.mulf %4, %6 : vector<1x8x16x128xf32>
    %8 = vector.shape_cast %3 : vector<128xf32> to vector<1x1x1x128xf32>
    %9 = vector.broadcast %8 : vector<1x1x1x128xf32> to vector<1x8x16x128xf32>
    %10 = arith.addf %7, %9 : vector<1x8x16x128xf32>
    %c0_6 = arith.constant 0 : index
    %c0_7 = arith.constant 0 : index
    %c0_8 = arith.constant 0 : index
    %c0_9 = arith.constant 0 : index
    %11 = vector.load %arg2[%c0_6, %c0_7, %c0_8, %c0_9] : memref<1x8x16x128xf32, #tpu.memory_space<vmem>>, vector<1x8x16x128xf32>
    %12 = arith.addf %10, %11 : vector<1x8x16x128xf32>
    %c0_10 = arith.constant 0 : index
    %c0_11 = arith.constant 0 : index
    %c0_12 = arith.constant 0 : index
    %c0_13 = arith.constant 0 : index
    %13 = vector.load %arg5[%c0_10, %c0_11, %c0_12, %c0_13] : memref<1x8x16x128xf32, #tpu.memory_space<vmem>>, vector<1x8x16x128xf32>
    tpu.vector_store %arg5[%c0_10, %c0_11, %c0_12, %c0_13], %12 {strides = array<i32>} : memref<1x8x16x128xf32, #tpu.memory_space<vmem>>, vector<1x8x16x128xf32>,
    return
  }
  func.func @transform_0(%arg0: i32, %arg1: i32) -> (i32, i32, i32, i32) {
    %c0_i32 = arith.constant 0 : i32
    %c0_i32_0 = arith.constant 0 : i32
    %c0_i32_1 = arith.constant 0 : i32
    return %arg0, %arg1, %c0_i32, %c0_i32_0 : i32, i32, i32, i32
  }
  func.func @transform_1(%arg0: i32, %arg1: i32) -> (i32, i32, i32, i32) {
    %c0_i32 = arith.constant 0 : i32
    %c0_i32_0 = arith.constant 0 : i32
    %c0_i32_1 = arith.constant 0 : i32
    return %arg0, %arg1, %c0_i32, %c0_i32_0 : i32, i32, i32, i32
  }
  func.func @transform_2(%arg0: i32, %arg1: i32) -> (i32, i32) {
    %c0_i32 = arith.constant 0 : i32
    %c0_i32_0 = arith.constant 0 : i32
    %c0_i32_1 = arith.constant 0 : i32
    return %c0_i32, %c0_i32_0 : i32, i32
  }
  func.func @transform_3(%arg0: i32, %arg1: i32) -> (i32, i32, i32, i32) {
    %c0_i32 = arith.constant 0 : i32
    %c0_i32_0 = arith.constant 0 : i32
    %c0_i32_1 = arith.constant 0 : i32
    return %arg0, %arg1, %c0_i32, %c0_i32_0 : i32, i32, i32, i32
  }
}

</mosaic_0001>

<llo_original>
// kernel: residual_layer_forward.5
$region0: #{residual_layer_forward.5}
  #allocation0 [shape = 'u32[]', space=smem, size = 0x4, offset = 0x4, fixed_abs, tag = 'smem constant byte address 0x4 - core index']
  #allocation1 [shape = 'u32[144,128]{1,0:T(1,128)}', space=vmem, size = 0x12000, scoped, tag = 'internal scratch']
  %s0 = inlined_call_operand.vmem [shape: f32[2,16,16,128], index: 0, kind: input, shape index: {}]
  %s1 = inlined_call_operand.vmem [shape: f32[2,16,16,128], index: 1, kind: input, shape index: {}]
  %s2 = inlined_call_operand.vmem [shape: f32[2,128], index: 2, kind: input, shape index: {}]
  %s3 = inlined_call_operand.hbm [shape: f32[2,16,16,128], index: 3, kind: output, shape index: {}]
  %s4 = sld [smem:[#allocation0]]
  $region45: #{residual_layer_forward.5} parent=0
    _
  %s6 = ssub.s32 1, %s4
  %s7 = scalar_select 0, %s6, %s4
  $region1: #{residual_layer_forward.5} parent=0
    #allocation2 [shape = 'u8[131072]{0}', space=vmem, size = 0x20000, scoped, tag = 'output window, operand 0']
    #allocation3 [shape = 's32[2]{0}', space=sflag, size = 0x8, scoped, tag = 'scoped memory for residual_layer_forward.5']
    %8 = vsyncpa [#allocation3], 0
    %s9 = scalar_lea.sflag [#allocation3], 1
    %10 = vsyncpa %s9, 0
    loop: start=0, step=1, limit=6
    $region2: #{residual_layer_forward.5} parent=1 // loop_pre_header
      _
    $region3: #{residual_layer_forward.5} parent=1 // loop_header
      %s12 = sphi 0, %s16
      %p13 = scmp.ge.s32.totalorder %s12, 6
      %s19 = sphi 0, %s31
      %s20 = sphi 0, %s27
      %s21 = sphi 0, %s19
      %s22 = sphi 0, %s20
      %s23 = sphi 0, %s21
      %s24 = sphi 0, %s22
      %s36 = sphi 0, %s38
      %s39 = sphi 0, %s36
      %s40 = sphi 0, %s39
      %s56 = sphi 0, %s40
      %s64 = sphi 0, %s66
      %s67 = sphi 0, %s64
      %s68 = sphi 0, %s67
      %s84 = sphi 0, %s68
      %s88 = sphi 0, %s88
      %s90 = sphi 0, %s88
      %s91 = sphi 0, %s90
      %s105 = sphi 0, %s91
      %s113 = sphi 0, %s115
      %s116 = sphi 0, %s113
      %s117 = sphi 0, %s116
      %s133 = sphi 0, %s117
    $region4: #{residual_layer_forward.5} parent=1 // loop_header_branch
      %15 = sbr.rel (%p13) target = $region8
    $region5: #{residual_layer_forward.5} parent=1 // loop_body
      %s17 = ssub.s32 %s12, 1
      %s18 = ssub.s32 %s12, 2
      %s25 = sadd.s32 1, %s20
      %p26 = scmp.ge.s32.totalorder %s25, 2
      %s27 = scalar_select %p26, 0, %s25
      %s28 = sadd.s32 1, %s19
      %s29 = scalar_select %p26, %s28, %s19
      %p30 = scmp.ge.s32.totalorder %s29, 2
      %s31 = scalar_select %p30, 0, %s29
      %s32 = ssub.s32 %s19, %s31
      %s33 = ssub.s32 %s20, %s27
      %s34 = sor.u32 %s32, %s33
      %p35 = scmp.eq.s32.totalorder %s34, 0
      %s37 = sadd.s32 %s36, 1
      %s38 = scalar_select %p35, %s36, %s37
      %p41 = pneg %p35
      %p42 = scmp.eq.s32.totalorder %s12, 3
      %p43 = por %p41, %p42
      %p44 = scmp.ne.s32.totalorder %s36, %s39
      %p45 = scmp.eq.s32.totalorder %s12, 0
      %p46 = por %p44, %p45
      %p47 = scmp.ne.s32.totalorder %s36, %s39
      %p48 = scmp.eq.s32.totalorder %s17, 3
      %p49 = por %p47, %p48
      %p50 = scmp.ne.s32.totalorder %s39, %s40
      %p51 = scmp.eq.s32.totalorder %s17, 0
      %p52 = por %p50, %p51
      %p53 = scmp.ne.s32.totalorder %s39, %s40
      %p54 = scmp.eq.s32.totalorder %s18, 3
      %p55 = por %p53, %p54
      %p57 = scmp.ne.s32.totalorder %s40, %s56
      %p58 = scmp.eq.s32.totalorder %s18, 0
      %p59 = por %p57, %p58
      %s60 = ssub.s32 %s19, %s31
      %s61 = ssub.s32 %s20, %s27
      %s62 = sor.u32 %s60, %s61
      %p63 = scmp.eq.s32.totalorder %s62, 0
      %s65 = sadd.s32 %s64, 1
      %s66 = scalar_select %p63, %s64, %s65
      %p69 = pneg %p63
      %p70 = scmp.eq.s32.totalorder %s12, 3
      %p71 = por %p69, %p70
      %p72 = scmp.ne.s32.totalorder %s64, %s67
      %p73 = scmp.eq.s32.totalorder %s12, 0
      %p74 = por %p72, %p73
      %p75 = scmp.ne.s32.totalorder %s64, %s67
      %p76 = scmp.eq.s32.totalorder %s17, 3
      %p77 = por %p75, %p76
      %p78 = scmp.ne.s32.totalorder %s67, %s68
      %p79 = scmp.eq.s32.totalorder %s17, 0
      %p80 = por %p78, %p79
      %p81 = scmp.ne.s32.totalorder %s67, %s68
      %p82 = scmp.eq.s32.totalorder %s18, 3
      %p83 = por %p81, %p82
      %p85 = scmp.ne.s32.totalorder %s68, %s84
      %p86 = scmp.eq.s32.totalorder %s18, 0
      %p87 = por %p85, %p86
      %s89 = sadd.s32 %s88, 1
      %p92 = scmp.eq.s32.totalorder %s12, 3
      %p93 = scmp.ne.s32.totalorder %s88, %s90
      %p94 = scmp.eq.s32.totalorder %s12, 0
      %p95 = por %p93, %p94
      %p96 = scmp.ne.s32.totalorder %s88, %s90
      %p97 = scmp.eq.s32.totalorder %s17, 3
      %p98 = por %p96, %p97
      %p99 = scmp.ne.s32.totalorder %s90, %s91
      %p100 = scmp.eq.s32.totalorder %s17, 0
      %p101 = por %p99, %p100
      %p102 = scmp.ne.s32.totalorder %s90, %s91
      %p103 = scmp.eq.s32.totalorder %s18, 3
      %p104 = por %p102, %p103
      %p106 = scmp.ne.s32.totalorder %s91, %s105
      %p107 = scmp.eq.s32.totalorder %s18, 0
      %p108 = por %p106, %p107
      %s109 = ssub.s32 %s19, %s31
      %s110 = ssub.s32 %s20, %s27
      %s111 = sor.u32 %s109, %s110
      %p112 = scmp.eq.s32.totalorder %s111, 0
      %s114 = sadd.s32 %s113, 1
      %s115 = scalar_select %p112, %s113, %s114
      %p118 = pneg %p112
      %p119 = scmp.eq.s32.totalorder %s12, 3
      %p120 = por %p118, %p119
      %p121 = scmp.ne.s32.totalorder %s113, %s116
      %p122 = scmp.eq.s32.totalorder %s12, 0
      %p123 = por %p121, %p122
      %p124 = scmp.ne.s32.totalorder %s113, %s116
      %p125 = scmp.eq.s32.totalorder %s17, 3
      %p126 = por %p124, %p125
      %p127 = scmp.ne.s32.totalorder %s116, %s117
      %p128 = scmp.eq.s32.totalorder %s17, 0
      %p129 = por %p127, %p128
      %p130 = scmp.ne.s32.totalorder %s116, %s117
      %p131 = scmp.eq.s32.totalorder %s18, 3
      %p132 = por %p130, %p131
      %p134 = scmp.ne.s32.totalorder %s117, %s133
      %p135 = scmp.eq.s32.totalorder %s18, 0
      %p136 = por %p134, %p135
      %p137 = scmp.le.s32.totalorder 1, %s12
      %p138 = scmp.lt.s32.totalorder %s12, 5
      %p139 = pnand %p137, %p138
      %p140 = pneg %p139
      // Predicated region
      $region9: #{residual_layer_forward.5} parent=5 // pred_check
        _
      $region10: #{residual_layer_forward.5} parent=5 // pred_check_branch
        %142 = sbr.rel (%p139) target = $region12
      $region11: #{residual_layer_forward.5} parent=5 // pred_region
        %s143 = ssub.s32 %s12, 1
        // Predicated region
        $region13: #{residual_layer_forward.5} parent=11 // pred_check
          %p144 = pneg %p101
        $region14: #{residual_layer_forward.5} parent=11 // pred_check_branch
          %146 = sbr.rel (%p144) target = $region16
        $region15: #{residual_layer_forward.5} parent=11 // pred_region
          _
        $region16: #{residual_layer_forward.5} parent=11 // pred_fallthru
          _
      $region12: #{residual_layer_forward.5} parent=5 // pred_fallthru
        _
      %p147 = scmp.lt.s32.totalorder %s12, 4
      // Predicated region
      $region17: #{residual_layer_forward.5} parent=5 // pred_check
        %p148 = pneg %p147
      $region18: #{residual_layer_forward.5} parent=5 // pred_check_branch
        %150 = sbr.rel (%p148) target = $region20
      $region19: #{residual_layer_forward.5} parent=5 // pred_region
        // Predicated region
        $region21: #{residual_layer_forward.5} parent=19 // pred_check
          %p151 = pneg %p46
        $region22: #{residual_layer_forward.5} parent=19 // pred_check_branch
          %153 = sbr.rel (%p151) target = $region24
        $region23: #{residual_layer_forward.5} parent=19 // pred_region
          %s154 = smul.u32 8, %s20
          %p155 = scmp.lt.s32.totalorder %s19, 1
          %s156 = scalar_select %p155, %s19, 1
          %p157 = scmp.lt.s32.totalorder %s154, 15
          %s158 = scalar_select %p157, %s154, 15
          %s159 = smul.addr %s158, 2
          %s160 = smul.addr %s156, 32
          %s161 = sadd.s32 %s159, %s160
          %s162 = smul.addr %s161, 8
          %s163 = scalar_lea.vmem %s0, %s162
          %s164 = smul.u32 8, %s20
        $region24: #{residual_layer_forward.5} parent=19 // pred_fallthru
          _
        // Predicated region
        $region25: #{residual_layer_forward.5} parent=19 // pred_check
          %p165 = pneg %p74
        $region26: #{residual_layer_forward.5} parent=19 // pred_check_branch
          %167 = sbr.rel (%p165) target = $region28
        $region27: #{residual_layer_forward.5} parent=19 // pred_region
          %s168 = smul.u32 8, %s20
          %p169 = scmp.lt.s32.totalorder %s19, 1
          %s170 = scalar_select %p169, %s19, 1
          %p171 = scmp.lt.s32.totalorder %s168, 15
          %s172 = scalar_select %p171, %s168, 15
          %s173 = smul.addr %s172, 2
          %s174 = smul.addr %s170, 32
          %s175 = sadd.s32 %s173, %s174
          %s176 = smul.addr %s175, 8
          %s177 = scalar_lea.vmem %s1, %s176
          %s178 = smul.u32 8, %s20
        $region28: #{residual_layer_forward.5} parent=19 // pred_fallthru
          _
      $region20: #{residual_layer_forward.5} parent=5 // pred_fallthru
        _
      %p179 = scmp.le.s32.totalorder 1, %s12
      %p180 = scmp.lt.s32.totalorder %s12, 5
      %p181 = pnand %p179, %p180
      %p182 = pneg %p181
      // Predicated region
      $region29: #{residual_layer_forward.5} parent=5 // pred_check
        _
      $region30: #{residual_layer_forward.5} parent=5 // pred_check_branch
        %184 = sbr.rel (%p181) target = $region32
      $region31: #{residual_layer_forward.5} parent=5 // pred_region
        %s185 = ssub.s32 %s12, 1
        %s186 = smul.u32 8, %s22
        %p187 = scmp.lt.s32.totalorder %s21, 1
        %s188 = scalar_select %p187, %s21, 1
        %p189 = scmp.lt.s32.totalorder %s186, 15
        %s190 = scalar_select %p189, %s186, 15
        %s191 = smul.addr %s190, 2
        %s192 = smul.addr %s188, 32
        %s193 = sadd.s32 %s191, %s192
        %s194 = smul.addr %s193, 8
        %s195 = scalar_lea.vmem %s0, %s194
        %p196 = pneg %p52
        %p197 = pneg %p49
        %s198 = smul.u32 8, %s22
        %p199 = scmp.lt.s32.totalorder %s21, 1
        %s200 = scalar_select %p199, %s21, 1
        %p201 = scmp.lt.s32.totalorder %s198, 15
        %s202 = scalar_select %p201, %s198, 15
        %s203 = smul.addr %s202, 2
        %s204 = smul.addr %s200, 32
        %s205 = sadd.s32 %s203, %s204
        %s206 = smul.addr %s205, 8
        %s207 = scalar_lea.vmem %s1, %s206
        %p208 = pneg %p80
        %p209 = pneg %p77
        %p210 = pneg %p101
        %p211 = pneg %p98
        %p212 = pneg %p129
        %p213 = pneg %p126
        %s214 = sand.u32 %s116, 1
        %s215 = scalar_lea.sflag [#allocation3], %s214
        %s216 = sand.u32 %s116, 1
        %s217 = smul.addr %s216, 128
        %s218 = scalar_lea.vmem [#allocation2], %s217
        %s219 = smul.u32 8, %s22
        %p220 = scmp.lt.s32.totalorder %s21, 1
        %s221 = scalar_select %p220, %s21, 1
        %p222 = scmp.lt.s32.totalorder %s219, 15
        %s223 = scalar_select %p222, %s219, 15
        %s224 = smul.addr %s223, 2
        %s225 = smul.addr %s221, 32
        %s226 = sadd.s32 %s224, %s225
        %s227 = smul.addr %s226, 8
        %s228 = scalar_lea.vmem %s0, %s227
        %s229 = smul.u32 8, %s22
        %s230 = smul.u32 8, %s22
        %p231 = scmp.lt.s32.totalorder %s21, 1
        %s232 = scalar_select %p231, %s21, 1
        %p233 = scmp.lt.s32.totalorder %s230, 15
        %s234 = scalar_select %p233, %s230, 15
        %s235 = smul.addr %s234, 2
        %s236 = smul.addr %s232, 32
        %s237 = sadd.s32 %s235, %s236
        %s238 = smul.addr %s237, 8
        %s239 = scalar_lea.vmem %s1, %s238
        %s240 = smul.u32 8, %s22
        %s241 = smul.u32 8, %s22
        %v242 = vld [vmem:[%s2] sm:$0x1]
        %v243 = vld [vmem:[%s2 + $0x1] sm:$0x1]
        %v244 = vld [vmem:[%s239] sm:$0xff]
        %v245 = vld [vmem:[%s239 + $0x8] sm:$0xff]
        %v246 = vld [vmem:[%s239 + $0x10] sm:$0xff]
        %v247 = vld [vmem:[%s239 + $0x18] sm:$0xff]
        %v248 = vld [vmem:[%s239 + $0x20] sm:$0xff]
        %v249 = vld [vmem:[%s239 + $0x28] sm:$0xff]
        %v250 = vld [vmem:[%s239 + $0x30] sm:$0xff]
        %v251 = vld [vmem:[%s239 + $0x38] sm:$0xff]
        %v252 = vld [vmem:[%s239 + $0x40] sm:$0xff]
        %v253 = vld [vmem:[%s239 + $0x48] sm:$0xff]
        %v254 = vld [vmem:[%s239 + $0x50] sm:$0xff]
        %v255 = vld [vmem:[%s239 + $0x58] sm:$0xff]
        %v256 = vld [vmem:[%s239 + $0x60] sm:$0xff]
        %v257 = vld [vmem:[%s239 + $0x68] sm:$0xff]
        %v258 = vld [vmem:[%s239 + $0x70] sm:$0xff]
        %v259 = vld [vmem:[%s239 + $0x78] sm:$0xff]
        %v260 = vlaneseq
        %v261 = vshrl.u32 %v260, 7
        %v262 = vsub.s32 0, %v261
        %v263 = vrot.slane %v242, %v262
        %v264 = vmul.f32 %v244, %v263
        %v265 = vmul.f32 %v245, %v263
        %v266 = vmul.f32 %v246, %v263
        %v267 = vmul.f32 %v247, %v263
        %v268 = vmul.f32 %v248, %v263
        %v269 = vmul.f32 %v249, %v263
        %v270 = vmul.f32 %v250, %v263
        %v271 = vmul.f32 %v251, %v263
        %v272 = vmul.f32 %v252, %v263
        %v273 = vmul.f32 %v253, %v263
        %v274 = vmul.f32 %v254, %v263
        %v275 = vmul.f32 %v255, %v263
        %v276 = vmul.f32 %v256, %v263
        %v277 = vmul.f32 %v257, %v263
        %v278 = vmul.f32 %v258, %v263
        %v279 = vmul.f32 %v259, %v263
        %v280 = vlaneseq
        %v281 = vshrl.u32 %v280, 7
        %v282 = vsub.s32 0, %v281
        %v283 = vrot.slane %v243, %v282
        %v284 = vadd.f32 %v264, %v283
        %v285 = vadd.f32 %v265, %v283
        %v286 = vadd.f32 %v266, %v283
        %v287 = vadd.f32 %v267, %v283
        %v288 = vadd.f32 %v268, %v283
        %v289 = vadd.f32 %v269, %v283
        %v290 = vadd.f32 %v270, %v283
        %v291 = vadd.f32 %v271, %v283
        %v292 = vadd.f32 %v272, %v283
        %v293 = vadd.f32 %v273, %v283
        %v294 = vadd.f32 %v274, %v283
        %v295 = vadd.f32 %v275, %v283
        %v296 = vadd.f32 %v276, %v283
        %v297 = vadd.f32 %v277, %v283
        %v298 = vadd.f32 %v278, %v283
        %v299 = vadd.f32 %v279, %v283
        %v300 = vld [vmem:[%s228] sm:$0xff]
        %v301 = vld [vmem:[%s228 + $0x8] sm:$0xff]
        %v302 = vld [vmem:[%s228 + $0x10] sm:$0xff]
        %v303 = vld [vmem:[%s228 + $0x18] sm:$0xff]
        %v304 = vld [vmem:[%s228 + $0x20] sm:$0xff]
        %v305 = vld [vmem:[%s228 + $0x28] sm:$0xff]
        %v306 = vld [vmem:[%s228 + $0x30] sm:$0xff]
        %v307 = vld [vmem:[%s228 + $0x38] sm:$0xff]
        %v308 = vld [vmem:[%s228 + $0x40] sm:$0xff]
        %v309 = vld [vmem:[%s228 + $0x48] sm:$0xff]
        %v310 = vld [vmem:[%s228 + $0x50] sm:$0xff]
        %v311 = vld [vmem:[%s228 + $0x58] sm:$0xff]
        %v312 = vld [vmem:[%s228 + $0x60] sm:$0xff]
        %v313 = vld [vmem:[%s228 + $0x68] sm:$0xff]
        %v314 = vld [vmem:[%s228 + $0x70] sm:$0xff]
        %v315 = vld [vmem:[%s228 + $0x78] sm:$0xff]
        %v316 = vadd.f32 %v284, %v300
        %v317 = vadd.f32 %v285, %v301
        %v318 = vadd.f32 %v286, %v302
        %v319 = vadd.f32 %v287, %v303
        %v320 = vadd.f32 %v288, %v304
        %v321 = vadd.f32 %v289, %v305
        %v322 = vadd.f32 %v290, %v306
        %v323 = vadd.f32 %v291, %v307
        %v324 = vadd.f32 %v292, %v308
        %v325 = vadd.f32 %v293, %v309
        %v326 = vadd.f32 %v294, %v310
        %v327 = vadd.f32 %v295, %v311
        %v328 = vadd.f32 %v296, %v312
        %v329 = vadd.f32 %v297, %v313
        %v330 = vadd.f32 %v298, %v314
        %v331 = vadd.f32 %v299, %v315
        %332 = vst [vmem:[%s218] sm:$0xff] %v316
        %333 = vst [vmem:[%s218 + $0x8] sm:$0xff] %v317
        %334 = vst [vmem:[%s218 + $0x10] sm:$0xff] %v318
        %335 = vst [vmem:[%s218 + $0x18] sm:$0xff] %v319
        %336 = vst [vmem:[%s218 + $0x20] sm:$0xff] %v320
        %337 = vst [vmem:[%s218 + $0x28] sm:$0xff] %v321
        %338 = vst [vmem:[%s218 + $0x30] sm:$0xff] %v322
        %339 = vst [vmem:[%s218 + $0x38] sm:$0xff] %v323
        %340 = vst [vmem:[%s218 + $0x40] sm:$0xff] %v324
        %341 = vst [vmem:[%s218 + $0x48] sm:$0xff] %v325
        %342 = vst [vmem:[%s218 + $0x50] sm:$0xff] %v326
        %343 = vst [vmem:[%s218 + $0x58] sm:$0xff] %v327
        %344 = vst [vmem:[%s218 + $0x60] sm:$0xff] %v328
        %345 = vst [vmem:[%s218 + $0x68] sm:$0xff] %v329
        %346 = vst [vmem:[%s218 + $0x70] sm:$0xff] %v330
        %347 = vst [vmem:[%s218 + $0x78] sm:$0xff] %v331
        %s348 = sand.u32 %s116, 1
        %s349 = scalar_lea.sflag [#allocation3], %s348
        %s350 = sand.u32 %s116, 1
        %s351 = smul.addr %s350, 128
        %s352 = scalar_lea.vmem [#allocation2], %s351
        // Predicated region
        $region33: #{residual_layer_forward.5} parent=31 // pred_check
          %p353 = pneg %p126
        $region34: #{residual_layer_forward.5} parent=31 // pred_check_branch
          %355 = sbr.rel (%p353) target = $region36
        $region35: #{residual_layer_forward.5} parent=31 // pred_region
          %s356 = smul.u32 8, %s22
          %s358 = ssub.s32 2048, 2048
          %359 = vsyncadd %s349, %s358
          %s360 = smul.addr %s356, 2
          %s361 = smul.addr %s21, 32
          %s362 = sadd.s32 %s360, %s361
          %s363 = smul.addr %s362, 128
          %s364 = scalar_lea.hbm %s3, %s363
          %s365 = sshll.u32 %s352, 4
          %s366 = int_to_ptr.vmem [resolvable:$true] %s365
          %371 = dma.vmem_to_hbm [thread:$0]  %s366, 2048, %s364, %s349, 128, 128, 8
        $region36: #{residual_layer_forward.5} parent=31 // pred_fallthru
          _
      $region32: #{residual_layer_forward.5} parent=5 // pred_fallthru
        _
      %p372 = scmp.le.s32.totalorder 2, %s12
      // Predicated region
      $region37: #{residual_layer_forward.5} parent=5 // pred_check
        %p373 = pneg %p372
      $region38: #{residual_layer_forward.5} parent=5 // pred_check_branch
        %375 = sbr.rel (%p373) target = $region40
      $region39: #{residual_layer_forward.5} parent=5 // pred_region
        %s376 = ssub.s32 %s12, 2
        // Predicated region
        $region41: #{residual_layer_forward.5} parent=39 // pred_check
          %p377 = pneg %p132
        $region42: #{residual_layer_forward.5} parent=39 // pred_check_branch
          %379 = sbr.rel (%p377) target = $region44
        $region43: #{residual_layer_forward.5} parent=39 // pred_region
          %s380 = sand.u32 %s117, 1
          %s381 = scalar_lea.sflag [#allocation3], %s380
          %s382 = sand.u32 %s117, 1
          %s383 = smul.addr %s382, 128
          %s384 = scalar_lea.vmem [#allocation2], %s383
          %385 = dma.done %s381, 2048
        $region44: #{residual_layer_forward.5} parent=39 // pred_fallthru
          _
      $region40: #{residual_layer_forward.5} parent=5 // pred_fallthru
        _
    $region6: #{residual_layer_forward.5} parent=1 // loop_footer
      %s16 = sadd.s32 1, %s12
    $region7: #{residual_layer_forward.5} parent=1 // loop_footer_branch
      %11 = sbr.rel target = $region3
    $region8: #{residual_layer_forward.5} parent=1 // loop_exit
      _
    %386 = vsyncpa [#allocation3], 1
    %s387 = scalar_lea.sflag [#allocation3], 1
    %388 = vsyncpa %s387, 1

// kernel: residual_layer_forward.3
$region0: #{residual_layer_forward.3}
  #allocation0 [shape = 'u32[]', space=smem, size = 0x4, offset = 0x4, fixed_abs, tag = 'smem constant byte address 0x4 - core index']
  #allocation1 [shape = 'u32[144,128]{1,0:T(1,128)}', space=vmem, size = 0x12000, scoped, tag = 'internal scratch']
  %s0 = inlined_call_operand.vmem [shape: f32[2,16,16,128], index: 0, kind: input, shape index: {}, may-alias: {0,1,2}]
  %s1 = inlined_call_operand.vmem [shape: f32[2,16,16,128], index: 1, kind: input, shape index: {}, may-alias: {0,1,2}]
  %s2 = inlined_call_operand.vmem [shape: f32[2,16,16,128], index: 2, kind: input, shape index: {}, may-alias: {0,1,2}]
  %s3 = inlined_call_operand.vmem [shape: bf16[3,384,128], index: 3, kind: input, shape index: {}]
  %s4 = inlined_call_operand.vmem [shape: f32[2,16,16,128], index: 4, kind: output, shape index: {0}]
  %s5 = inlined_call_operand.vmem [shape: f32[2,2,2,128], index: 5, kind: output, shape index: {1}]
  %6 = xla_tuple %s4, %s5
  %s7 = sld [smem:[#allocation0]]
  $region57: #{residual_layer_forward.3} parent=0
    _
  %s9 = ssub.s32 1, %s7
  %s10 = scalar_select 0, %s9, %s7
  loop: start=0, step=1, limit=6
  $region2: #{residual_layer_forward.3} parent=0 // loop_pre_header
    _
  $region3: #{residual_layer_forward.3} parent=0 // loop_header
    %s12 = sphi 0, %s16
    %p13 = scmp.ge.s32.totalorder %s12, 6
    %s19 = sphi 0, %s31
    %s20 = sphi 0, %s27
    %s21 = sphi 0, %s19
    %s22 = sphi 0, %s20
    %s23 = sphi 0, %s21
    %s24 = sphi 0, %s22
    %s36 = sphi 0, %s38
    %s39 = sphi 0, %s36
    %s40 = sphi 0, %s39
    %s56 = sphi 0, %s40
    %s72 = sphi 0, %s74
    %s75 = sphi 0, %s72
    %s76 = sphi 0, %s75
    %s92 = sphi 0, %s76
    %s108 = sphi 0, %s110
    %s111 = sphi 0, %s108
    %s112 = sphi 0, %s111
    %s128 = sphi 0, %s112
    %s132 = sphi 0, %s132
    %s134 = sphi 0, %s132
    %s135 = sphi 0, %s134
    %s149 = sphi 0, %s135
    %s157 = sphi 0, %s159
    %s160 = sphi 0, %s157
    %s161 = sphi 0, %s160
    %s177 = sphi 0, %s161
    %s185 = sphi 0, %s187
    %s188 = sphi 0, %s185
    %s189 = sphi 0, %s188
    %s205 = sphi 0, %s189
  $region4: #{residual_layer_forward.3} parent=0 // loop_header_branch
    %15 = sbr.rel (%p13) target = $region8
  $region5: #{residual_layer_forward.3} parent=0 // loop_body
    %s17 = ssub.s32 %s12, 1
    %s18 = ssub.s32 %s12, 2
    %s25 = sadd.s32 1, %s20
    %p26 = scmp.ge.s32.totalorder %s25, 2
    %s27 = scalar_select %p26, 0, %s25
    %s28 = sadd.s32 1, %s19
    %s29 = scalar_select %p26, %s28, %s19
    %p30 = scmp.ge.s32.totalorder %s29, 2
    %s31 = scalar_select %p30, 0, %s29
    %s32 = ssub.s32 %s19, %s31
    %s33 = ssub.s32 %s20, %s27
    %s34 = sor.u32 %s32, %s33
    %p35 = scmp.eq.s32.totalorder %s34, 0
    %s37 = sadd.s32 %s36, 1
    %s38 = scalar_select %p35, %s36, %s37
    %p41 = pneg %p35
    %p42 = scmp.eq.s32.totalorder %s12, 3
    %p43 = por %p41, %p42
    %p44 = scmp.ne.s32.totalorder %s36, %s39
    %p45 = scmp.eq.s32.totalorder %s12, 0
    %p46 = por %p44, %p45
    %p47 = scmp.ne.s32.totalorder %s36, %s39
    %p48 = scmp.eq.s32.totalorder %s17, 3
    %p49 = por %p47, %p48
    %p50 = scmp.ne.s32.totalorder %s39, %s40
    %p51 = scmp.eq.s32.totalorder %s17, 0
    %p52 = por %p50, %p51
    %p53 = scmp.ne.s32.totalorder %s39, %s40
    %p54 = scmp.eq.s32.totalorder %s18, 3
    %p55 = por %p53, %p54
    %p57 = scmp.ne.s32.totalorder %s40, %s56
    %p58 = scmp.eq.s32.totalorder %s18, 0
    %p59 = por %p57, %p58
    %s60 = smul.u32 %s20, 8
    %s61 = ssub.s32 %s60, 1
    %p62 = scmp.gt.s32.totalorder %s61, 0
    %s63 = scalar_select %p62, %s61, 0
    %s64 = smul.u32 %s27, 8
    %s65 = ssub.s32 %s64, 1
    %p66 = scmp.gt.s32.totalorder %s65, 0
    %s67 = scalar_select %p66, %s65, 0
    %s68 = ssub.s32 %s19, %s31
    %s69 = ssub.s32 %s63, %s67
    %s70 = sor.u32 %s68, %s69
    %p71 = scmp.eq.s32.totalorder %s70, 0
    %s73 = sadd.s32 %s72, 1
    %s74 = scalar_select %p71, %s72, %s73
    %p77 = pneg %p71
    %p78 = scmp.eq.s32.totalorder %s12, 3
    %p79 = por %p77, %p78
    %p80 = scmp.ne.s32.totalorder %s72, %s75
    %p81 = scmp.eq.s32.totalorder %s12, 0
    %p82 = por %p80, %p81
    %p83 = scmp.ne.s32.totalorder %s72, %s75
    %p84 = scmp.eq.s32.totalorder %s17, 3
    %p85 = por %p83, %p84
    %p86 = scmp.ne.s32.totalorder %s75, %s76
    %p87 = scmp.eq.s32.totalorder %s17, 0
    %p88 = por %p86, %p87
    %p89 = scmp.ne.s32.totalorder %s75, %s76
    %p90 = scmp.eq.s32.totalorder %s18, 3
    %p91 = por %p89, %p90
    %p93 = scmp.ne.s32.totalorder %s76, %s92
    %p94 = scmp.eq.s32.totalorder %s18, 0
    %p95 = por %p93, %p94
    %s96 = sadd.s32 %s20, 1
    %s97 = smul.u32 %s96, 8
    %p98 = scmp.lt.s32.totalorder %s97, 15
    %s99 = scalar_select %p98, %s97, 15
    %s100 = sadd.s32 %s27, 1
    %s101 = smul.u32 %s100, 8
    %p102 = scmp.lt.s32.totalorder %s101, 15
    %s103 = scalar_select %p102, %s101, 15
    %s104 = ssub.s32 %s19, %s31
    %s105 = ssub.s32 %s99, %s103
    %s106 = sor.u32 %s104, %s105
    %p107 = scmp.eq.s32.totalorder %s106, 0
    %s109 = sadd.s32 %s108, 1
    %s110 = scalar_select %p107, %s108, %s109
    %p113 = pneg %p107
    %p114 = scmp.eq.s32.totalorder %s12, 3
    %p115 = por %p113, %p114
    %p116 = scmp.ne.s32.totalorder %s108, %s111
    %p117 = scmp.eq.s32.totalorder %s12, 0
    %p118 = por %p116, %p117
    %p119 = scmp.ne.s32.totalorder %s108, %s111
    %p120 = scmp.eq.s32.totalorder %s17, 3
    %p121 = por %p119, %p120
    %p122 = scmp.ne.s32.totalorder %s111, %s112
    %p123 = scmp.eq.s32.totalorder %s17, 0
    %p124 = por %p122, %p123
    %p125 = scmp.ne.s32.totalorder %s111, %s112
    %p126 = scmp.eq.s32.totalorder %s18, 3
    %p127 = por %p125, %p126
    %p129 = scmp.ne.s32.totalorder %s112, %s128
    %p130 = scmp.eq.s32.totalorder %s18, 0
    %p131 = por %p129, %p130
    %s133 = sadd.s32 %s132, 1
    %p136 = scmp.eq.s32.totalorder %s12, 3
    %p137 = scmp.ne.s32.totalorder %s132, %s134
    %p138 = scmp.eq.s32.totalorder %s12, 0
    %p139 = por %p137, %p138
    %p140 = scmp.ne.s32.totalorder %s132, %s134
    %p141 = scmp.eq.s32.totalorder %s17, 3
    %p142 = por %p140, %p141
    %p143 = scmp.ne.s32.totalorder %s134, %s135
    %p144 = scmp.eq.s32.totalorder %s17, 0
    %p145 = por %p143, %p144
    %p146 = scmp.ne.s32.totalorder %s134, %s135
    %p147 = scmp.eq.s32.totalorder %s18, 3
    %p148 = por %p146, %p147
    %p150 = scmp.ne.s32.totalorder %s135, %s149
    %p151 = scmp.eq.s32.totalorder %s18, 0
    %p152 = por %p150, %p151
    %s153 = ssub.s32 %s19, %s31
    %s154 = ssub.s32 %s20, %s27
    %s155 = sor.u32 %s153, %s154
    %p156 = scmp.eq.s32.totalorder %s155, 0
    %s158 = sadd.s32 %s157, 1
    %s159 = scalar_select %p156, %s157, %s158
    %p162 = pneg %p156
    %p163 = scmp.eq.s32.totalorder %s12, 3
    %p164 = por %p162, %p163
    %p165 = scmp.ne.s32.totalorder %s157, %s160
    %p166 = scmp.eq.s32.totalorder %s12, 0
    %p167 = por %p165, %p166
    %p168 = scmp.ne.s32.totalorder %s157, %s160
    %p169 = scmp.eq.s32.totalorder %s17, 3
    %p170 = por %p168, %p169
    %p171 = scmp.ne.s32.totalorder %s160, %s161
    %p172 = scmp.eq.s32.totalorder %s17, 0
    %p173 = por %p171, %p172
    %p174 = scmp.ne.s32.totalorder %s160, %s161
    %p175 = scmp.eq.s32.totalorder %s18, 3
    %p176 = por %p174, %p175
    %p178 = scmp.ne.s32.totalorder %s161, %s177
    %p179 = scmp.eq.s32.totalorder %s18, 0
    %p180 = por %p178, %p179
    %s181 = ssub.s32 %s19, %s31
    %s182 = ssub.s32 %s20, %s27
    %s183 = sor.u32 %s181, %s182
    %p184 = scmp.eq.s32.totalorder %s183, 0
    %s186 = sadd.s32 %s185, 1
    %s187 = scalar_select %p184, %s185, %s186
    %p190 = pneg %p184
    %p191 = scmp.eq.s32.totalorder %s12, 3
    %p192 = por %p190, %p191
    %p193 = scmp.ne.s32.totalorder %s185, %s188
    %p194 = scmp.eq.s32.totalorder %s12, 0
    %p195 = por %p193, %p194
    %p196 = scmp.ne.s32.totalorder %s185, %s188
    %p197 = scmp.eq.s32.totalorder %s17, 3
    %p198 = por %p196, %p197
    %p199 = scmp.ne.s32.totalorder %s188, %s189
    %p200 = scmp.eq.s32.totalorder %s17, 0
    %p201 = por %p199, %p200
    %p202 = scmp.ne.s32.totalorder %s188, %s189
    %p203 = scmp.eq.s32.totalorder %s18, 3
    %p204 = por %p202, %p203
    %p206 = scmp.ne.s32.totalorder %s189, %s205
    %p207 = scmp.eq.s32.totalorder %s18, 0
    %p208 = por %p206, %p207
    %p209 = scmp.le.s32.totalorder 1, %s12
    %p210 = scmp.lt.s32.totalorder %s12, 5
    %p211 = pnand %p209, %p210
    %p212 = pneg %p211
    // Predicated region
    $region9: #{residual_layer_forward.3} parent=5 // pred_check
      _
    $region10: #{residual_layer_forward.3} parent=5 // pred_check_branch
      %214 = sbr.rel (%p211) target = $region12
    $region11: #{residual_layer_forward.3} parent=5 // pred_region
      %s215 = ssub.s32 %s12, 1
      // Predicated region
      $region13: #{residual_layer_forward.3} parent=11 // pred_check
        %p216 = pneg %p145
      $region14: #{residual_layer_forward.3} parent=11 // pred_check_branch
        %218 = sbr.rel (%p216) target = $region16
      $region15: #{residual_layer_forward.3} parent=11 // pred_region
        _
      $region16: #{residual_layer_forward.3} parent=11 // pred_fallthru
        _
    $region12: #{residual_layer_forward.3} parent=5 // pred_fallthru
      _
    %p219 = scmp.lt.s32.totalorder %s12, 4
    // Predicated region
    $region17: #{residual_layer_forward.3} parent=5 // pred_check
      %p220 = pneg %p219
    $region18: #{residual_layer_forward.3} parent=5 // pred_check_branch
      %222 = sbr.rel (%p220) target = $region20
    $region19: #{residual_layer_forward.3} parent=5 // pred_region
      // Predicated region
      $region21: #{residual_layer_forward.3} parent=19 // pred_check
        %p223 = pneg %p46
      $region22: #{residual_layer_forward.3} parent=19 // pred_check_branch
        %225 = sbr.rel (%p223) target = $region24
      $region23: #{residual_layer_forward.3} parent=19 // pred_region
        %s226 = smul.u32 8, %s20
        %p227 = scmp.lt.s32.totalorder %s19, 1
        %s228 = scalar_select %p227, %s19, 1
        %p229 = scmp.lt.s32.totalorder %s226, 15
        %s230 = scalar_select %p229, %s226, 15
        %s231 = smul.addr %s230, 2
        %s232 = smul.addr %s228, 32
        %s233 = sadd.s32 %s231, %s232
        %s234 = smul.addr %s233, 8
        %s235 = scalar_lea.vmem %s0, %s234
        %s236 = smul.u32 8, %s20
      $region24: #{residual_layer_forward.3} parent=19 // pred_fallthru
        _
      // Predicated region
      $region25: #{residual_layer_forward.3} parent=19 // pred_check
        %p237 = pneg %p82
      $region26: #{residual_layer_forward.3} parent=19 // pred_check_branch
        %239 = sbr.rel (%p237) target = $region28
      $region27: #{residual_layer_forward.3} parent=19 // pred_region
        %s240 = smul.u32 %s20, 8
        %s241 = ssub.s32 %s240, 1
        %p242 = scmp.gt.s32.totalorder %s241, 0
        %s243 = scalar_select %p242, %s241, 0
        %p244 = scmp.lt.s32.totalorder %s19, 1
        %s245 = scalar_select %p244, %s19, 1
        %p246 = scmp.lt.s32.totalorder %s243, 15
        %s247 = scalar_select %p246, %s243, 15
        %s248 = smul.addr %s247, 2
        %s249 = smul.addr %s245, 32
        %s250 = sadd.s32 %s248, %s249
        %s251 = smul.addr %s250, 8
        %s252 = scalar_lea.vmem %s1, %s251
        %s253 = smul.u32 %s20, 8
        %s254 = ssub.s32 %s253, 1
        %p255 = scmp.gt.s32.totalorder %s254, 0
        %s256 = scalar_select %p255, %s254, 0
      $region28: #{residual_layer_forward.3} parent=19 // pred_fallthru
        _
      // Predicated region
      $region29: #{residual_layer_forward.3} parent=19 // pred_check
        %p257 = pneg %p118
      $region30: #{residual_layer_forward.3} parent=19 // pred_check_branch
        %259 = sbr.rel (%p257) target = $region32
      $region31: #{residual_layer_forward.3} parent=19 // pred_region
        %s260 = sadd.s32 %s20, 1
        %s261 = smul.u32 %s260, 8
        %p262 = scmp.lt.s32.totalorder %s261, 15
        %s263 = scalar_select %p262, %s261, 15
        %p264 = scmp.lt.s32.totalorder %s19, 1
        %s265 = scalar_select %p264, %s19, 1
        %p266 = scmp.lt.s32.totalorder %s263, 15
        %s267 = scalar_select %p266, %s263, 15
        %s268 = smul.addr %s267, 2
        %s269 = smul.addr %s265, 32
        %s270 = sadd.s32 %s268, %s269
        %s271 = smul.addr %s270, 8
        %s272 = scalar_lea.vmem %s2, %s271
        %s273 = sadd.s32 %s20, 1
        %s274 = smul.u32 %s273, 8
        %p275 = scmp.lt.s32.totalorder %s274, 15
        %s276 = scalar_select %p275, %s274, 15
      $region32: #{residual_layer_forward.3} parent=19 // pred_fallthru
        _
    $region20: #{residual_layer_forward.3} parent=5 // pred_fallthru
      _
    %p277 = scmp.le.s32.totalorder 1, %s12
    %p278 = scmp.lt.s32.totalorder %s12, 5
    %p279 = pnand %p277, %p278
    %p280 = pneg %p279
    // Predicated region
    $region33: #{residual_layer_forward.3} parent=5 // pred_check
      _
    $region34: #{residual_layer_forward.3} parent=5 // pred_check_branch
      %282 = sbr.rel (%p279) target = $region36
    $region35: #{residual_layer_forward.3} parent=5 // pred_region
      %s283 = ssub.s32 %s12, 1
      %s284 = smul.u32 8, %s22
      %p285 = scmp.lt.s32.totalorder %s21, 1
      %s286 = scalar_select %p285, %s21, 1
      %p287 = scmp.lt.s32.totalorder %s284, 15
      %s288 = scalar_select %p287, %s284, 15
      %s289 = smul.addr %s288, 2
      %s290 = smul.addr %s286, 32
      %s291 = sadd.s32 %s289, %s290
      %s292 = smul.addr %s291, 8
      %s293 = scalar_lea.vmem %s0, %s292
      %p294 = pneg %p52
      %p295 = pneg %p49
      %s296 = smul.u32 %s22, 8
      %s297 = ssub.s32 %s296, 1
      %p298 = scmp.gt.s32.totalorder %s297, 0
      %s299 = scalar_select %p298, %s297, 0
      %p300 = scmp.lt.s32.totalorder %s21, 1
      %s301 = scalar_select %p300, %s21, 1
      %p302 = scmp.lt.s32.totalorder %s299, 15
      %s303 = scalar_select %p302, %s299, 15
      %s304 = smul.addr %s303, 2
      %s305 = smul.addr %s301, 32
      %s306 = sadd.s32 %s304, %s305
      %s307 = smul.addr %s306, 8
      %s308 = scalar_lea.vmem %s1, %s307
      %p309 = pneg %p88
      %p310 = pneg %p85
      %s311 = sadd.s32 %s22, 1
      %s312 = smul.u32 %s311, 8
      %p313 = scmp.lt.s32.totalorder %s312, 15
      %s314 = scalar_select %p313, %s312, 15
      %p315 = scmp.lt.s32.totalorder %s21, 1
      %s316 = scalar_select %p315, %s21, 1
      %p317 = scmp.lt.s32.totalorder %s314, 15
      %s318 = scalar_select %p317, %s314, 15
      %s319 = smul.addr %s318, 2
      %s320 = smul.addr %s316, 32
      %s321 = sadd.s32 %s319, %s320
      %s322 = smul.addr %s321, 8
      %s323 = scalar_lea.vmem %s2, %s322
      %p324 = pneg %p124
      %p325 = pneg %p121
      %p326 = pneg %p145
      %p327 = pneg %p142
      %p328 = pneg %p173
      %p329 = pneg %p170
      %s330 = smul.u32 8, %s22
      %p331 = scmp.lt.s32.totalorder %s21, 1
      %s332 = scalar_select %p331, %s21, 1
      %p333 = scmp.lt.s32.totalorder %s330, 15
      %s334 = scalar_select %p333, %s330, 15
      %s335 = smul.addr %s334, 2
      %s336 = smul.addr %s332, 32
      %s337 = sadd.s32 %s335, %s336
      %s338 = smul.addr %s337, 8
      %s339 = scalar_lea.vmem %s4, %s338
      %p340 = pneg %p201
      %p341 = pneg %p198
      %p342 = scmp.lt.s32.totalorder %s21, 1
      %s343 = scalar_select %p342, %s21, 1
      %p344 = scmp.lt.s32.totalorder %s22, 1
      %s345 = scalar_select %p344, %s22, 1
      %s346 = smul.addr %s343, 2
      %s347 = sadd.s32 %s345, %s346
      %s348 = smul.addr %s347, 2
      %s349 = scalar_lea.vmem %s5, %s348
      %s350 = smul.u32 8, %s22
      %p351 = scmp.lt.s32.totalorder %s21, 1
      %s352 = scalar_select %p351, %s21, 1
      %p353 = scmp.lt.s32.totalorder %s350, 15
      %s354 = scalar_select %p353, %s350, 15
      %s355 = smul.addr %s354, 2
      %s356 = smul.addr %s352, 32
      %s357 = sadd.s32 %s355, %s356
      %s358 = smul.addr %s357, 8
      %s359 = scalar_lea.vmem %s0, %s358
      %s360 = smul.u32 8, %s22
      %s361 = smul.u32 %s22, 8
      %s362 = ssub.s32 %s361, 1
      %p363 = scmp.gt.s32.totalorder %s362, 0
      %s364 = scalar_select %p363, %s362, 0
      %p365 = scmp.lt.s32.totalorder %s21, 1
      %s366 = scalar_select %p365, %s21, 1
      %p367 = scmp.lt.s32.totalorder %s364, 15
      %s368 = scalar_select %p367, %s364, 15
      %s369 = smul.addr %s368, 2
      %s370 = smul.addr %s366, 32
      %s371 = sadd.s32 %s369, %s370
      %s372 = smul.addr %s371, 8
      %s373 = scalar_lea.vmem %s1, %s372
      %s374 = smul.u32 %s22, 8
      %s375 = ssub.s32 %s374, 1
      %p376 = scmp.gt.s32.totalorder %s375, 0
      %s377 = scalar_select %p376, %s375, 0
      %s378 = sadd.s32 %s22, 1
      %s379 = smul.u32 %s378, 8
      %p380 = scmp.lt.s32.totalorder %s379, 15
      %s381 = scalar_select %p380, %s379, 15
      %p382 = scmp.lt.s32.totalorder %s21, 1
      %s383 = scalar_select %p382, %s21, 1
      %p384 = scmp.lt.s32.totalorder %s381, 15
      %s385 = scalar_select %p384, %s381, 15
      %s386 = smul.addr %s385, 2
      %s387 = smul.addr %s383, 32
      %s388 = sadd.s32 %s386, %s387
      %s389 = smul.addr %s388, 8
      %s390 = scalar_lea.vmem %s2, %s389
      %s391 = sadd.s32 %s22, 1
      %s392 = smul.u32 %s391, 8
      %p393 = scmp.lt.s32.totalorder %s392, 15
      %s394 = scalar_select %p393, %s392, 15
      %s395 = smul.u32 8, %s22
      %p396 = scmp.lt.s32.totalorder %s21, 1
      %s397 = scalar_select %p396, %s21, 1
      %p398 = scmp.lt.s32.totalorder %s395, 15
      %s399 = scalar_select %p398, %s395, 15
      %s400 = smul.addr %s399, 2
      %s401 = smul.addr %s397, 32
      %s402 = sadd.s32 %s400, %s401
      %s403 = smul.addr %s402, 8
      %s404 = scalar_lea.vmem %s4, %s403
      %s405 = smul.u32 8, %s22
      %p406 = scmp.lt.s32.totalorder %s21, 1
      %s407 = scalar_select %p406, %s21, 1
      %p408 = scmp.lt.s32.totalorder %s22, 1
      %s409 = scalar_select %p408, %s22, 1
      %s410 = smul.addr %s407, 2
      %s411 = sadd.s32 %s409, %s410
      %s412 = smul.addr %s411, 2
      %s413 = scalar_lea.vmem %s5, %s412
      %v415 = vld [vmem:[%s373] sm:$0xff]
      %v416 = vld [vmem:[%s373 + $0x8] sm:$0xff]
      %v417 = vld [vmem:[%s359] sm:$0xff]
      %v418 = vld [vmem:[%s359 + $0x8] sm:$0xff]
      %v419 = vld [vmem:[%s359 + $0x10] sm:$0xff]
      %v420 = vld [vmem:[%s359 + $0x18] sm:$0xff]
      %v421 = vld [vmem:[%s359 + $0x20] sm:$0xff]
      %v422 = vld [vmem:[%s359 + $0x28] sm:$0xff]
      %v423 = vld [vmem:[%s359 + $0x30] sm:$0xff]
      %v424 = vld [vmem:[%s359 + $0x38] sm:$0xff]
      %v425 = vld [vmem:[%s359 + $0x40] sm:$0xff]
      %v426 = vld [vmem:[%s359 + $0x48] sm:$0xff]
      %v427 = vld [vmem:[%s359 + $0x50] sm:$0xff]
      %v428 = vld [vmem:[%s359 + $0x58] sm:$0xff]
      %v429 = vld [vmem:[%s359 + $0x60] sm:$0xff]
      %v430 = vld [vmem:[%s359 + $0x68] sm:$0xff]
      %v431 = vld [vmem:[%s359 + $0x70] sm:$0xff]
      %v432 = vld [vmem:[%s359 + $0x78] sm:$0xff]
      %v433 = vld [vmem:[%s390] sm:$0xff]
      %v434 = vld [vmem:[%s390 + $0x8] sm:$0xff]
      %p435 = scmp.gt.s32.totalorder %s22, 0
      %s436 = scalar_select %p435, 1, 0
      %v437 = vstv %s436
      %vm438 = vcmp.eq.s32.totalorder %v437, 1
      %p439 = scmp.lt.s32.totalorder %s22, 1
      %s440 = scalar_select %p439, 1, 0
      %v441 = vstv %s440
      %vm442 = vcmp.eq.s32.totalorder %v441, 1
      %v443 = vsel %vm438, 1, 0
      %v444 = vsel %vm442, 1, 0
      %vm445 = vcmp.eq.s32.totalorder %v443, 1
      %vm446 = vcmp.eq.s32.totalorder %v444, 1
      %v447 = vsel %vm445, %v415, 0.0
      %v448 = vsel %vm445, %v416, 0.0
      %v449 = vsel 1, %v417, 0.0
      %v450 = vsel 1, %v418, 0.0
      %v451 = vsel 1, %v419, 0.0
      %v452 = vsel 1, %v420, 0.0
      %v453 = vsel 1, %v421, 0.0
      %v454 = vsel 1, %v422, 0.0
      %v455 = vsel 1, %v423, 0.0
      %v456 = vsel 1, %v424, 0.0
      %v457 = vsel 1, %v425, 0.0
      %v458 = vsel 1, %v426, 0.0
      %v459 = vsel 1, %v427, 0.0
      %v460 = vsel 1, %v428, 0.0
      %v461 = vsel 1, %v429, 0.0
      %v462 = vsel 1, %v430, 0.0
      %v463 = vsel 1, %v431, 0.0
      %v464 = vsel 1, %v432, 0.0
      %v465 = vsel %vm446, %v433, 0.0
      %v466 = vsel %vm446, %v434, 0.0
      %v467 = vld [vmem:[%s3] sm:$0xf]
      %v468 = vld [vmem:[%s3 + $0x4] sm:$0xf]
      %v469 = vld [vmem:[%s3 + $0x8] sm:$0xf]
      %v470 = vld [vmem:[%s3 + $0xc] sm:$0xf]
      %v471 = vld [vmem:[%s3 + $0x10] sm:$0xf]
      %v472 = vld [vmem:[%s3 + $0x14] sm:$0xf]
      %v473 = vld [vmem:[%s3 + $0x18] sm:$0xf]
      %v474 = vld [vmem:[%s3 + $0x1c] sm:$0xf]
      %v475 = vld [vmem:[%s3 + $0x20] sm:$0xf]
      %v476 = vld [vmem:[%s3 + $0x24] sm:$0xf]
      %v477 = vld [vmem:[%s3 + $0x28] sm:$0xf]
      %v478 = vld [vmem:[%s3 + $0x2c] sm:$0xf]
      %v479 = vld [vmem:[%s3 + $0x30] sm:$0xf]
      %v480 = vld [vmem:[%s3 + $0x34] sm:$0xf]
      %v481 = vld [vmem:[%s3 + $0x38] sm:$0xf]
      %v482 = vld [vmem:[%s3 + $0x3c] sm:$0xf]
      %v483 = vld [vmem:[%s3 + $0x40] sm:$0xf]
      %v484 = vld [vmem:[%s3 + $0x44] sm:$0xf]
      %v485 = vld [vmem:[%s3 + $0x48] sm:$0xf]
      %v486 = vld [vmem:[%s3 + $0x4c] sm:$0xf]
      %v487 = vld [vmem:[%s3 + $0x50] sm:$0xf]
      %v488 = vld [vmem:[%s3 + $0x54] sm:$0xf]
      %v489 = vld [vmem:[%s3 + $0x58] sm:$0xf]
      %v490 = vld [vmem:[%s3 + $0x5c] sm:$0xf]
      %v491 = vld [vmem:[%s3 + $0x60] sm:$0xf]
      %v492 = vld [vmem:[%s3 + $0x64] sm:$0xf]
      %v493 = vld [vmem:[%s3 + $0x68] sm:$0xf]
      %v494 = vld [vmem:[%s3 + $0x6c] sm:$0xf]
      %v495 = vld [vmem:[%s3 + $0x70] sm:$0xf]
      %v496 = vld [vmem:[%s3 + $0x74] sm:$0xf]
      %v497 = vld [vmem:[%s3 + $0x78] sm:$0xf]
      %v498 = vld [vmem:[%s3 + $0x7c] sm:$0xf]
      %v499 = vld [vmem:[%s3 + $0x80] sm:$0xf]
      %v500 = vld [vmem:[%s3 + $0x84] sm:$0xf]
      %v501 = vld [vmem:[%s3 + $0x88] sm:$0xf]
      %v502 = vld [vmem:[%s3 + $0x8c] sm:$0xf]
      %v503 = vld [vmem:[%s3 + $0x90] sm:$0xf]
      %v504 = vld [vmem:[%s3 + $0x94] sm:$0xf]
      %v505 = vld [vmem:[%s3 + $0x98] sm:$0xf]
      %v506 = vld [vmem:[%s3 + $0x9c] sm:$0xf]
      %v507 = vld [vmem:[%s3 + $0xa0] sm:$0xf]
      %v508 = vld [vmem:[%s3 + $0xa4] sm:$0xf]
      %v509 = vld [vmem:[%s3 + $0xa8] sm:$0xf]
      %v510 = vld [vmem:[%s3 + $0xac] sm:$0xf]
      %v511 = vld [vmem:[%s3 + $0xb0] sm:$0xf]
      %v512 = vld [vmem:[%s3 + $0xb4] sm:$0xf]
      %v513 = vld [vmem:[%s3 + $0xb8] sm:$0xf]
      %v514 = vld [vmem:[%s3 + $0xbc] sm:$0xf]
      %v515 = vld [vmem:[%s3 + $0xc0] sm:$0xf]
      %v516 = vld [vmem:[%s3 + $0xc4] sm:$0xf]
      %v517 = vld [vmem:[%s3 + $0xc8] sm:$0xf]
      %v518 = vld [vmem:[%s3 + $0xcc] sm:$0xf]
      %v519 = vld [vmem:[%s3 + $0xd0] sm:$0xf]
      %v520 = vld [vmem:[%s3 + $0xd4] sm:$0xf]
      %v521 = vld [vmem:[%s3 + $0xd8] sm:$0xf]
      %v522 = vld [vmem:[%s3 + $0xdc] sm:$0xf]
      %v523 = vld [vmem:[%s3 + $0xe0] sm:$0xf]
      %v524 = vld [vmem:[%s3 + $0xe4] sm:$0xf]
      %v525 = vld [vmem:[%s3 + $0xe8] sm:$0xf]
      %v526 = vld [vmem:[%s3 + $0xec] sm:$0xf]
      %v527 = vld [vmem:[%s3 + $0xf0] sm:$0xf]
      %v528 = vld [vmem:[%s3 + $0xf4] sm:$0xf]
      %v529 = vld [vmem:[%s3 + $0xf8] sm:$0xf]
      %v530 = vld [vmem:[%s3 + $0xfc] sm:$0xf]
      %v531 = vld [vmem:[%s3 + $0x100] sm:$0xf]
      %v532 = vld [vmem:[%s3 + $0x104] sm:$0xf]
      %v533 = vld [vmem:[%s3 + $0x108] sm:$0xf]
      %v534 = vld [vmem:[%s3 + $0x10c] sm:$0xf]
      %v535 = vld [vmem:[%s3 + $0x110] sm:$0xf]
      %v536 = vld [vmem:[%s3 + $0x114] sm:$0xf]
      %v537 = vld [vmem:[%s3 + $0x118] sm:$0xf]
      %v538 = vld [vmem:[%s3 + $0x11c] sm:$0xf]
      %v539 = vld [vmem:[%s3 + $0x120] sm:$0xf]
      %v540 = vld [vmem:[%s3 + $0x124] sm:$0xf]
      %v541 = vld [vmem:[%s3 + $0x128] sm:$0xf]
      %v542 = vld [vmem:[%s3 + $0x12c] sm:$0xf]
      %v543 = vld [vmem:[%s3 + $0x130] sm:$0xf]
      %v544 = vld [vmem:[%s3 + $0x134] sm:$0xf]
      %v545 = vld [vmem:[%s3 + $0x138] sm:$0xf]
      %v546 = vld [vmem:[%s3 + $0x13c] sm:$0xf]
      %v547 = vld [vmem:[%s3 + $0x140] sm:$0xf]
      %v548 = vld [vmem:[%s3 + $0x144] sm:$0xf]
      %v549 = vld [vmem:[%s3 + $0x148] sm:$0xf]
      %v550 = vld [vmem:[%s3 + $0x14c] sm:$0xf]
      %v551 = vld [vmem:[%s3 + $0x150] sm:$0xf]
      %v552 = vld [vmem:[%s3 + $0x154] sm:$0xf]
      %v553 = vld [vmem:[%s3 + $0x158] sm:$0xf]
      %v554 = vld [vmem:[%s3 + $0x15c] sm:$0xf]
      %v555 = vld [vmem:[%s3 + $0x160] sm:$0xf]
      %v556 = vld [vmem:[%s3 + $0x164] sm:$0xf]
      %v557 = vld [vmem:[%s3 + $0x168] sm:$0xf]
      %v558 = vld [vmem:[%s3 + $0x16c] sm:$0xf]
      %v559 = vld [vmem:[%s3 + $0x170] sm:$0xf]
      %v560 = vld [vmem:[%s3 + $0x174] sm:$0xf]
      %v561 = vld [vmem:[%s3 + $0x178] sm:$0xf]
      %v562 = vld [vmem:[%s3 + $0x17c] sm:$0xf]
      %v563 = vld [vmem:[%s3 + $0x180] sm:$0xf]
      %v564 = vld [vmem:[%s3 + $0x184] sm:$0xf]
      %v565 = vld [vmem:[%s3 + $0x188] sm:$0xf]
      %v566 = vld [vmem:[%s3 + $0x18c] sm:$0xf]
      %v567 = vld [vmem:[%s3 + $0x190] sm:$0xf]
      %v568 = vld [vmem:[%s3 + $0x194] sm:$0xf]
      %v569 = vld [vmem:[%s3 + $0x198] sm:$0xf]
      %v570 = vld [vmem:[%s3 + $0x19c] sm:$0xf]
      %v571 = vld [vmem:[%s3 + $0x1a0] sm:$0xf]
      %v572 = vld [vmem:[%s3 + $0x1a4] sm:$0xf]
      %v573 = vld [vmem:[%s3 + $0x1a8] sm:$0xf]
      %v574 = vld [vmem:[%s3 + $0x1ac] sm:$0xf]
      %v575 = vld [vmem:[%s3 + $0x1b0] sm:$0xf]
      %v576 = vld [vmem:[%s3 + $0x1b4] sm:$0xf]
      %v577 = vld [vmem:[%s3 + $0x1b8] sm:$0xf]
      %v578 = vld [vmem:[%s3 + $0x1bc] sm:$0xf]
      %v579 = vld [vmem:[%s3 + $0x1c0] sm:$0xf]
      %v580 = vld [vmem:[%s3 + $0x1c4] sm:$0xf]
      %v581 = vld [vmem:[%s3 + $0x1c8] sm:$0xf]
      %v582 = vld [vmem:[%s3 + $0x1cc] sm:$0xf]
      %v583 = vld [vmem:[%s3 + $0x1d0] sm:$0xf]
      %v584 = vld [vmem:[%s3 + $0x1d4] sm:$0xf]
      %v585 = vld [vmem:[%s3 + $0x1d8] sm:$0xf]
      %v586 = vld [vmem:[%s3 + $0x1dc] sm:$0xf]
      %v587 = vld [vmem:[%s3 + $0x1e0] sm:$0xf]
      %v588 = vld [vmem:[%s3 + $0x1e4] sm:$0xf]
      %v589 = vld [vmem:[%s3 + $0x1e8] sm:$0xf]
      %v590 = vld [vmem:[%s3 + $0x1ec] sm:$0xf]
      %v591 = vld [vmem:[%s3 + $0x1f0] sm:$0xf]
      %v592 = vld [vmem:[%s3 + $0x1f4] sm:$0xf]
      %v593 = vld [vmem:[%s3 + $0x1f8] sm:$0xf]
      %v594 = vld [vmem:[%s3 + $0x1fc] sm:$0xf]
      %v595 = vld [vmem:[%s3 + $0x200] sm:$0xf]
      %v596 = vld [vmem:[%s3 + $0x204] sm:$0xf]
      %v597 = vld [vmem:[%s3 + $0x208] sm:$0xf]
      %v598 = vld [vmem:[%s3 + $0x20c] sm:$0xf]
      %v599 = vld [vmem:[%s3 + $0x210] sm:$0xf]
      %v600 = vld [vmem:[%s3 + $0x214] sm:$0xf]
      %v601 = vld [vmem:[%s3 + $0x218] sm:$0xf]
      %v602 = vld [vmem:[%s3 + $0x21c] sm:$0xf]
      %v603 = vld [vmem:[%s3 + $0x220] sm:$0xf]
      %v604 = vld [vmem:[%s3 + $0x224] sm:$0xf]
      %v605 = vld [vmem:[%s3 + $0x228] sm:$0xf]
      %v606 = vld [vmem:[%s3 + $0x22c] sm:$0xf]
      %v607 = vld [vmem:[%s3 + $0x230] sm:$0xf]
      %v608 = vld [vmem:[%s3 + $0x234] sm:$0xf]
      %v609 = vld [vmem:[%s3 + $0x238] sm:$0xf]
      %v610 = vld [vmem:[%s3 + $0x23c] sm:$0xf]
      %v611 = vpack.c.bf16 %v448, %v447
      %v612 = vpack.c.bf16 %v450, %v449
      %v613 = vpack.c.bf16 %v452, %v451
      %v614 = vpack.c.bf16 %v454, %v453
      %v615 = vpack.c.bf16 %v456, %v455
      %v616 = vpack.c.bf16 %v458, %v457
      %v617 = vpack.c.bf16 %v460, %v459
      %v618 = vpack.c.bf16 %v462, %v461
      %v619 = vpack.c.bf16 %v464, %v463
      %v620 = vpack.c.bf16 %v466, %v465
      %v669 = vunpack.c.l.b16 %v467
      %v670 = vunpack.c.l.b16 %v468
      %v671 = vunpack.c.l.b16 %v469
      %v672 = vunpack.c.l.b16 %v470
      %v673 = vunpack.c.l.b16 %v471
      %v674 = vunpack.c.l.b16 %v472
      %v675 = vunpack.c.l.b16 %v473
      %v676 = vunpack.c.l.b16 %v474
      %v677 = vunpack.c.l.b16 %v475
      %v678 = vunpack.c.l.b16 %v476
      %v679 = vunpack.c.l.b16 %v477
      %v680 = vunpack.c.l.b16 %v478
      %v681 = vunpack.c.l.b16 %v479
      %v682 = vunpack.c.l.b16 %v480
      %v683 = vunpack.c.l.b16 %v481
      %v684 = vunpack.c.l.b16 %v482
      %v685 = vunpack.c.l.b16 %v483
      %v686 = vunpack.c.l.b16 %v484
      %v687 = vunpack.c.l.b16 %v485
      %v688 = vunpack.c.l.b16 %v486
      %v689 = vunpack.c.l.b16 %v487
      %v690 = vunpack.c.l.b16 %v488
      %v691 = vunpack.c.l.b16 %v489
      %v692 = vunpack.c.l.b16 %v490
      %v693 = vunpack.c.l.b16 %v491
      %v694 = vunpack.c.l.b16 %v492
      %v695 = vunpack.c.l.b16 %v493
      %v696 = vunpack.c.l.b16 %v494
      %v697 = vunpack.c.l.b16 %v495
      %v698 = vunpack.c.l.b16 %v496
      %v699 = vunpack.c.l.b16 %v497
      %v700 = vunpack.c.l.b16 %v498
      %v701 = vunpack.c.l.b16 %v499
      %v702 = vunpack.c.l.b16 %v500
      %v703 = vunpack.c.l.b16 %v501
      %v704 = vunpack.c.l.b16 %v502
      %v705 = vunpack.c.l.b16 %v503
      %v706 = vunpack.c.l.b16 %v504
      %v707 = vunpack.c.l.b16 %v505
      %v708 = vunpack.c.l.b16 %v506
      %v709 = vunpack.c.l.b16 %v507
      %v710 = vunpack.c.l.b16 %v508
      %v711 = vunpack.c.l.b16 %v509
      %v712 = vunpack.c.l.b16 %v510
      %v713 = vunpack.c.l.b16 %v511
      %v714 = vunpack.c.l.b16 %v512
      %v715 = vunpack.c.l.b16 %v513
      %v716 = vunpack.c.l.b16 %v514
      %v717 = vpack.c.b16 %v670, %v669
      %v718 = vpack.c.b16 %v672, %v671
      %v719 = vpack.c.b16 %v674, %v673
      %v720 = vpack.c.b16 %v676, %v675
      %v721 = vpack.c.b16 %v678, %v677
      %v722 = vpack.c.b16 %v680, %v679
      %v723 = vpack.c.b16 %v682, %v681
      %v724 = vpack.c.b16 %v684, %v683
      %v725 = vpack.c.b16 %v686, %v685
      %v726 = vpack.c.b16 %v688, %v687
      %v727 = vpack.c.b16 %v690, %v689
      %v728 = vpack.c.b16 %v692, %v691
      %v729 = vpack.c.b16 %v694, %v693
      %v730 = vpack.c.b16 %v696, %v695
      %v731 = vpack.c.b16 %v698, %v697
      %v732 = vpack.c.b16 %v700, %v699
      %v733 = vpack.c.b16 %v702, %v701
      %v734 = vpack.c.b16 %v704, %v703
      %v735 = vpack.c.b16 %v706, %v705
      %v736 = vpack.c.b16 %v708, %v707
      %v737 = vpack.c.b16 %v710, %v709
      %v738 = vpack.c.b16 %v712, %v711
      %v739 = vpack.c.b16 %v714, %v713
      %v740 = vpack.c.b16 %v716, %v715
      %765 = vmatprep.subr.bf16.mxu0 0
      %766 = vmatpush1.bf16.msra.mxu0 %v717
      %767 = vmatprep.subr.bf16.mxu0 0
      %768 = vmatpush1.bf16.msra.mxu0 %v718
      %769 = vmatprep.subr.bf16.mxu0 0
      %770 = vmatpush1.bf16.msra.mxu0 %v719
      %771 = vmatprep.subr.bf16.mxu0 0
      %772 = vmatpush1.bf16.msra.mxu0 %v720
      %773 = vmatprep.subr.bf16.mxu0 0
      %774 = vmatpush1.bf16.msra.mxu0 %v721
      %775 = vmatprep.subr.bf16.mxu0 0
      %776 = vmatpush1.bf16.msra.mxu0 %v722
      %777 = vmatprep.subr.bf16.mxu0 0
      %778 = vmatpush1.bf16.msra.mxu0 %v723
      %779 = vmatprep.subr.bf16.mxu0 0
      %780 = vmatpush1.bf16.msra.mxu0 %v724
      %781 = vmatprep.subr.bf16.mxu0 0
      %782 = vmatpush1.bf16.msra.mxu0 %v725
      %783 = vmatprep.subr.bf16.mxu0 0
      %784 = vmatpush1.bf16.msra.mxu0 %v726
      %785 = vmatprep.subr.bf16.mxu0 0
      %786 = vmatpush1.bf16.msra.mxu0 %v727
      %787 = vmatprep.subr.bf16.mxu0 0
      %788 = vmatpush1.bf16.msra.mxu0 %v728
      %789 = vmatprep.subr.bf16.mxu0 0
      %790 = vmatpush1.bf16.msra.mxu0 %v729
      %791 = vmatprep.subr.bf16.mxu0 0
      %792 = vmatpush1.bf16.msra.mxu0 %v730
      %793 = vmatprep.subr.bf16.mxu0 0
      %794 = vmatpush1.bf16.msra.mxu0 %v731
      %795 = vmatprep.subr.bf16.mxu0 0
      %796 = vmatpush1.bf16.msra.mxu0 %v732
      %797 = vmatprep.mubr.bf16.mxu0 %v612
      %798 = vmatmul.mubr.bf16.gmra.mrb[0].mxu0 %v611
      %v799 = vpop.f32.mrb[0].mxu0
      %v800 = vadd.f32 0.0, %v799
      %v801 = vpop.f32.mrb[0].mxu0
      %v802 = vpop.f32.mrb[0].mxu0
      %v803 = vadd.f32 0.0, %v802
      %v804 = vpop.f32.mrb[0].mxu0
      %805 = vmatprep.mubr.bf16.mxu0 %v613
      %806 = vmatmul.mubr.bf16.gmra.mrb[0].mxu0 %v612
      %v807 = vpop.f32.mrb[0].mxu0
      %v808 = vadd.f32 0.0, %v807
      %v809 = vpop.f32.mrb[0].mxu0
      %v810 = vpop.f32.mrb[0].mxu0
      %v811 = vadd.f32 0.0, %v810
      %v812 = vpop.f32.mrb[0].mxu0
      %813 = vmatprep.mubr.bf16.mxu0 %v614
      %814 = vmatmul.mubr.bf16.gmra.mrb[0].mxu0 %v613
      %v815 = vpop.f32.mrb[0].mxu0
      %v816 = vadd.f32 0.0, %v815
      %v817 = vpop.f32.mrb[0].mxu0
      %v818 = vpop.f32.mrb[0].mxu0
      %v819 = vadd.f32 0.0, %v818
      %v820 = vpop.f32.mrb[0].mxu0
      %821 = vmatprep.mubr.bf16.mxu0 %v615
      %822 = vmatmul.mubr.bf16.gmra.mrb[0].mxu0 %v614
      %v823 = vpop.f32.mrb[0].mxu0
      %v824 = vadd.f32 0.0, %v823
      %v825 = vpop.f32.mrb[0].mxu0
      %v826 = vpop.f32.mrb[0].mxu0
      %v827 = vadd.f32 0.0, %v826
      %v828 = vpop.f32.mrb[0].mxu0
      %829 = vmatprep.mubr.bf16.mxu0 %v616
      %830 = vmatmul.mubr.bf16.gmra.mrb[0].mxu0 %v615
      %v831 = vpop.f32.mrb[0].mxu0
      %v832 = vadd.f32 0.0, %v831
      %v833 = vpop.f32.mrb[0].mxu0
      %v834 = vpop.f32.mrb[0].mxu0
      %v835 = vadd.f32 0.0, %v834
      %v836 = vpop.f32.mrb[0].mxu0
      %837 = vmatprep.mubr.bf16.mxu0 %v617
      %838 = vmatmul.mubr.bf16.gmra.mrb[0].mxu0 %v616
      %v839 = vpop.f32.mrb[0].mxu0
      %v840 = vadd.f32 0.0, %v839
      %v841 = vpop.f32.mrb[0].mxu0
      %v842 = vpop.f32.mrb[0].mxu0
      %v843 = vadd.f32 0.0, %v842
      %v844 = vpop.f32.mrb[0].mxu0
      %845 = vmatprep.mubr.bf16.mxu0 %v618
      %846 = vmatmul.mubr.bf16.gmra.mrb[0].mxu0 %v617
      %v847 = vpop.f32.mrb[0].mxu0
      %v848 = vadd.f32 0.0, %v847
      %v849 = vpop.f32.mrb[0].mxu0
      %v850 = vpop.f32.mrb[0].mxu0
      %v851 = vadd.f32 0.0, %v850
      %v852 = vpop.f32.mrb[0].mxu0
      %853 = vmatprep.mubr.bf16.mxu0 %v619
      %854 = vmatmul.mubr.bf16.gmra.mrb[0].mxu0 %v618
      %v855 = vpop.f32.mrb[0].mxu0
      %v856 = vadd.f32 0.0, %v855
      %v857 = vpop.f32.mrb[0].mxu0
      %v858 = vpop.f32.mrb[0].mxu0
      %v859 = vadd.f32 0.0, %v858
      %v860 = vpop.f32.mrb[0].mxu0
      %861 = vdwg.mxu0
      %862 = vmatprep.subr.bf16.mxu0 0
      %863 = vmatpush1.bf16.msra.mxu0 %v733
      %864 = vmatprep.subr.bf16.mxu0 0
      %865 = vmatpush1.bf16.msra.mxu0 %v734
      %866 = vmatprep.subr.bf16.mxu0 0
      %867 = vmatpush1.bf16.msra.mxu0 %v735
      %868 = vmatprep.subr.bf16.mxu0 0
      %869 = vmatpush1.bf16.msra.mxu0 %v736
      %870 = vmatprep.subr.bf16.mxu0 0
      %871 = vmatpush1.bf16.msra.mxu0 %v737
      %872 = vmatprep.subr.bf16.mxu0 0
      %873 = vmatpush1.bf16.msra.mxu0 %v738
      %874 = vmatprep.subr.bf16.mxu0 0
      %875 = vmatpush1.bf16.msra.mxu0 %v739
      %876 = vmatprep.subr.bf16.mxu0 0
      %877 = vmatpush1.bf16.msra.mxu0 %v740
      %878 = vmatprep.subr.bf16.mxu0 0
      %879 = vmatpush1.bf16.msra.mxu0 0
      %880 = vmatprep.subr.bf16.mxu0 0
      %881 = vmatpush1.bf16.msra.mxu0 0
      %882 = vmatprep.subr.bf16.mxu0 0
      %883 = vmatpush1.bf16.msra.mxu0 0
      %884 = vmatprep.subr.bf16.mxu0 0
      %885 = vmatpush1.bf16.msra.mxu0 0
      %886 = vmatprep.subr.bf16.mxu0 0
      %887 = vmatpush1.bf16.msra.mxu0 0
      %888 = vmatprep.subr.bf16.mxu0 0
      %889 = vmatpush1.bf16.msra.mxu0 0
      %890 = vmatprep.subr.bf16.mxu0 0
      %891 = vmatpush1.bf16.msra.mxu0 0
      %892 = vmatprep.subr.bf16.mxu0 0
      %893 = vmatpush1.bf16.msra.mxu0 0
      %894 = vmatprep.mubr.bf16.mxu0 0
      %895 = vmatmul.mubr.bf16.gmra.mrb[0].mxu0 %v613
      %v896 = vpop.f32.mrb[0].mxu0
      %v897 = vadd.f32 %v800, %v896
      %v898 = vpop.f32.mrb[0].mxu0
      %v899 = vpop.f32.mrb[0].mxu0
      %v900 = vadd.f32 %v803, %v899
      %v901 = vpop.f32.mrb[0].mxu0
      %902 = vmatprep.mubr.bf16.mxu0 0
      %903 = vmatmul.mubr.bf16.gmra.mrb[0].mxu0 %v614
      %v904 = vpop.f32.mrb[0].mxu0
      %v905 = vadd.f32 %v808, %v904
      %v906 = vpop.f32.mrb[0].mxu0
      %v907 = vpop.f32.mrb[0].mxu0
      %v908 = vadd.f32 %v811, %v907
      %v909 = vpop.f32.mrb[0].mxu0
      %910 = vmatprep.mubr.bf16.mxu0 0
      %911 = vmatmul.mubr.bf16.gmra.mrb[0].mxu0 %v615
      %v912 = vpop.f32.mrb[0].mxu0
      %v913 = vadd.f32 %v816, %v912
      %v914 = vpop.f32.mrb[0].mxu0
      %v915 = vpop.f32.mrb[0].mxu0
      %v916 = vadd.f32 %v819, %v915
      %v917 = vpop.f32.mrb[0].mxu0
      %918 = vmatprep.mubr.bf16.mxu0 0
      %919 = vmatmul.mubr.bf16.gmra.mrb[0].mxu0 %v616
      %v920 = vpop.f32.mrb[0].mxu0
      %v921 = vadd.f32 %v824, %v920
      %v922 = vpop.f32.mrb[0].mxu0
      %v923 = vpop.f32.mrb[0].mxu0
      %v924 = vadd.f32 %v827, %v923
      %v925 = vpop.f32.mrb[0].mxu0
      %926 = vmatprep.mubr.bf16.mxu0 0
      %927 = vmatmul.mubr.bf16.gmra.mrb[0].mxu0 %v617
      %v928 = vpop.f32.mrb[0].mxu0
      %v929 = vadd.f32 %v832, %v928
      %v930 = vpop.f32.mrb[0].mxu0
      %v931 = vpop.f32.mrb[0].mxu0
      %v932 = vadd.f32 %v835, %v931
      %v933 = vpop.f32.mrb[0].mxu0
      %934 = vmatprep.mubr.bf16.mxu0 0
      %935 = vmatmul.mubr.bf16.gmra.mrb[0].mxu0 %v618
      %v936 = vpop.f32.mrb[0].mxu0
      %v937 = vadd.f32 %v840, %v936
      %v938 = vpop.f32.mrb[0].mxu0
      %v939 = vpop.f32.mrb[0].mxu0
      %v940 = vadd.f32 %v843, %v939
      %v941 = vpop.f32.mrb[0].mxu0
      %942 = vmatprep.mubr.bf16.mxu0 0
      %943 = vmatmul.mubr.bf16.gmra.mrb[0].mxu0 %v619
      %v944 = vpop.f32.mrb[0].mxu0
      %v945 = vadd.f32 %v848, %v944
      %v946 = vpop.f32.mrb[0].mxu0
      %v947 = vpop.f32.mrb[0].mxu0
      %v948 = vadd.f32 %v851, %v947
      %v949 = vpop.f32.mrb[0].mxu0
      %950 = vmatprep.mubr.bf16.mxu0 0
      %951 = vmatmul.mubr.bf16.gmra.mrb[0].mxu0 %v620
      %v952 = vpop.f32.mrb[0].mxu0
      %v953 = vadd.f32 %v856, %v952
      %v954 = vpop.f32.mrb[0].mxu0
      %v955 = vpop.f32.mrb[0].mxu0
      %v956 = vadd.f32 %v859, %v955
      %v957 = vpop.f32.mrb[0].mxu0
      %958 = vdwg.mxu0
      %vm975 = vcmask 1040384
      %v976 = vrot.slane %v897, 7
      %v977 = vrot.slane %v900, 7
      %v978 = vsel %vm975, %v976, %v977
      %v979 = vrot.slane %v905, 7
      %v980 = vrot.slane %v908, 7
      %v981 = vsel %vm975, %v979, %v980
      %v982 = vrot.slane %v913, 7
      %v983 = vrot.slane %v916, 7
      %v984 = vsel %vm975, %v982, %v983
      %v985 = vrot.slane %v921, 7
      %v986 = vrot.slane %v924, 7
      %v987 = vsel %vm975, %v985, %v986
      %v988 = vrot.slane %v929, 7
      %v989 = vrot.slane %v932, 7
      %v990 = vsel %vm975, %v988, %v989
      %v991 = vrot.slane %v937, 7
      %v992 = vrot.slane %v940, 7
      %v993 = vsel %vm975, %v991, %v992
      %v994 = vrot.slane %v945, 7
      %v995 = vrot.slane %v948, 7
      %v996 = vsel %vm975, %v994, %v995
      %v997 = vrot.slane %v953, 7
      %v998 = vrot.slane %v956, 7
      %v999 = vsel %vm975, %v997, %v998
      %v1016 = vsel %vm975, 0.0, %v976
      %v1017 = vsel %vm975, 0.0, %v979
      %v1018 = vsel %vm975, 0.0, %v982
      %v1019 = vsel %vm975, 0.0, %v985
      %v1020 = vsel %vm975, 0.0, %v988
      %v1021 = vsel %vm975, 0.0, %v991
      %v1022 = vsel %vm975, 0.0, %v994
      %v1023 = vsel %vm975, 0.0, %v997
      %v1024 = vadd.f32 %v1016, 0.0
      %v1025 = vadd.f32 %v978, 0.0
      %v1026 = vadd.f32 %v1017, 0.0
      %v1027 = vadd.f32 %v981, 0.0
      %v1028 = vadd.f32 %v1018, 0.0
      %v1029 = vadd.f32 %v984, 0.0
      %v1030 = vadd.f32 %v1019, 0.0
      %v1031 = vadd.f32 %v987, 0.0
      %v1032 = vadd.f32 %v1020, 0.0
      %v1033 = vadd.f32 %v990, 0.0
      %v1034 = vadd.f32 %v1021, 0.0
      %v1035 = vadd.f32 %v993, 0.0
      %v1036 = vadd.f32 %v1022, 0.0
      %v1037 = vadd.f32 %v996, 0.0
      %v1038 = vadd.f32 %v1023, 0.0
      %v1039 = vadd.f32 %v999, 0.0
      %v1088 = vunpack.c.l.b16 %v515
      %v1089 = vunpack.c.l.b16 %v516
      %v1090 = vunpack.c.l.b16 %v517
      %v1091 = vunpack.c.l.b16 %v518
      %v1092 = vunpack.c.l.b16 %v519
      %v1093 = vunpack.c.l.b16 %v520
      %v1094 = vunpack.c.l.b16 %v521
      %v1095 = vunpack.c.l.b16 %v522
      %v1096 = vunpack.c.l.b16 %v523
      %v1097 = vunpack.c.l.b16 %v524
      %v1098 = vunpack.c.l.b16 %v525
      %v1099 = vunpack.c.l.b16 %v526
      %v1100 = vunpack.c.l.b16 %v527
      %v1101 = vunpack.c.l.b16 %v528
      %v1102 = vunpack.c.l.b16 %v529
      %v1103 = vunpack.c.l.b16 %v530
      %v1104 = vunpack.c.l.b16 %v531
      %v1105 = vunpack.c.l.b16 %v532
      %v1106 = vunpack.c.l.b16 %v533
      %v1107 = vunpack.c.l.b16 %v534
      %v1108 = vunpack.c.l.b16 %v535
      %v1109 = vunpack.c.l.b16 %v536
      %v1110 = vunpack.c.l.b16 %v537
      %v1111 = vunpack.c.l.b16 %v538
      %v1112 = vunpack.c.l.b16 %v539
      %v1113 = vunpack.c.l.b16 %v540
      %v1114 = vunpack.c.l.b16 %v541
      %v1115 = vunpack.c.l.b16 %v542
      %v1116 = vunpack.c.l.b16 %v543
      %v1117 = vunpack.c.l.b16 %v544
      %v1118 = vunpack.c.l.b16 %v545
      %v1119 = vunpack.c.l.b16 %v546
      %v1120 = vunpack.c.l.b16 %v547
      %v1121 = vunpack.c.l.b16 %v548
      %v1122 = vunpack.c.l.b16 %v549
      %v1123 = vunpack.c.l.b16 %v550
      %v1124 = vunpack.c.l.b16 %v551
      %v1125 = vunpack.c.l.b16 %v552
      %v1126 = vunpack.c.l.b16 %v553
      %v1127 = vunpack.c.l.b16 %v554
      %v1128 = vunpack.c.l.b16 %v555
      %v1129 = vunpack.c.l.b16 %v556
      %v1130 = vunpack.c.l.b16 %v557
      %v1131 = vunpack.c.l.b16 %v558
      %v1132 = vunpack.c.l.b16 %v559
      %v1133 = vunpack.c.l.b16 %v560
      %v1134 = vunpack.c.l.b16 %v561
      %v1135 = vunpack.c.l.b16 %v562
      %v1136 = vpack.c.b16 %v1089, %v1088
      %v1137 = vpack.c.b16 %v1091, %v1090
      %v1138 = vpack.c.b16 %v1093, %v1092
      %v1139 = vpack.c.b16 %v1095, %v1094
      %v1140 = vpack.c.b16 %v1097, %v1096
      %v1141 = vpack.c.b16 %v1099, %v1098
      %v1142 = vpack.c.b16 %v1101, %v1100
      %v1143 = vpack.c.b16 %v1103, %v1102
      %v1144 = vpack.c.b16 %v1105, %v1104
      %v1145 = vpack.c.b16 %v1107, %v1106
      %v1146 = vpack.c.b16 %v1109, %v1108
      %v1147 = vpack.c.b16 %v1111, %v1110
      %v1148 = vpack.c.b16 %v1113, %v1112
      %v1149 = vpack.c.b16 %v1115, %v1114
      %v1150 = vpack.c.b16 %v1117, %v1116
      %v1151 = vpack.c.b16 %v1119, %v1118
      %v1152 = vpack.c.b16 %v1121, %v1120
      %v1153 = vpack.c.b16 %v1123, %v1122
      %v1154 = vpack.c.b16 %v1125, %v1124
      %v1155 = vpack.c.b16 %v1127, %v1126
      %v1156 = vpack.c.b16 %v1129, %v1128
      %v1157 = vpack.c.b16 %v1131, %v1130
      %v1158 = vpack.c.b16 %v1133, %v1132
      %v1159 = vpack.c.b16 %v1135, %v1134
      %1184 = vmatprep.subr.bf16.mxu0 0
      %1185 = vmatpush1.bf16.msra.mxu0 %v1136
      %1186 = vmatprep.subr.bf16.mxu0 0
      %1187 = vmatpush1.bf16.msra.mxu0 %v1137
      %1188 = vmatprep.subr.bf16.mxu0 0
      %1189 = vmatpush1.bf16.msra.mxu0 %v1138
      %1190 = vmatprep.subr.bf16.mxu0 0
      %1191 = vmatpush1.bf16.msra.mxu0 %v1139
      %1192 = vmatprep.subr.bf16.mxu0 0
      %1193 = vmatpush1.bf16.msra.mxu0 %v1140
      %1194 = vmatprep.subr.bf16.mxu0 0
      %1195 = vmatpush1.bf16.msra.mxu0 %v1141
      %1196 = vmatprep.subr.bf16.mxu0 0
      %1197 = vmatpush1.bf16.msra.mxu0 %v1142
      %1198 = vmatprep.subr.bf16.mxu0 0
      %1199 = vmatpush1.bf16.msra.mxu0 %v1143
      %1200 = vmatprep.subr.bf16.mxu0 0
      %1201 = vmatpush1.bf16.msra.mxu0 %v1144
      %1202 = vmatprep.subr.bf16.mxu0 0
      %1203 = vmatpush1.bf16.msra.mxu0 %v1145
      %1204 = vmatprep.subr.bf16.mxu0 0
      %1205 = vmatpush1.bf16.msra.mxu0 %v1146
      %1206 = vmatprep.subr.bf16.mxu0 0
      %1207 = vmatpush1.bf16.msra.mxu0 %v1147
      %1208 = vmatprep.subr.bf16.mxu0 0
      %1209 = vmatpush1.bf16.msra.mxu0 %v1148
      %1210 = vmatprep.subr.bf16.mxu0 0
      %1211 = vmatpush1.bf16.msra.mxu0 %v1149
      %1212 = vmatprep.subr.bf16.mxu0 0
      %1213 = vmatpush1.bf16.msra.mxu0 %v1150
      %1214 = vmatprep.subr.bf16.mxu0 0
      %1215 = vmatpush1.bf16.msra.mxu0 %v1151
      %1216 = vmatprep.mubr.bf16.mxu0 %v612
      %1217 = vmatmul.mubr.bf16.gmra.mrb[0].mxu0 %v611
      %v1218 = vpop.f32.mrb[0].mxu0
      %v1219 = vadd.f32 0.0, %v1218
      %v1220 = vpop.f32.mrb[0].mxu0
      %v1221 = vpop.f32.mrb[0].mxu0
      %v1222 = vadd.f32 0.0, %v1221
      %v1223 = vpop.f32.mrb[0].mxu0
      %1224 = vmatprep.mubr.bf16.mxu0 %v613
      %1225 = vmatmul.mubr.bf16.gmra.mrb[0].mxu0 %v612
      %v1226 = vpop.f32.mrb[0].mxu0
      %v1227 = vadd.f32 0.0, %v1226
      %v1228 = vpop.f32.mrb[0].mxu0
      %v1229 = vpop.f32.mrb[0].mxu0
      %v1230 = vadd.f32 0.0, %v1229
      %v1231 = vpop.f32.mrb[0].mxu0
      %1232 = vmatprep.mubr.bf16.mxu0 %v614
      %1233 = vmatmul.mubr.bf16.gmra.mrb[0].mxu0 %v613
      %v1234 = vpop.f32.mrb[0].mxu0
      %v1235 = vadd.f32 0.0, %v1234
      %v1236 = vpop.f32.mrb[0].mxu0
      %v1237 = vpop.f32.mrb[0].mxu0
      %v1238 = vadd.f32 0.0, %v1237
      %v1239 = vpop.f32.mrb[0].mxu0
      %1240 = vmatprep.mubr.bf16.mxu0 %v615
      %1241 = vmatmul.mubr.bf16.gmra.mrb[0].mxu0 %v614
      %v1242 = vpop.f32.mrb[0].mxu0
      %v1243 = vadd.f32 0.0, %v1242
      %v1244 = vpop.f32.mrb[0].mxu0
      %v1245 = vpop.f32.mrb[0].mxu0
      %v1246 = vadd.f32 0.0, %v1245
      %v1247 = vpop.f32.mrb[0].mxu0
      %1248 = vmatprep.mubr.bf16.mxu0 %v616
      %1249 = vmatmul.mubr.bf16.gmra.mrb[0].mxu0 %v615
      %v1250 = vpop.f32.mrb[0].mxu0
      %v1251 = vadd.f32 0.0, %v1250
      %v1252 = vpop.f32.mrb[0].mxu0
      %v1253 = vpop.f32.mrb[0].mxu0
      %v1254 = vadd.f32 0.0, %v1253
      %v1255 = vpop.f32.mrb[0].mxu0
      %1256 = vmatprep.mubr.bf16.mxu0 %v617
      %1257 = vmatmul.mubr.bf16.gmra.mrb[0].mxu0 %v616
      %v1258 = vpop.f32.mrb[0].mxu0
      %v1259 = vadd.f32 0.0, %v1258
      %v1260 = vpop.f32.mrb[0].mxu0
      %v1261 = vpop.f32.mrb[0].mxu0
      %v1262 = vadd.f32 0.0, %v1261
      %v1263 = vpop.f32.mrb[0].mxu0
      %1264 = vmatprep.mubr.bf16.mxu0 %v618
      %1265 = vmatmul.mubr.bf16.gmra.mrb[0].mxu0 %v617
      %v1266 = vpop.f32.mrb[0].mxu0
      %v1267 = vadd.f32 0.0, %v1266
      %v1268 = vpop.f32.mrb[0].mxu0
      %v1269 = vpop.f32.mrb[0].mxu0
      %v1270 = vadd.f32 0.0, %v1269
      %v1271 = vpop.f32.mrb[0].mxu0
      %1272 = vmatprep.mubr.bf16.mxu0 %v619
      %1273 = vmatmul.mubr.bf16.gmra.mrb[0].mxu0 %v618
      %v1274 = vpop.f32.mrb[0].mxu0
      %v1275 = vadd.f32 0.0, %v1274
      %v1276 = vpop.f32.mrb[0].mxu0
      %v1277 = vpop.f32.mrb[0].mxu0
      %v1278 = vadd.f32 0.0, %v1277
      %v1279 = vpop.f32.mrb[0].mxu0
      %1280 = vdwg.mxu0
      %1281 = vmatprep.subr.bf16.mxu0 0
      %1282 = vmatpush1.bf16.msra.mxu0 %v1152
      %1283 = vmatprep.subr.bf16.mxu0 0
      %1284 = vmatpush1.bf16.msra.mxu0 %v1153
      %1285 = vmatprep.subr.bf16.mxu0 0
      %1286 = vmatpush1.bf16.msra.mxu0 %v1154
      %1287 = vmatprep.subr.bf16.mxu0 0
      %1288 = vmatpush1.bf16.msra.mxu0 %v1155
      %1289 = vmatprep.subr.bf16.mxu0 0
      %1290 = vmatpush1.bf16.msra.mxu0 %v1156
      %1291 = vmatprep.subr.bf16.mxu0 0
      %1292 = vmatpush1.bf16.msra.mxu0 %v1157
      %1293 = vmatprep.subr.bf16.mxu0 0
      %1294 = vmatpush1.bf16.msra.mxu0 %v1158
      %1295 = vmatprep.subr.bf16.mxu0 0
      %1296 = vmatpush1.bf16.msra.mxu0 %v1159
      %1297 = vmatprep.subr.bf16.mxu0 0
      %1298 = vmatpush1.bf16.msra.mxu0 0
      %1299 = vmatprep.subr.bf16.mxu0 0
      %1300 = vmatpush1.bf16.msra.mxu0 0
      %1301 = vmatprep.subr.bf16.mxu0 0
      %1302 = vmatpush1.bf16.msra.mxu0 0
      %1303 = vmatprep.subr.bf16.mxu0 0
      %1304 = vmatpush1.bf16.msra.mxu0 0
      %1305 = vmatprep.subr.bf16.mxu0 0
      %1306 = vmatpush1.bf16.msra.mxu0 0
      %1307 = vmatprep.subr.bf16.mxu0 0
      %1308 = vmatpush1.bf16.msra.mxu0 0
      %1309 = vmatprep.subr.bf16.mxu0 0
      %1310 = vmatpush1.bf16.msra.mxu0 0
      %1311 = vmatprep.subr.bf16.mxu0 0
      %1312 = vmatpush1.bf16.msra.mxu0 0
      %1313 = vmatprep.mubr.bf16.mxu0 0
      %1314 = vmatmul.mubr.bf16.gmra.mrb[0].mxu0 %v613
      %v1315 = vpop.f32.mrb[0].mxu0
      %v1316 = vadd.f32 %v1219, %v1315
      %v1317 = vpop.f32.mrb[0].mxu0
      %v1318 = vpop.f32.mrb[0].mxu0
      %v1319 = vadd.f32 %v1222, %v1318
      %v1320 = vpop.f32.mrb[0].mxu0
      %1321 = vmatprep.mubr.bf16.mxu0 0
      %1322 = vmatmul.mubr.bf16.gmra.mrb[0].mxu0 %v614
      %v1323 = vpop.f32.mrb[0].mxu0
      %v1324 = vadd.f32 %v1227, %v1323
      %v1325 = vpop.f32.mrb[0].mxu0
      %v1326 = vpop.f32.mrb[0].mxu0
      %v1327 = vadd.f32 %v1230, %v1326
      %v1328 = vpop.f32.mrb[0].mxu0
      %1329 = vmatprep.mubr.bf16.mxu0 0
      %1330 = vmatmul.mubr.bf16.gmra.mrb[0].mxu0 %v615
      %v1331 = vpop.f32.mrb[0].mxu0
      %v1332 = vadd.f32 %v1235, %v1331
      %v1333 = vpop.f32.mrb[0].mxu0
      %v1334 = vpop.f32.mrb[0].mxu0
      %v1335 = vadd.f32 %v1238, %v1334
      %v1336 = vpop.f32.mrb[0].mxu0
      %1337 = vmatprep.mubr.bf16.mxu0 0
      %1338 = vmatmul.mubr.bf16.gmra.mrb[0].mxu0 %v616
      %v1339 = vpop.f32.mrb[0].mxu0
      %v1340 = vadd.f32 %v1243, %v1339
      %v1341 = vpop.f32.mrb[0].mxu0
      %v1342 = vpop.f32.mrb[0].mxu0
      %v1343 = vadd.f32 %v1246, %v1342
      %v1344 = vpop.f32.mrb[0].mxu0
      %1345 = vmatprep.mubr.bf16.mxu0 0
      %1346 = vmatmul.mubr.bf16.gmra.mrb[0].mxu0 %v617
      %v1347 = vpop.f32.mrb[0].mxu0
      %v1348 = vadd.f32 %v1251, %v1347
      %v1349 = vpop.f32.mrb[0].mxu0
      %v1350 = vpop.f32.mrb[0].mxu0
      %v1351 = vadd.f32 %v1254, %v1350
      %v1352 = vpop.f32.mrb[0].mxu0
      %1353 = vmatprep.mubr.bf16.mxu0 0
      %1354 = vmatmul.mubr.bf16.gmra.mrb[0].mxu0 %v618
      %v1355 = vpop.f32.mrb[0].mxu0
      %v1356 = vadd.f32 %v1259, %v1355
      %v1357 = vpop.f32.mrb[0].mxu0
      %v1358 = vpop.f32.mrb[0].mxu0
      %v1359 = vadd.f32 %v1262, %v1358
      %v1360 = vpop.f32.mrb[0].mxu0
      %1361 = vmatprep.mubr.bf16.mxu0 0
      %1362 = vmatmul.mubr.bf16.gmra.mrb[0].mxu0 %v619
      %v1363 = vpop.f32.mrb[0].mxu0
      %v1364 = vadd.f32 %v1267, %v1363
      %v1365 = vpop.f32.mrb[0].mxu0
      %v1366 = vpop.f32.mrb[0].mxu0
      %v1367 = vadd.f32 %v1270, %v1366
      %v1368 = vpop.f32.mrb[0].mxu0
      %1369 = vmatprep.mubr.bf16.mxu0 0
      %1370 = vmatmul.mubr.bf16.gmra.mrb[0].mxu0 %v620
      %v1371 = vpop.f32.mrb[0].mxu0
      %v1372 = vadd.f32 %v1275, %v1371
      %v1373 = vpop.f32.mrb[0].mxu0
      %v1374 = vpop.f32.mrb[0].mxu0
      %v1375 = vadd.f32 %v1278, %v1374
      %v1376 = vpop.f32.mrb[0].mxu0
      %1377 = vdwg.mxu0
      %v1378 = vadd.f32 %v1024, %v1316
      %v1379 = vadd.f32 %v1025, %v1319
      %v1380 = vadd.f32 %v1026, %v1324
      %v1381 = vadd.f32 %v1027, %v1327
      %v1382 = vadd.f32 %v1028, %v1332
      %v1383 = vadd.f32 %v1029, %v1335
      %v1384 = vadd.f32 %v1030, %v1340
      %v1385 = vadd.f32 %v1031, %v1343
      %v1386 = vadd.f32 %v1032, %v1348
      %v1387 = vadd.f32 %v1033, %v1351
      %v1388 = vadd.f32 %v1034, %v1356
      %v1389 = vadd.f32 %v1035, %v1359
      %v1390 = vadd.f32 %v1036, %v1364
      %v1391 = vadd.f32 %v1037, %v1367
      %v1392 = vadd.f32 %v1038, %v1372
      %v1393 = vadd.f32 %v1039, %v1375
      %v1442 = vunpack.c.l.b16 %v563
      %v1443 = vunpack.c.l.b16 %v564
      %v1444 = vunpack.c.l.b16 %v565
      %v1445 = vunpack.c.l.b16 %v566
      %v1446 = vunpack.c.l.b16 %v567
      %v1447 = vunpack.c.l.b16 %v568
      %v1448 = vunpack.c.l.b16 %v569
      %v1449 = vunpack.c.l.b16 %v570
      %v1450 = vunpack.c.l.b16 %v571
      %v1451 = vunpack.c.l.b16 %v572
      %v1452 = vunpack.c.l.b16 %v573
      %v1453 = vunpack.c.l.b16 %v574
      %v1454 = vunpack.c.l.b16 %v575
      %v1455 = vunpack.c.l.b16 %v576
      %v1456 = vunpack.c.l.b16 %v577
      %v1457 = vunpack.c.l.b16 %v578
      %v1458 = vunpack.c.l.b16 %v579
      %v1459 = vunpack.c.l.b16 %v580
      %v1460 = vunpack.c.l.b16 %v581
      %v1461 = vunpack.c.l.b16 %v582
      %v1462 = vunpack.c.l.b16 %v583
      %v1463 = vunpack.c.l.b16 %v584
      %v1464 = vunpack.c.l.b16 %v585
      %v1465 = vunpack.c.l.b16 %v586
      %v1466 = vunpack.c.l.b16 %v587
      %v1467 = vunpack.c.l.b16 %v588
      %v1468 = vunpack.c.l.b16 %v589
      %v1469 = vunpack.c.l.b16 %v590
      %v1470 = vunpack.c.l.b16 %v591
      %v1471 = vunpack.c.l.b16 %v592
      %v1472 = vunpack.c.l.b16 %v593
      %v1473 = vunpack.c.l.b16 %v594
      %v1474 = vunpack.c.l.b16 %v595
      %v1475 = vunpack.c.l.b16 %v596
      %v1476 = vunpack.c.l.b16 %v597
      %v1477 = vunpack.c.l.b16 %v598
      %v1478 = vunpack.c.l.b16 %v599
      %v1479 = vunpack.c.l.b16 %v600
      %v1480 = vunpack.c.l.b16 %v601
      %v1481 = vunpack.c.l.b16 %v602
      %v1482 = vunpack.c.l.b16 %v603
      %v1483 = vunpack.c.l.b16 %v604
      %v1484 = vunpack.c.l.b16 %v605
      %v1485 = vunpack.c.l.b16 %v606
      %v1486 = vunpack.c.l.b16 %v607
      %v1487 = vunpack.c.l.b16 %v608
      %v1488 = vunpack.c.l.b16 %v609
      %v1489 = vunpack.c.l.b16 %v610
      %v1490 = vpack.c.b16 %v1443, %v1442
      %v1491 = vpack.c.b16 %v1445, %v1444
      %v1492 = vpack.c.b16 %v1447, %v1446
      %v1493 = vpack.c.b16 %v1449, %v1448
      %v1494 = vpack.c.b16 %v1451, %v1450
      %v1495 = vpack.c.b16 %v1453, %v1452
      %v1496 = vpack.c.b16 %v1455, %v1454
      %v1497 = vpack.c.b16 %v1457, %v1456
      %v1498 = vpack.c.b16 %v1459, %v1458
      %v1499 = vpack.c.b16 %v1461, %v1460
      %v1500 = vpack.c.b16 %v1463, %v1462
      %v1501 = vpack.c.b16 %v1465, %v1464
      %v1502 = vpack.c.b16 %v1467, %v1466
      %v1503 = vpack.c.b16 %v1469, %v1468
      %v1504 = vpack.c.b16 %v1471, %v1470
      %v1505 = vpack.c.b16 %v1473, %v1472
      %v1506 = vpack.c.b16 %v1475, %v1474
      %v1507 = vpack.c.b16 %v1477, %v1476
      %v1508 = vpack.c.b16 %v1479, %v1478
      %v1509 = vpack.c.b16 %v1481, %v1480
      %v1510 = vpack.c.b16 %v1483, %v1482
      %v1511 = vpack.c.b16 %v1485, %v1484
      %v1512 = vpack.c.b16 %v1487, %v1486
      %v1513 = vpack.c.b16 %v1489, %v1488
      %1538 = vmatprep.subr.bf16.mxu0 0
      %1539 = vmatpush1.bf16.msra.mxu0 %v1490
      %1540 = vmatprep.subr.bf16.mxu0 0
      %1541 = vmatpush1.bf16.msra.mxu0 %v1491
      %1542 = vmatprep.subr.bf16.mxu0 0
      %1543 = vmatpush1.bf16.msra.mxu0 %v1492
      %1544 = vmatprep.subr.bf16.mxu0 0
      %1545 = vmatpush1.bf16.msra.mxu0 %v1493
      %1546 = vmatprep.subr.bf16.mxu0 0
      %1547 = vmatpush1.bf16.msra.mxu0 %v1494
      %1548 = vmatprep.subr.bf16.mxu0 0
      %1549 = vmatpush1.bf16.msra.mxu0 %v1495
      %1550 = vmatprep.subr.bf16.mxu0 0
      %1551 = vmatpush1.bf16.msra.mxu0 %v1496
      %1552 = vmatprep.subr.bf16.mxu0 0
      %1553 = vmatpush1.bf16.msra.mxu0 %v1497
      %1554 = vmatprep.subr.bf16.mxu0 0
      %1555 = vmatpush1.bf16.msra.mxu0 %v1498
      %1556 = vmatprep.subr.bf16.mxu0 0
      %1557 = vmatpush1.bf16.msra.mxu0 %v1499
      %1558 = vmatprep.subr.bf16.mxu0 0
      %1559 = vmatpush1.bf16.msra.mxu0 %v1500
      %1560 = vmatprep.subr.bf16.mxu0 0
      %1561 = vmatpush1.bf16.msra.mxu0 %v1501
      %1562 = vmatprep.subr.bf16.mxu0 0
      %1563 = vmatpush1.bf16.msra.mxu0 %v1502
      %1564 = vmatprep.subr.bf16.mxu0 0
      %1565 = vmatpush1.bf16.msra.mxu0 %v1503
      %1566 = vmatprep.subr.bf16.mxu0 0
      %1567 = vmatpush1.bf16.msra.mxu0 %v1504
      %1568 = vmatprep.subr.bf16.mxu0 0
      %1569 = vmatpush1.bf16.msra.mxu0 %v1505
      %1570 = vmatprep.mubr.bf16.mxu0 %v612
      %1571 = vmatmul.mubr.bf16.gmra.mrb[0].mxu0 %v611
      %v1572 = vpop.f32.mrb[0].mxu0
      %v1573 = vadd.f32 0.0, %v1572
      %v1574 = vpop.f32.mrb[0].mxu0
      %v1575 = vpop.f32.mrb[0].mxu0
      %v1576 = vadd.f32 0.0, %v1575
      %v1577 = vpop.f32.mrb[0].mxu0
      %1578 = vmatprep.mubr.bf16.mxu0 %v613
      %1579 = vmatmul.mubr.bf16.gmra.mrb[0].mxu0 %v612
      %v1580 = vpop.f32.mrb[0].mxu0
      %v1581 = vadd.f32 0.0, %v1580
      %v1582 = vpop.f32.mrb[0].mxu0
      %v1583 = vpop.f32.mrb[0].mxu0
      %v1584 = vadd.f32 0.0, %v1583
      %v1585 = vpop.f32.mrb[0].mxu0
      %1586 = vmatprep.mubr.bf16.mxu0 %v614
      %1587 = vmatmul.mubr.bf16.gmra.mrb[0].mxu0 %v613
      %v1588 = vpop.f32.mrb[0].mxu0
      %v1589 = vadd.f32 0.0, %v1588
      %v1590 = vpop.f32.mrb[0].mxu0
      %v1591 = vpop.f32.mrb[0].mxu0
      %v1592 = vadd.f32 0.0, %v1591
      %v1593 = vpop.f32.mrb[0].mxu0
      %1594 = vmatprep.mubr.bf16.mxu0 %v615
      %1595 = vmatmul.mubr.bf16.gmra.mrb[0].mxu0 %v614
      %v1596 = vpop.f32.mrb[0].mxu0
      %v1597 = vadd.f32 0.0, %v1596
      %v1598 = vpop.f32.mrb[0].mxu0
      %v1599 = vpop.f32.mrb[0].mxu0
      %v1600 = vadd.f32 0.0, %v1599
      %v1601 = vpop.f32.mrb[0].mxu0
      %1602 = vmatprep.mubr.bf16.mxu0 %v616
      %1603 = vmatmul.mubr.bf16.gmra.mrb[0].mxu0 %v615
      %v1604 = vpop.f32.mrb[0].mxu0
      %v1605 = vadd.f32 0.0, %v1604
      %v1606 = vpop.f32.mrb[0].mxu0
      %v1607 = vpop.f32.mrb[0].mxu0
      %v1608 = vadd.f32 0.0, %v1607
      %v1609 = vpop.f32.mrb[0].mxu0
      %1610 = vmatprep.mubr.bf16.mxu0 %v617
      %1611 = vmatmul.mubr.bf16.gmra.mrb[0].mxu0 %v616
      %v1612 = vpop.f32.mrb[0].mxu0
      %v1613 = vadd.f32 0.0, %v1612
      %v1614 = vpop.f32.mrb[0].mxu0
      %v1615 = vpop.f32.mrb[0].mxu0
      %v1616 = vadd.f32 0.0, %v1615
      %v1617 = vpop.f32.mrb[0].mxu0
      %1618 = vmatprep.mubr.bf16.mxu0 %v618
      %1619 = vmatmul.mubr.bf16.gmra.mrb[0].mxu0 %v617
      %v1620 = vpop.f32.mrb[0].mxu0
      %v1621 = vadd.f32 0.0, %v1620
      %v1622 = vpop.f32.mrb[0].mxu0
      %v1623 = vpop.f32.mrb[0].mxu0
      %v1624 = vadd.f32 0.0, %v1623
      %v1625 = vpop.f32.mrb[0].mxu0
      %1626 = vmatprep.mubr.bf16.mxu0 %v619
      %1627 = vmatmul.mubr.bf16.gmra.mrb[0].mxu0 %v618
      %v1628 = vpop.f32.mrb[0].mxu0
      %v1629 = vadd.f32 0.0, %v1628
      %v1630 = vpop.f32.mrb[0].mxu0
      %v1631 = vpop.f32.mrb[0].mxu0
      %v1632 = vadd.f32 0.0, %v1631
      %v1633 = vpop.f32.mrb[0].mxu0
      %1634 = vdwg.mxu0
      %1635 = vmatprep.subr.bf16.mxu0 0
      %1636 = vmatpush1.bf16.msra.mxu0 %v1506
      %1637 = vmatprep.subr.bf16.mxu0 0
      %1638 = vmatpush1.bf16.msra.mxu0 %v1507
      %1639 = vmatprep.subr.bf16.mxu0 0
      %1640 = vmatpush1.bf16.msra.mxu0 %v1508
      %1641 = vmatprep.subr.bf16.mxu0 0
      %1642 = vmatpush1.bf16.msra.mxu0 %v1509
      %1643 = vmatprep.subr.bf16.mxu0 0
      %1644 = vmatpush1.bf16.msra.mxu0 %v1510
      %1645 = vmatprep.subr.bf16.mxu0 0
      %1646 = vmatpush1.bf16.msra.mxu0 %v1511
      %1647 = vmatprep.subr.bf16.mxu0 0
      %1648 = vmatpush1.bf16.msra.mxu0 %v1512
      %1649 = vmatprep.subr.bf16.mxu0 0
      %1650 = vmatpush1.bf16.msra.mxu0 %v1513
      %1651 = vmatprep.subr.bf16.mxu0 0
      %1652 = vmatpush1.bf16.msra.mxu0 0
      %1653 = vmatprep.subr.bf16.mxu0 0
      %1654 = vmatpush1.bf16.msra.mxu0 0
      %1655 = vmatprep.subr.bf16.mxu0 0
      %1656 = vmatpush1.bf16.msra.mxu0 0
      %1657 = vmatprep.subr.bf16.mxu0 0
      %1658 = vmatpush1.bf16.msra.mxu0 0
      %1659 = vmatprep.subr.bf16.mxu0 0
      %1660 = vmatpush1.bf16.msra.mxu0 0
      %1661 = vmatprep.subr.bf16.mxu0 0
      %1662 = vmatpush1.bf16.msra.mxu0 0
      %1663 = vmatprep.subr.bf16.mxu0 0
      %1664 = vmatpush1.bf16.msra.mxu0 0
      %1665 = vmatprep.subr.bf16.mxu0 0
      %1666 = vmatpush1.bf16.msra.mxu0 0
      %1667 = vmatprep.mubr.bf16.mxu0 0
      %1668 = vmatmul.mubr.bf16.gmra.mrb[0].mxu0 %v613
      %v1669 = vpop.f32.mrb[0].mxu0
      %v1670 = vadd.f32 %v1573, %v1669
      %v1671 = vpop.f32.mrb[0].mxu0
      %v1672 = vpop.f32.mrb[0].mxu0
      %v1673 = vadd.f32 %v1576, %v1672
      %v1674 = vpop.f32.mrb[0].mxu0
      %1675 = vmatprep.mubr.bf16.mxu0 0
      %1676 = vmatmul.mubr.bf16.gmra.mrb[0].mxu0 %v614
      %v1677 = vpop.f32.mrb[0].mxu0
      %v1678 = vadd.f32 %v1581, %v1677
      %v1679 = vpop.f32.mrb[0].mxu0
      %v1680 = vpop.f32.mrb[0].mxu0
      %v1681 = vadd.f32 %v1584, %v1680
      %v1682 = vpop.f32.mrb[0].mxu0
      %1683 = vmatprep.mubr.bf16.mxu0 0
      %1684 = vmatmul.mubr.bf16.gmra.mrb[0].mxu0 %v615
      %v1685 = vpop.f32.mrb[0].mxu0
      %v1686 = vadd.f32 %v1589, %v1685
      %v1687 = vpop.f32.mrb[0].mxu0
      %v1688 = vpop.f32.mrb[0].mxu0
      %v1689 = vadd.f32 %v1592, %v1688
      %v1690 = vpop.f32.mrb[0].mxu0
      %1691 = vmatprep.mubr.bf16.mxu0 0
      %1692 = vmatmul.mubr.bf16.gmra.mrb[0].mxu0 %v616
      %v1693 = vpop.f32.mrb[0].mxu0
      %v1694 = vadd.f32 %v1597, %v1693
      %v1695 = vpop.f32.mrb[0].mxu0
      %v1696 = vpop.f32.mrb[0].mxu0
      %v1697 = vadd.f32 %v1600, %v1696
      %v1698 = vpop.f32.mrb[0].mxu0
      %1699 = vmatprep.mubr.bf16.mxu0 0
      %1700 = vmatmul.mubr.bf16.gmra.mrb[0].mxu0 %v617
      %v1701 = vpop.f32.mrb[0].mxu0
      %v1702 = vadd.f32 %v1605, %v1701
      %v1703 = vpop.f32.mrb[0].mxu0
      %v1704 = vpop.f32.mrb[0].mxu0
      %v1705 = vadd.f32 %v1608, %v1704
      %v1706 = vpop.f32.mrb[0].mxu0
      %1707 = vmatprep.mubr.bf16.mxu0 0
      %1708 = vmatmul.mubr.bf16.gmra.mrb[0].mxu0 %v618
      %v1709 = vpop.f32.mrb[0].mxu0
      %v1710 = vadd.f32 %v1613, %v1709
      %v1711 = vpop.f32.mrb[0].mxu0
      %v1712 = vpop.f32.mrb[0].mxu0
      %v1713 = vadd.f32 %v1616, %v1712
      %v1714 = vpop.f32.mrb[0].mxu0
      %1715 = vmatprep.mubr.bf16.mxu0 0
      %1716 = vmatmul.mubr.bf16.gmra.mrb[0].mxu0 %v619
      %v1717 = vpop.f32.mrb[0].mxu0
      %v1718 = vadd.f32 %v1621, %v1717
      %v1719 = vpop.f32.mrb[0].mxu0
      %v1720 = vpop.f32.mrb[0].mxu0
      %v1721 = vadd.f32 %v1624, %v1720
      %v1722 = vpop.f32.mrb[0].mxu0
      %1723 = vmatprep.mubr.bf16.mxu0 0
      %1724 = vmatmul.mubr.bf16.gmra.mrb[0].mxu0 %v620
      %v1725 = vpop.f32.mrb[0].mxu0
      %v1726 = vadd.f32 %v1629, %v1725
      %v1727 = vpop.f32.mrb[0].mxu0
      %v1728 = vpop.f32.mrb[0].mxu0
      %v1729 = vadd.f32 %v1632, %v1728
      %v1730 = vpop.f32.mrb[0].mxu0
      %1731 = vdwg.mxu0
      %vm1748 = vcmask 1046528
      %v1749 = vrot.slane %v1670, 1
      %v1750 = vrot.slane %v1673, 1
      %v1751 = vsel %vm1748, %v1749, %v1750
      %v1752 = vrot.slane %v1678, 1
      %v1753 = vrot.slane %v1681, 1
      %v1754 = vsel %vm1748, %v1752, %v1753
      %v1755 = vrot.slane %v1686, 1
      %v1756 = vrot.slane %v1689, 1
      %v1757 = vsel %vm1748, %v1755, %v1756
      %v1758 = vrot.slane %v1694, 1
      %v1759 = vrot.slane %v1697, 1
      %v1760 = vsel %vm1748, %v1758, %v1759
      %v1761 = vrot.slane %v1702, 1
      %v1762 = vrot.slane %v1705, 1
      %v1763 = vsel %vm1748, %v1761, %v1762
      %v1764 = vrot.slane %v1710, 1
      %v1765 = vrot.slane %v1713, 1
      %v1766 = vsel %vm1748, %v1764, %v1765
      %v1767 = vrot.slane %v1718, 1
      %v1768 = vrot.slane %v1721, 1
      %v1769 = vsel %vm1748, %v1767, %v1768
      %v1770 = vrot.slane %v1726, 1
      %v1771 = vrot.slane %v1729, 1
      %v1772 = vsel %vm1748, %v1770, %v1771
      %v1789 = vsel %vm1748, %v1750, 0.0
      %v1790 = vsel %vm1748, %v1753, 0.0
      %v1791 = vsel %vm1748, %v1756, 0.0
      %v1792 = vsel %vm1748, %v1759, 0.0
      %v1793 = vsel %vm1748, %v1762, 0.0
      %v1794 = vsel %vm1748, %v1765, 0.0
      %v1795 = vsel %vm1748, %v1768, 0.0
      %v1796 = vsel %vm1748, %v1771, 0.0
      %v1797 = vadd.f32 %v1378, %v1751
      %v1798 = vadd.f32 %v1379, %v1789
      %v1799 = vadd.f32 %v1380, %v1754
      %v1800 = vadd.f32 %v1381, %v1790
      %v1801 = vadd.f32 %v1382, %v1757
      %v1802 = vadd.f32 %v1383, %v1791
      %v1803 = vadd.f32 %v1384, %v1760
      %v1804 = vadd.f32 %v1385, %v1792
      %v1805 = vadd.f32 %v1386, %v1763
      %v1806 = vadd.f32 %v1387, %v1793
      %v1807 = vadd.f32 %v1388, %v1766
      %v1808 = vadd.f32 %v1389, %v1794
      %v1809 = vadd.f32 %v1390, %v1769
      %v1810 = vadd.f32 %v1391, %v1795
      %v1811 = vadd.f32 %v1392, %v1772
      %v1812 = vadd.f32 %v1393, %v1796
      %1813 = vst [vmem:[%s404] sm:$0xff] %v1797
      %1814 = vst [vmem:[%s404 + $0x8] sm:$0xff] %v1798
      %1815 = vst [vmem:[%s404 + $0x10] sm:$0xff] %v1799
      %1816 = vst [vmem:[%s404 + $0x18] sm:$0xff] %v1800
      %1817 = vst [vmem:[%s404 + $0x20] sm:$0xff] %v1801
      %1818 = vst [vmem:[%s404 + $0x28] sm:$0xff] %v1802
      %1819 = vst [vmem:[%s404 + $0x30] sm:$0xff] %v1803
      %1820 = vst [vmem:[%s404 + $0x38] sm:$0xff] %v1804
      %1821 = vst [vmem:[%s404 + $0x40] sm:$0xff] %v1805
      %1822 = vst [vmem:[%s404 + $0x48] sm:$0xff] %v1806
      %1823 = vst [vmem:[%s404 + $0x50] sm:$0xff] %v1807
      %1824 = vst [vmem:[%s404 + $0x58] sm:$0xff] %v1808
      %1825 = vst [vmem:[%s404 + $0x60] sm:$0xff] %v1809
      %1826 = vst [vmem:[%s404 + $0x68] sm:$0xff] %v1810
      %1827 = vst [vmem:[%s404 + $0x70] sm:$0xff] %v1811
      %1828 = vst [vmem:[%s404 + $0x78] sm:$0xff] %v1812
      %v1829 = vadd.f32 %v1797, %v1798
      %v1830 = vadd.f32 %v1829, %v1799
      %v1831 = vadd.f32 %v1830, %v1800
      %v1832 = vadd.f32 %v1831, %v1801
      %v1833 = vadd.f32 %v1832, %v1802
      %v1834 = vadd.f32 %v1833, %v1803
      %v1835 = vadd.f32 %v1834, %v1804
      %v1836 = vadd.f32 %v1835, %v1805
      %v1837 = vadd.f32 %v1836, %v1806
      %v1838 = vadd.f32 %v1837, %v1807
      %v1839 = vadd.f32 %v1838, %v1808
      %v1840 = vadd.f32 %v1839, %v1809
      %v1841 = vadd.f32 %v1840, %v1810
      %v1842 = vadd.f32 %v1841, %v1811
      %v1843 = vadd.f32 %v1842, %v1812
      %v1844 = vrot.slane %v1843, 4
      %v1845 = vadd.f32 %v1843, %v1844
      %v1846 = vrot.slane %v1845, 2
      %v1847 = vadd.f32 %v1845, %v1846
      %v1848 = vrot.slane %v1847, 1
      %v1849 = vadd.f32 %v1847, %v1848
      %v1850 = vmul.f32 %v1849, 0.0078125
      %v1851 = vsub.f32 %v1797, %v1850
      %v1852 = vsub.f32 %v1798, %v1850
      %v1853 = vsub.f32 %v1799, %v1850
      %v1854 = vsub.f32 %v1800, %v1850
      %v1855 = vsub.f32 %v1801, %v1850
      %v1856 = vsub.f32 %v1802, %v1850
      %v1857 = vsub.f32 %v1803, %v1850
      %v1858 = vsub.f32 %v1804, %v1850
      %v1859 = vsub.f32 %v1805, %v1850
      %v1860 = vsub.f32 %v1806, %v1850
      %v1861 = vsub.f32 %v1807, %v1850
      %v1862 = vsub.f32 %v1808, %v1850
      %v1863 = vsub.f32 %v1809, %v1850
      %v1864 = vsub.f32 %v1810, %v1850
      %v1865 = vsub.f32 %v1811, %v1850
      %v1866 = vsub.f32 %v1812, %v1850
      %v1867 = vmul.f32 %v1851, %v1851
      %v1868 = vmul.f32 %v1852, %v1852
      %v1869 = vmul.f32 %v1853, %v1853
      %v1870 = vmul.f32 %v1854, %v1854
      %v1871 = vmul.f32 %v1855, %v1855
      %v1872 = vmul.f32 %v1856, %v1856
      %v1873 = vmul.f32 %v1857, %v1857
      %v1874 = vmul.f32 %v1858, %v1858
      %v1875 = vmul.f32 %v1859, %v1859
      %v1876 = vmul.f32 %v1860, %v1860
      %v1877 = vmul.f32 %v1861, %v1861
      %v1878 = vmul.f32 %v1862, %v1862
      %v1879 = vmul.f32 %v1863, %v1863
      %v1880 = vmul.f32 %v1864, %v1864
      %v1881 = vmul.f32 %v1865, %v1865
      %v1882 = vmul.f32 %v1866, %v1866
      %v1883 = vadd.f32 %v1867, %v1868
      %v1884 = vadd.f32 %v1883, %v1869
      %v1885 = vadd.f32 %v1884, %v1870
      %v1886 = vadd.f32 %v1885, %v1871
      %v1887 = vadd.f32 %v1886, %v1872
      %v1888 = vadd.f32 %v1887, %v1873
      %v1889 = vadd.f32 %v1888, %v1874
      %v1890 = vadd.f32 %v1889, %v1875
      %v1891 = vadd.f32 %v1890, %v1876
      %v1892 = vadd.f32 %v1891, %v1877
      %v1893 = vadd.f32 %v1892, %v1878
      %v1894 = vadd.f32 %v1893, %v1879
      %v1895 = vadd.f32 %v1894, %v1880
      %v1896 = vadd.f32 %v1895, %v1881
      %v1897 = vadd.f32 %v1896, %v1882
      %v1898 = vrot.slane %v1897, 4
      %v1899 = vadd.f32 %v1897, %v1898
      %v1900 = vrot.slane %v1899, 2
      %v1901 = vadd.f32 %v1899, %v1900
      %v1902 = vrot.slane %v1901, 1
      %v1903 = vadd.f32 %v1901, %v1902
      %v1904 = vsel %vm975, %v1849, %v1903
      %1905 = vst [vmem:[%s413] sm:$0x3] %v1904
      %s1906 = smul.u32 8, %s22
      %p1907 = scmp.lt.s32.totalorder %s21, 1
      %s1908 = scalar_select %p1907, %s21, 1
      %p1909 = scmp.lt.s32.totalorder %s1906, 15
      %s1910 = scalar_select %p1909, %s1906, 15
      %s1911 = smul.addr %s1910, 2
      %s1912 = smul.addr %s1908, 32
      %s1913 = sadd.s32 %s1911, %s1912
      %s1914 = smul.addr %s1913, 8
      %s1915 = scalar_lea.vmem %s4, %s1914
      %p1916 = scmp.lt.s32.totalorder %s21, 1
      %s1917 = scalar_select %p1916, %s21, 1
      %p1918 = scmp.lt.s32.totalorder %s22, 1
      %s1919 = scalar_select %p1918, %s22, 1
      %s1920 = smul.addr %s1917, 2
      %s1921 = sadd.s32 %s1919, %s1920
      %s1922 = smul.addr %s1921, 2
      %s1923 = scalar_lea.vmem %s5, %s1922
      // Predicated region
      $region37: #{residual_layer_forward.3} parent=35 // pred_check
        %p1924 = pneg %p170
      $region38: #{residual_layer_forward.3} parent=35 // pred_check_branch
        %1926 = sbr.rel (%p1924) target = $region40
      $region39: #{residual_layer_forward.3} parent=35 // pred_region
        %s1927 = smul.u32 8, %s22
      $region40: #{residual_layer_forward.3} parent=35 // pred_fallthru
        _
      // Predicated region
      $region41: #{residual_layer_forward.3} parent=35 // pred_check
        %p1928 = pneg %p198
      $region42: #{residual_layer_forward.3} parent=35 // pred_check_branch
        %1930 = sbr.rel (%p1928) target = $region44
      $region43: #{residual_layer_forward.3} parent=35 // pred_region
        _
      $region44: #{residual_layer_forward.3} parent=35 // pred_fallthru
        _
    $region36: #{residual_layer_forward.3} parent=5 // pred_fallthru
      _
    %p1931 = scmp.le.s32.totalorder 2, %s12
    // Predicated region
    $region45: #{residual_layer_forward.3} parent=5 // pred_check
      %p1932 = pneg %p1931
    $region46: #{residual_layer_forward.3} parent=5 // pred_check_branch
      %1934 = sbr.rel (%p1932) target = $region48
    $region47: #{residual_layer_forward.3} parent=5 // pred_region
      %s1935 = ssub.s32 %s12, 2
      // Predicated region
      $region49: #{residual_layer_forward.3} parent=47 // pred_check
        %p1936 = pneg %p176
      $region50: #{residual_layer_forward.3} parent=47 // pred_check_branch
        %1938 = sbr.rel (%p1936) target = $region52
      $region51: #{residual_layer_forward.3} parent=47 // pred_region
        %s1939 = smul.u32 8, %s24
        %p1940 = scmp.lt.s32.totalorder %s23, 1
        %s1941 = scalar_select %p1940, %s23, 1
        %p1942 = scmp.lt.s32.totalorder %s1939, 15
        %s1943 = scalar_select %p1942, %s1939, 15
        %s1944 = smul.addr %s1943, 2
        %s1945 = smul.addr %s1941, 32
        %s1946 = sadd.s32 %s1944, %s1945
        %s1947 = smul.addr %s1946, 8
        %s1948 = scalar_lea.vmem %s4, %s1947
      $region52: #{residual_layer_forward.3} parent=47 // pred_fallthru
        _
      // Predicated region
      $region53: #{residual_layer_forward.3} parent=47 // pred_check
        %p1949 = pneg %p204
      $region54: #{residual_layer_forward.3} parent=47 // pred_check_branch
        %1951 = sbr.rel (%p1949) target = $region56
      $region55: #{residual_layer_forward.3} parent=47 // pred_region
        %p1952 = scmp.lt.s32.totalorder %s23, 1
        %s1953 = scalar_select %p1952, %s23, 1
        %p1954 = scmp.lt.s32.totalorder %s24, 1
        %s1955 = scalar_select %p1954, %s24, 1
        %s1956 = smul.addr %s1953, 2
        %s1957 = sadd.s32 %s1955, %s1956
        %s1958 = smul.addr %s1957, 2
        %s1959 = scalar_lea.vmem %s5, %s1958
      $region56: #{residual_layer_forward.3} parent=47 // pred_fallthru
        _
    $region48: #{residual_layer_forward.3} parent=5 // pred_fallthru
      _
  $region6: #{residual_layer_forward.3} parent=0 // loop_footer
    %s16 = sadd.s32 1, %s12
  $region7: #{residual_layer_forward.3} parent=0 // loop_footer_branch
    %11 = sbr.rel target = $region3
  $region8: #{residual_layer_forward.3} parent=0 // loop_exit
    _

// kernel: residual_layer_forward.4
$region0: #{residual_layer_forward.4}
  #allocation0 [shape = 'u32[]', space=smem, size = 0x4, offset = 0x4, fixed_abs, tag = 'smem constant byte address 0x4 - core index']
  #allocation1 [shape = 'u32[144,128]{1,0:T(1,128)}', space=vmem, size = 0x12000, scoped, tag = 'internal scratch']
  %s0 = inlined_call_operand.vmem [shape: f32[2,16,16,128], index: 0, kind: input, shape index: {}, may-alias: {0,1,2}]
  %s1 = inlined_call_operand.vmem [shape: f32[2,16,16,128], index: 1, kind: input, shape index: {}, may-alias: {0,1,2}]
  %s2 = inlined_call_operand.vmem [shape: f32[2,16,16,128], index: 2, kind: input, shape index: {}, may-alias: {0,1,2}]
  %s3 = inlined_call_operand.vmem [shape: bf16[3,384,128], index: 3, kind: input, shape index: {}]
  %s4 = inlined_call_operand.vmem [shape: f32[2,128], index: 4, kind: input, shape index: {}]
  %s5 = inlined_call_operand.vmem [shape: f32[2,16,16,128], index: 5, kind: output, shape index: {0}]
  %s6 = inlined_call_operand.vmem [shape: f32[2,2,2,128], index: 6, kind: output, shape index: {1}]
  %7 = xla_tuple %s5, %s6
  %s8 = sld [smem:[#allocation0]]
  $region61: #{residual_layer_forward.4} parent=0
    _
  %s10 = ssub.s32 1, %s8
  %s11 = scalar_select 0, %s10, %s8
  loop: start=0, step=1, limit=6
  $region2: #{residual_layer_forward.4} parent=0 // loop_pre_header
    _
  $region3: #{residual_layer_forward.4} parent=0 // loop_header
    %s13 = sphi 0, %s17
    %p14 = scmp.ge.s32.totalorder %s13, 6
    %s20 = sphi 0, %s32
    %s21 = sphi 0, %s28
    %s22 = sphi 0, %s20
    %s23 = sphi 0, %s21
    %s24 = sphi 0, %s22
    %s25 = sphi 0, %s23
    %s37 = sphi 0, %s39
    %s40 = sphi 0, %s37
    %s41 = sphi 0, %s40
    %s57 = sphi 0, %s41
    %s73 = sphi 0, %s75
    %s76 = sphi 0, %s73
    %s77 = sphi 0, %s76
    %s93 = sphi 0, %s77
    %s109 = sphi 0, %s111
    %s112 = sphi 0, %s109
    %s113 = sphi 0, %s112
    %s129 = sphi 0, %s113
    %s133 = sphi 0, %s133
    %s135 = sphi 0, %s133
    %s136 = sphi 0, %s135
    %s150 = sphi 0, %s136
    %s154 = sphi 0, %s154
    %s156 = sphi 0, %s154
    %s157 = sphi 0, %s156
    %s171 = sphi 0, %s157
    %s179 = sphi 0, %s181
    %s182 = sphi 0, %s179
    %s183 = sphi 0, %s182
    %s199 = sphi 0, %s183
    %s207 = sphi 0, %s209
    %s210 = sphi 0, %s207
    %s211 = sphi 0, %s210
    %s227 = sphi 0, %s211
  $region4: #{residual_layer_forward.4} parent=0 // loop_header_branch
    %16 = sbr.rel (%p14) target = $region8
  $region5: #{residual_layer_forward.4} parent=0 // loop_body
    %s18 = ssub.s32 %s13, 1
    %s19 = ssub.s32 %s13, 2
    %s26 = sadd.s32 1, %s21
    %p27 = scmp.ge.s32.totalorder %s26, 2
    %s28 = scalar_select %p27, 0, %s26
    %s29 = sadd.s32 1, %s20
    %s30 = scalar_select %p27, %s29, %s20
    %p31 = scmp.ge.s32.totalorder %s30, 2
    %s32 = scalar_select %p31, 0, %s30
    %s33 = ssub.s32 %s20, %s32
    %s34 = ssub.s32 %s21, %s28
    %s35 = sor.u32 %s33, %s34
    %p36 = scmp.eq.s32.totalorder %s35, 0
    %s38 = sadd.s32 %s37, 1
    %s39 = scalar_select %p36, %s37, %s38
    %p42 = pneg %p36
    %p43 = scmp.eq.s32.totalorder %s13, 3
    %p44 = por %p42, %p43
    %p45 = scmp.ne.s32.totalorder %s37, %s40
    %p46 = scmp.eq.s32.totalorder %s13, 0
    %p47 = por %p45, %p46
    %p48 = scmp.ne.s32.totalorder %s37, %s40
    %p49 = scmp.eq.s32.totalorder %s18, 3
    %p50 = por %p48, %p49
    %p51 = scmp.ne.s32.totalorder %s40, %s41
    %p52 = scmp.eq.s32.totalorder %s18, 0
    %p53 = por %p51, %p52
    %p54 = scmp.ne.s32.totalorder %s40, %s41
    %p55 = scmp.eq.s32.totalorder %s19, 3
    %p56 = por %p54, %p55
    %p58 = scmp.ne.s32.totalorder %s41, %s57
    %p59 = scmp.eq.s32.totalorder %s19, 0
    %p60 = por %p58, %p59
    %s61 = smul.u32 %s21, 8
    %s62 = ssub.s32 %s61, 1
    %p63 = scmp.gt.s32.totalorder %s62, 0
    %s64 = scalar_select %p63, %s62, 0
    %s65 = smul.u32 %s28, 8
    %s66 = ssub.s32 %s65, 1
    %p67 = scmp.gt.s32.totalorder %s66, 0
    %s68 = scalar_select %p67, %s66, 0
    %s69 = ssub.s32 %s20, %s32
    %s70 = ssub.s32 %s64, %s68
    %s71 = sor.u32 %s69, %s70
    %p72 = scmp.eq.s32.totalorder %s71, 0
    %s74 = sadd.s32 %s73, 1
    %s75 = scalar_select %p72, %s73, %s74
    %p78 = pneg %p72
    %p79 = scmp.eq.s32.totalorder %s13, 3
    %p80 = por %p78, %p79
    %p81 = scmp.ne.s32.totalorder %s73, %s76
    %p82 = scmp.eq.s32.totalorder %s13, 0
    %p83 = por %p81, %p82
    %p84 = scmp.ne.s32.totalorder %s73, %s76
    %p85 = scmp.eq.s32.totalorder %s18, 3
    %p86 = por %p84, %p85
    %p87 = scmp.ne.s32.totalorder %s76, %s77
    %p88 = scmp.eq.s32.totalorder %s18, 0
    %p89 = por %p87, %p88
    %p90 = scmp.ne.s32.totalorder %s76, %s77
    %p91 = scmp.eq.s32.totalorder %s19, 3
    %p92 = por %p90, %p91
    %p94 = scmp.ne.s32.totalorder %s77, %s93
    %p95 = scmp.eq.s32.totalorder %s19, 0
    %p96 = por %p94, %p95
    %s97 = sadd.s32 %s21, 1
    %s98 = smul.u32 %s97, 8
    %p99 = scmp.lt.s32.totalorder %s98, 15
    %s100 = scalar_select %p99, %s98, 15
    %s101 = sadd.s32 %s28, 1
    %s102 = smul.u32 %s101, 8
    %p103 = scmp.lt.s32.totalorder %s102, 15
    %s104 = scalar_select %p103, %s102, 15
    %s105 = ssub.s32 %s20, %s32
    %s106 = ssub.s32 %s100, %s104
    %s107 = sor.u32 %s105, %s106
    %p108 = scmp.eq.s32.totalorder %s107, 0
    %s110 = sadd.s32 %s109, 1
    %s111 = scalar_select %p108, %s109, %s110
    %p114 = pneg %p108
    %p115 = scmp.eq.s32.totalorder %s13, 3
    %p116 = por %p114, %p115
    %p117 = scmp.ne.s32.totalorder %s109, %s112
    %p118 = scmp.eq.s32.totalorder %s13, 0
    %p119 = por %p117, %p118
    %p120 = scmp.ne.s32.totalorder %s109, %s112
    %p121 = scmp.eq.s32.totalorder %s18, 3
    %p122 = por %p120, %p121
    %p123 = scmp.ne.s32.totalorder %s112, %s113
    %p124 = scmp.eq.s32.totalorder %s18, 0
    %p125 = por %p123, %p124
    %p126 = scmp.ne.s32.totalorder %s112, %s113
    %p127 = scmp.eq.s32.totalorder %s19, 3
    %p128 = por %p126, %p127
    %p130 = scmp.ne.s32.totalorder %s113, %s129
    %p131 = scmp.eq.s32.totalorder %s19, 0
    %p132 = por %p130, %p131
    %s134 = sadd.s32 %s133, 1
    %p137 = scmp.eq.s32.totalorder %s13, 3
    %p138 = scmp.ne.s32.totalorder %s133, %s135
    %p139 = scmp.eq.s32.totalorder %s13, 0
    %p140 = por %p138, %p139
    %p141 = scmp.ne.s32.totalorder %s133, %s135
    %p142 = scmp.eq.s32.totalorder %s18, 3
    %p143 = por %p141, %p142
    %p144 = scmp.ne.s32.totalorder %s135, %s136
    %p145 = scmp.eq.s32.totalorder %s18, 0
    %p146 = por %p144, %p145
    %p147 = scmp.ne.s32.totalorder %s135, %s136
    %p148 = scmp.eq.s32.totalorder %s19, 3
    %p149 = por %p147, %p148
    %p151 = scmp.ne.s32.totalorder %s136, %s150
    %p152 = scmp.eq.s32.totalorder %s19, 0
    %p153 = por %p151, %p152
    %s155 = sadd.s32 %s154, 1
    %p158 = scmp.eq.s32.totalorder %s13, 3
    %p159 = scmp.ne.s32.totalorder %s154, %s156
    %p160 = scmp.eq.s32.totalorder %s13, 0
    %p161 = por %p159, %p160
    %p162 = scmp.ne.s32.totalorder %s154, %s156
    %p163 = scmp.eq.s32.totalorder %s18, 3
    %p164 = por %p162, %p163
    %p165 = scmp.ne.s32.totalorder %s156, %s157
    %p166 = scmp.eq.s32.totalorder %s18, 0
    %p167 = por %p165, %p166
    %p168 = scmp.ne.s32.totalorder %s156, %s157
    %p169 = scmp.eq.s32.totalorder %s19, 3
    %p170 = por %p168, %p169
    %p172 = scmp.ne.s32.totalorder %s157, %s171
    %p173 = scmp.eq.s32.totalorder %s19, 0
    %p174 = por %p172, %p173
    %s175 = ssub.s32 %s20, %s32
    %s176 = ssub.s32 %s21, %s28
    %s177 = sor.u32 %s175, %s176
    %p178 = scmp.eq.s32.totalorder %s177, 0
    %s180 = sadd.s32 %s179, 1
    %s181 = scalar_select %p178, %s179, %s180
    %p184 = pneg %p178
    %p185 = scmp.eq.s32.totalorder %s13, 3
    %p186 = por %p184, %p185
    %p187 = scmp.ne.s32.totalorder %s179, %s182
    %p188 = scmp.eq.s32.totalorder %s13, 0
    %p189 = por %p187, %p188
    %p190 = scmp.ne.s32.totalorder %s179, %s182
    %p191 = scmp.eq.s32.totalorder %s18, 3
    %p192 = por %p190, %p191
    %p193 = scmp.ne.s32.totalorder %s182, %s183
    %p194 = scmp.eq.s32.totalorder %s18, 0
    %p195 = por %p193, %p194
    %p196 = scmp.ne.s32.totalorder %s182, %s183
    %p197 = scmp.eq.s32.totalorder %s19, 3
    %p198 = por %p196, %p197
    %p200 = scmp.ne.s32.totalorder %s183, %s199
    %p201 = scmp.eq.s32.totalorder %s19, 0
    %p202 = por %p200, %p201
    %s203 = ssub.s32 %s20, %s32
    %s204 = ssub.s32 %s21, %s28
    %s205 = sor.u32 %s203, %s204
    %p206 = scmp.eq.s32.totalorder %s205, 0
    %s208 = sadd.s32 %s207, 1
    %s209 = scalar_select %p206, %s207, %s208
    %p212 = pneg %p206
    %p213 = scmp.eq.s32.totalorder %s13, 3
    %p214 = por %p212, %p213
    %p215 = scmp.ne.s32.totalorder %s207, %s210
    %p216 = scmp.eq.s32.totalorder %s13, 0
    %p217 = por %p215, %p216
    %p218 = scmp.ne.s32.totalorder %s207, %s210
    %p219 = scmp.eq.s32.totalorder %s18, 3
    %p220 = por %p218, %p219
    %p221 = scmp.ne.s32.totalorder %s210, %s211
    %p222 = scmp.eq.s32.totalorder %s18, 0
    %p223 = por %p221, %p222
    %p224 = scmp.ne.s32.totalorder %s210, %s211
    %p225 = scmp.eq.s32.totalorder %s19, 3
    %p226 = por %p224, %p225
    %p228 = scmp.ne.s32.totalorder %s211, %s227
    %p229 = scmp.eq.s32.totalorder %s19, 0
    %p230 = por %p228, %p229
    %p231 = scmp.le.s32.totalorder 1, %s13
    %p232 = scmp.lt.s32.totalorder %s13, 5
    %p233 = pnand %p231, %p232
    %p234 = pneg %p233
    // Predicated region
    $region9: #{residual_layer_forward.4} parent=5 // pred_check
      _
    $region10: #{residual_layer_forward.4} parent=5 // pred_check_branch
      %236 = sbr.rel (%p233) target = $region12
    $region11: #{residual_layer_forward.4} parent=5 // pred_region
      %s237 = ssub.s32 %s13, 1
      // Predicated region
      $region13: #{residual_layer_forward.4} parent=11 // pred_check
        %p238 = pneg %p146
      $region14: #{residual_layer_forward.4} parent=11 // pred_check_branch
        %240 = sbr.rel (%p238) target = $region16
      $region15: #{residual_layer_forward.4} parent=11 // pred_region
        _
      $region16: #{residual_layer_forward.4} parent=11 // pred_fallthru
        _
      // Predicated region
      $region17: #{residual_layer_forward.4} parent=11 // pred_check
        %p241 = pneg %p167
      $region18: #{residual_layer_forward.4} parent=11 // pred_check_branch
        %243 = sbr.rel (%p241) target = $region20
      $region19: #{residual_layer_forward.4} parent=11 // pred_region
        _
      $region20: #{residual_layer_forward.4} parent=11 // pred_fallthru
        _
    $region12: #{residual_layer_forward.4} parent=5 // pred_fallthru
      _
    %p244 = scmp.lt.s32.totalorder %s13, 4
    // Predicated region
    $region21: #{residual_layer_forward.4} parent=5 // pred_check
      %p245 = pneg %p244
    $region22: #{residual_layer_forward.4} parent=5 // pred_check_branch
      %247 = sbr.rel (%p245) target = $region24
    $region23: #{residual_layer_forward.4} parent=5 // pred_region
      // Predicated region
      $region25: #{residual_layer_forward.4} parent=23 // pred_check
        %p248 = pneg %p47
      $region26: #{residual_layer_forward.4} parent=23 // pred_check_branch
        %250 = sbr.rel (%p248) target = $region28
      $region27: #{residual_layer_forward.4} parent=23 // pred_region
        %s251 = smul.u32 8, %s21
        %p252 = scmp.lt.s32.totalorder %s20, 1
        %s253 = scalar_select %p252, %s20, 1
        %p254 = scmp.lt.s32.totalorder %s251, 15
        %s255 = scalar_select %p254, %s251, 15
        %s256 = smul.addr %s255, 2
        %s257 = smul.addr %s253, 32
        %s258 = sadd.s32 %s256, %s257
        %s259 = smul.addr %s258, 8
        %s260 = scalar_lea.vmem %s0, %s259
        %s261 = smul.u32 8, %s21
      $region28: #{residual_layer_forward.4} parent=23 // pred_fallthru
        _
      // Predicated region
      $region29: #{residual_layer_forward.4} parent=23 // pred_check
        %p262 = pneg %p83
      $region30: #{residual_layer_forward.4} parent=23 // pred_check_branch
        %264 = sbr.rel (%p262) target = $region32
      $region31: #{residual_layer_forward.4} parent=23 // pred_region
        %s265 = smul.u32 %s21, 8
        %s266 = ssub.s32 %s265, 1
        %p267 = scmp.gt.s32.totalorder %s266, 0
        %s268 = scalar_select %p267, %s266, 0
        %p269 = scmp.lt.s32.totalorder %s20, 1
        %s270 = scalar_select %p269, %s20, 1
        %p271 = scmp.lt.s32.totalorder %s268, 15
        %s272 = scalar_select %p271, %s268, 15
        %s273 = smul.addr %s272, 2
        %s274 = smul.addr %s270, 32
        %s275 = sadd.s32 %s273, %s274
        %s276 = smul.addr %s275, 8
        %s277 = scalar_lea.vmem %s1, %s276
        %s278 = smul.u32 %s21, 8
        %s279 = ssub.s32 %s278, 1
        %p280 = scmp.gt.s32.totalorder %s279, 0
        %s281 = scalar_select %p280, %s279, 0
      $region32: #{residual_layer_forward.4} parent=23 // pred_fallthru
        _
      // Predicated region
      $region33: #{residual_layer_forward.4} parent=23 // pred_check
        %p282 = pneg %p119
      $region34: #{residual_layer_forward.4} parent=23 // pred_check_branch
        %284 = sbr.rel (%p282) target = $region36
      $region35: #{residual_layer_forward.4} parent=23 // pred_region
        %s285 = sadd.s32 %s21, 1
        %s286 = smul.u32 %s285, 8
        %p287 = scmp.lt.s32.totalorder %s286, 15
        %s288 = scalar_select %p287, %s286, 15
        %p289 = scmp.lt.s32.totalorder %s20, 1
        %s290 = scalar_select %p289, %s20, 1
        %p291 = scmp.lt.s32.totalorder %s288, 15
        %s292 = scalar_select %p291, %s288, 15
        %s293 = smul.addr %s292, 2
        %s294 = smul.addr %s290, 32
        %s295 = sadd.s32 %s293, %s294
        %s296 = smul.addr %s295, 8
        %s297 = scalar_lea.vmem %s2, %s296
        %s298 = sadd.s32 %s21, 1
        %s299 = smul.u32 %s298, 8
        %p300 = scmp.lt.s32.totalorder %s299, 15
        %s301 = scalar_select %p300, %s299, 15
      $region36: #{residual_layer_forward.4} parent=23 // pred_fallthru
        _
    $region24: #{residual_layer_forward.4} parent=5 // pred_fallthru
      _
    %p302 = scmp.le.s32.totalorder 1, %s13
    %p303 = scmp.lt.s32.totalorder %s13, 5
    %p304 = pnand %p302, %p303
    %p305 = pneg %p304
    // Predicated region
    $region37: #{residual_layer_forward.4} parent=5 // pred_check
      _
    $region38: #{residual_layer_forward.4} parent=5 // pred_check_branch
      %307 = sbr.rel (%p304) target = $region40
    $region39: #{residual_layer_forward.4} parent=5 // pred_region
      %s308 = ssub.s32 %s13, 1
      %s309 = smul.u32 8, %s23
      %p310 = scmp.lt.s32.totalorder %s22, 1
      %s311 = scalar_select %p310, %s22, 1
      %p312 = scmp.lt.s32.totalorder %s309, 15
      %s313 = scalar_select %p312, %s309, 15
      %s314 = smul.addr %s313, 2
      %s315 = smul.addr %s311, 32
      %s316 = sadd.s32 %s314, %s315
      %s317 = smul.addr %s316, 8
      %s318 = scalar_lea.vmem %s0, %s317
      %p319 = pneg %p53
      %p320 = pneg %p50
      %s321 = smul.u32 %s23, 8
      %s322 = ssub.s32 %s321, 1
      %p323 = scmp.gt.s32.totalorder %s322, 0
      %s324 = scalar_select %p323, %s322, 0
      %p325 = scmp.lt.s32.totalorder %s22, 1
      %s326 = scalar_select %p325, %s22, 1
      %p327 = scmp.lt.s32.totalorder %s324, 15
      %s328 = scalar_select %p327, %s324, 15
      %s329 = smul.addr %s328, 2
      %s330 = smul.addr %s326, 32
      %s331 = sadd.s32 %s329, %s330
      %s332 = smul.addr %s331, 8
      %s333 = scalar_lea.vmem %s1, %s332
      %p334 = pneg %p89
      %p335 = pneg %p86
      %s336 = sadd.s32 %s23, 1
      %s337 = smul.u32 %s336, 8
      %p338 = scmp.lt.s32.totalorder %s337, 15
      %s339 = scalar_select %p338, %s337, 15
      %p340 = scmp.lt.s32.totalorder %s22, 1
      %s341 = scalar_select %p340, %s22, 1
      %p342 = scmp.lt.s32.totalorder %s339, 15
      %s343 = scalar_select %p342, %s339, 15
      %s344 = smul.addr %s343, 2
      %s345 = smul.addr %s341, 32
      %s346 = sadd.s32 %s344, %s345
      %s347 = smul.addr %s346, 8
      %s348 = scalar_lea.vmem %s2, %s347
      %p349 = pneg %p125
      %p350 = pneg %p122
      %p351 = pneg %p146
      %p352 = pneg %p143
      %p353 = pneg %p167
      %p354 = pneg %p164
      %p355 = pneg %p195
      %p356 = pneg %p192
      %s357 = smul.u32 8, %s23
      %p358 = scmp.lt.s32.totalorder %s22, 1
      %s359 = scalar_select %p358, %s22, 1
      %p360 = scmp.lt.s32.totalorder %s357, 15
      %s361 = scalar_select %p360, %s357, 15
      %s362 = smul.addr %s361, 2
      %s363 = smul.addr %s359, 32
      %s364 = sadd.s32 %s362, %s363
      %s365 = smul.addr %s364, 8
      %s366 = scalar_lea.vmem %s5, %s365
      %p367 = pneg %p223
      %p368 = pneg %p220
      %p369 = scmp.lt.s32.totalorder %s22, 1
      %s370 = scalar_select %p369, %s22, 1
      %p371 = scmp.lt.s32.totalorder %s23, 1
      %s372 = scalar_select %p371, %s23, 1
      %s373 = smul.addr %s370, 2
      %s374 = sadd.s32 %s372, %s373
      %s375 = smul.addr %s374, 2
      %s376 = scalar_lea.vmem %s6, %s375
      %s377 = smul.u32 8, %s23
      %p378 = scmp.lt.s32.totalorder %s22, 1
      %s379 = scalar_select %p378, %s22, 1
      %p380 = scmp.lt.s32.totalorder %s377, 15
      %s381 = scalar_select %p380, %s377, 15
      %s382 = smul.addr %s381, 2
      %s383 = smul.addr %s379, 32
      %s384 = sadd.s32 %s382, %s383
      %s385 = smul.addr %s384, 8
      %s386 = scalar_lea.vmem %s0, %s385
      %s387 = smul.u32 8, %s23
      %s388 = smul.u32 %s23, 8
      %s389 = ssub.s32 %s388, 1
      %p390 = scmp.gt.s32.totalorder %s389, 0
      %s391 = scalar_select %p390, %s389, 0
      %p392 = scmp.lt.s32.totalorder %s22, 1
      %s393 = scalar_select %p392, %s22, 1
      %p394 = scmp.lt.s32.totalorder %s391, 15
      %s395 = scalar_select %p394, %s391, 15
      %s396 = smul.addr %s395, 2
      %s397 = smul.addr %s393, 32
      %s398 = sadd.s32 %s396, %s397
      %s399 = smul.addr %s398, 8
      %s400 = scalar_lea.vmem %s1, %s399
      %s401 = smul.u32 %s23, 8
      %s402 = ssub.s32 %s401, 1
      %p403 = scmp.gt.s32.totalorder %s402, 0
      %s404 = scalar_select %p403, %s402, 0
      %s405 = sadd.s32 %s23, 1
      %s406 = smul.u32 %s405, 8
      %p407 = scmp.lt.s32.totalorder %s406, 15
      %s408 = scalar_select %p407, %s406, 15
      %p409 = scmp.lt.s32.totalorder %s22, 1
      %s410 = scalar_select %p409, %s22, 1
      %p411 = scmp.lt.s32.totalorder %s408, 15
      %s412 = scalar_select %p411, %s408, 15
      %s413 = smul.addr %s412, 2
      %s414 = smul.addr %s410, 32
      %s415 = sadd.s32 %s413, %s414
      %s416 = smul.addr %s415, 8
      %s417 = scalar_lea.vmem %s2, %s416
      %s418 = sadd.s32 %s23, 1
      %s419 = smul.u32 %s418, 8
      %p420 = scmp.lt.s32.totalorder %s419, 15
      %s421 = scalar_select %p420, %s419, 15
      %s422 = smul.u32 8, %s23
      %p423 = scmp.lt.s32.totalorder %s22, 1
      %s424 = scalar_select %p423, %s22, 1
      %p425 = scmp.lt.s32.totalorder %s422, 15
      %s426 = scalar_select %p425, %s422, 15
      %s427 = smul.addr %s426, 2
      %s428 = smul.addr %s424, 32
      %s429 = sadd.s32 %s427, %s428
      %s430 = smul.addr %s429, 8
      %s431 = scalar_lea.vmem %s5, %s430
      %s432 = smul.u32 8, %s23
      %p433 = scmp.lt.s32.totalorder %s22, 1
      %s434 = scalar_select %p433, %s22, 1
      %p435 = scmp.lt.s32.totalorder %s23, 1
      %s436 = scalar_select %p435, %s23, 1
      %s437 = smul.addr %s434, 2
      %s438 = sadd.s32 %s436, %s437
      %s439 = smul.addr %s438, 2
      %s440 = scalar_lea.vmem %s6, %s439
      %v442 = vld [vmem:[%s400] sm:$0xff]
      %v443 = vld [vmem:[%s400 + $0x8] sm:$0xff]
      %v444 = vld [vmem:[%s386] sm:$0xff]
      %v445 = vld [vmem:[%s386 + $0x8] sm:$0xff]
      %v446 = vld [vmem:[%s386 + $0x10] sm:$0xff]
      %v447 = vld [vmem:[%s386 + $0x18] sm:$0xff]
      %v448 = vld [vmem:[%s386 + $0x20] sm:$0xff]
      %v449 = vld [vmem:[%s386 + $0x28] sm:$0xff]
      %v450 = vld [vmem:[%s386 + $0x30] sm:$0xff]
      %v451 = vld [vmem:[%s386 + $0x38] sm:$0xff]
      %v452 = vld [vmem:[%s386 + $0x40] sm:$0xff]
      %v453 = vld [vmem:[%s386 + $0x48] sm:$0xff]
      %v454 = vld [vmem:[%s386 + $0x50] sm:$0xff]
      %v455 = vld [vmem:[%s386 + $0x58] sm:$0xff]
      %v456 = vld [vmem:[%s386 + $0x60] sm:$0xff]
      %v457 = vld [vmem:[%s386 + $0x68] sm:$0xff]
      %v458 = vld [vmem:[%s386 + $0x70] sm:$0xff]
      %v459 = vld [vmem:[%s386 + $0x78] sm:$0xff]
      %v460 = vld [vmem:[%s417] sm:$0xff]
      %v461 = vld [vmem:[%s417 + $0x8] sm:$0xff]
      %v462 = vld [vmem:[%s4] sm:$0x1]
      %v463 = vld [vmem:[%s4 + $0x1] sm:$0x1]
      %v464 = vlaneseq
      %v465 = vshrl.u32 %v464, 7
      %v466 = vsub.s32 0, %v465
      %v467 = vrot.slane %v462, %v466
      %v468 = vmul.f32 %v442, %v467
      %v469 = vmul.f32 %v443, %v467
      %v470 = vmul.f32 %v444, %v467
      %v471 = vmul.f32 %v445, %v467
      %v472 = vmul.f32 %v446, %v467
      %v473 = vmul.f32 %v447, %v467
      %v474 = vmul.f32 %v448, %v467
      %v475 = vmul.f32 %v449, %v467
      %v476 = vmul.f32 %v450, %v467
      %v477 = vmul.f32 %v451, %v467
      %v478 = vmul.f32 %v452, %v467
      %v479 = vmul.f32 %v453, %v467
      %v480 = vmul.f32 %v454, %v467
      %v481 = vmul.f32 %v455, %v467
      %v482 = vmul.f32 %v456, %v467
      %v483 = vmul.f32 %v457, %v467
      %v484 = vmul.f32 %v458, %v467
      %v485 = vmul.f32 %v459, %v467
      %v486 = vmul.f32 %v460, %v467
      %v487 = vmul.f32 %v461, %v467
      %v488 = vlaneseq
      %v489 = vshrl.u32 %v488, 7
      %v490 = vsub.s32 0, %v489
      %v491 = vrot.slane %v463, %v490
      %v492 = vadd.f32 %v468, %v491
      %v493 = vadd.f32 %v469, %v491
      %v494 = vadd.f32 %v470, %v491
      %v495 = vadd.f32 %v471, %v491
      %v496 = vadd.f32 %v472, %v491
      %v497 = vadd.f32 %v473, %v491
      %v498 = vadd.f32 %v474, %v491
      %v499 = vadd.f32 %v475, %v491
      %v500 = vadd.f32 %v476, %v491
      %v501 = vadd.f32 %v477, %v491
      %v502 = vadd.f32 %v478, %v491
      %v503 = vadd.f32 %v479, %v491
      %v504 = vadd.f32 %v480, %v491
      %v505 = vadd.f32 %v481, %v491
      %v506 = vadd.f32 %v482, %v491
      %v507 = vadd.f32 %v483, %v491
      %v508 = vadd.f32 %v484, %v491
      %v509 = vadd.f32 %v485, %v491
      %v510 = vadd.f32 %v486, %v491
      %v511 = vadd.f32 %v487, %v491
      %v512 = vmax.f32 %v492, 0.0
      %v513 = vmax.f32 %v493, 0.0
      %v514 = vmax.f32 %v494, 0.0
      %v515 = vmax.f32 %v495, 0.0
      %v516 = vmax.f32 %v496, 0.0
      %v517 = vmax.f32 %v497, 0.0
      %v518 = vmax.f32 %v498, 0.0
      %v519 = vmax.f32 %v499, 0.0
      %v520 = vmax.f32 %v500, 0.0
      %v521 = vmax.f32 %v501, 0.0
      %v522 = vmax.f32 %v502, 0.0
      %v523 = vmax.f32 %v503, 0.0
      %v524 = vmax.f32 %v504, 0.0
      %v525 = vmax.f32 %v505, 0.0
      %v526 = vmax.f32 %v506, 0.0
      %v527 = vmax.f32 %v507, 0.0
      %v528 = vmax.f32 %v508, 0.0
      %v529 = vmax.f32 %v509, 0.0
      %v530 = vmax.f32 %v510, 0.0
      %v531 = vmax.f32 %v511, 0.0
      %p532 = scmp.gt.s32.totalorder %s23, 0
      %s533 = scalar_select %p532, 1, 0
      %v534 = vstv %s533
      %vm535 = vcmp.eq.s32.totalorder %v534, 1
      %p536 = scmp.lt.s32.totalorder %s23, 1
      %s537 = scalar_select %p536, 1, 0
      %v538 = vstv %s537
      %vm539 = vcmp.eq.s32.totalorder %v538, 1
      %v540 = vsel %vm535, 1, 0
      %v541 = vsel %vm539, 1, 0
      %vm542 = vcmp.eq.s32.totalorder %v540, 1
      %vm543 = vcmp.eq.s32.totalorder %v541, 1
      %v544 = vsel %vm542, %v512, 0.0
      %v545 = vsel %vm542, %v513, 0.0
      %v546 = vsel 1, %v514, 0.0
      %v547 = vsel 1, %v515, 0.0
      %v548 = vsel 1, %v516, 0.0
      %v549 = vsel 1, %v517, 0.0
      %v550 = vsel 1, %v518, 0.0
      %v551 = vsel 1, %v519, 0.0
      %v552 = vsel 1, %v520, 0.0
      %v553 = vsel 1, %v521, 0.0
      %v554 = vsel 1, %v522, 0.0
      %v555 = vsel 1, %v523, 0.0
      %v556 = vsel 1, %v524, 0.0
      %v557 = vsel 1, %v525, 0.0
      %v558 = vsel 1, %v526, 0.0
      %v559 = vsel 1, %v527, 0.0
      %v560 = vsel 1, %v528, 0.0
      %v561 = vsel 1, %v529, 0.0
      %v562 = vsel %vm543, %v530, 0.0
      %v563 = vsel %vm543, %v531, 0.0
      %v564 = vld [vmem:[%s3] sm:$0xf]
      %v565 = vld [vmem:[%s3 + $0x4] sm:$0xf]
      %v566 = vld [vmem:[%s3 + $0x8] sm:$0xf]
      %v567 = vld [vmem:[%s3 + $0xc] sm:$0xf]
      %v568 = vld [vmem:[%s3 + $0x10] sm:$0xf]
      %v569 = vld [vmem:[%s3 + $0x14] sm:$0xf]
      %v570 = vld [vmem:[%s3 + $0x18] sm:$0xf]
      %v571 = vld [vmem:[%s3 + $0x1c] sm:$0xf]
      %v572 = vld [vmem:[%s3 + $0x20] sm:$0xf]
      %v573 = vld [vmem:[%s3 + $0x24] sm:$0xf]
      %v574 = vld [vmem:[%s3 + $0x28] sm:$0xf]
      %v575 = vld [vmem:[%s3 + $0x2c] sm:$0xf]
      %v576 = vld [vmem:[%s3 + $0x30] sm:$0xf]
      %v577 = vld [vmem:[%s3 + $0x34] sm:$0xf]
      %v578 = vld [vmem:[%s3 + $0x38] sm:$0xf]
      %v579 = vld [vmem:[%s3 + $0x3c] sm:$0xf]
      %v580 = vld [vmem:[%s3 + $0x40] sm:$0xf]
      %v581 = vld [vmem:[%s3 + $0x44] sm:$0xf]
      %v582 = vld [vmem:[%s3 + $0x48] sm:$0xf]
      %v583 = vld [vmem:[%s3 + $0x4c] sm:$0xf]
      %v584 = vld [vmem:[%s3 + $0x50] sm:$0xf]
      %v585 = vld [vmem:[%s3 + $0x54] sm:$0xf]
      %v586 = vld [vmem:[%s3 + $0x58] sm:$0xf]
      %v587 = vld [vmem:[%s3 + $0x5c] sm:$0xf]
      %v588 = vld [vmem:[%s3 + $0x60] sm:$0xf]
      %v589 = vld [vmem:[%s3 + $0x64] sm:$0xf]
      %v590 = vld [vmem:[%s3 + $0x68] sm:$0xf]
      %v591 = vld [vmem:[%s3 + $0x6c] sm:$0xf]
      %v592 = vld [vmem:[%s3 + $0x70] sm:$0xf]
      %v593 = vld [vmem:[%s3 + $0x74] sm:$0xf]
      %v594 = vld [vmem:[%s3 + $0x78] sm:$0xf]
      %v595 = vld [vmem:[%s3 + $0x7c] sm:$0xf]
      %v596 = vld [vmem:[%s3 + $0x80] sm:$0xf]
      %v597 = vld [vmem:[%s3 + $0x84] sm:$0xf]
      %v598 = vld [vmem:[%s3 + $0x88] sm:$0xf]
      %v599 = vld [vmem:[%s3 + $0x8c] sm:$0xf]
      %v600 = vld [vmem:[%s3 + $0x90] sm:$0xf]
      %v601 = vld [vmem:[%s3 + $0x94] sm:$0xf]
      %v602 = vld [vmem:[%s3 + $0x98] sm:$0xf]
      %v603 = vld [vmem:[%s3 + $0x9c] sm:$0xf]
      %v604 = vld [vmem:[%s3 + $0xa0] sm:$0xf]
      %v605 = vld [vmem:[%s3 + $0xa4] sm:$0xf]
      %v606 = vld [vmem:[%s3 + $0xa8] sm:$0xf]
      %v607 = vld [vmem:[%s3 + $0xac] sm:$0xf]
      %v608 = vld [vmem:[%s3 + $0xb0] sm:$0xf]
      %v609 = vld [vmem:[%s3 + $0xb4] sm:$0xf]
      %v610 = vld [vmem:[%s3 + $0xb8] sm:$0xf]
      %v611 = vld [vmem:[%s3 + $0xbc] sm:$0xf]
      %v612 = vld [vmem:[%s3 + $0xc0] sm:$0xf]
      %v613 = vld [vmem:[%s3 + $0xc4] sm:$0xf]
      %v614 = vld [vmem:[%s3 + $0xc8] sm:$0xf]
      %v615 = vld [vmem:[%s3 + $0xcc] sm:$0xf]
      %v616 = vld [vmem:[%s3 + $0xd0] sm:$0xf]
      %v617 = vld [vmem:[%s3 + $0xd4] sm:$0xf]
      %v618 = vld [vmem:[%s3 + $0xd8] sm:$0xf]
      %v619 = vld [vmem:[%s3 + $0xdc] sm:$0xf]
      %v620 = vld [vmem:[%s3 + $0xe0] sm:$0xf]
      %v621 = vld [vmem:[%s3 + $0xe4] sm:$0xf]
      %v622 = vld [vmem:[%s3 + $0xe8] sm:$0xf]
      %v623 = vld [vmem:[%s3 + $0xec] sm:$0xf]
      %v624 = vld [vmem:[%s3 + $0xf0] sm:$0xf]
      %v625 = vld [vmem:[%s3 + $0xf4] sm:$0xf]
      %v626 = vld [vmem:[%s3 + $0xf8] sm:$0xf]
      %v627 = vld [vmem:[%s3 + $0xfc] sm:$0xf]
      %v628 = vld [vmem:[%s3 + $0x100] sm:$0xf]
      %v629 = vld [vmem:[%s3 + $0x104] sm:$0xf]
      %v630 = vld [vmem:[%s3 + $0x108] sm:$0xf]
      %v631 = vld [vmem:[%s3 + $0x10c] sm:$0xf]
      %v632 = vld [vmem:[%s3 + $0x110] sm:$0xf]
      %v633 = vld [vmem:[%s3 + $0x114] sm:$0xf]
      %v634 = vld [vmem:[%s3 + $0x118] sm:$0xf]
      %v635 = vld [vmem:[%s3 + $0x11c] sm:$0xf]
      %v636 = vld [vmem:[%s3 + $0x120] sm:$0xf]
      %v637 = vld [vmem:[%s3 + $0x124] sm:$0xf]
      %v638 = vld [vmem:[%s3 + $0x128] sm:$0xf]
      %v639 = vld [vmem:[%s3 + $0x12c] sm:$0xf]
      %v640 = vld [vmem:[%s3 + $0x130] sm:$0xf]
      %v641 = vld [vmem:[%s3 + $0x134] sm:$0xf]
      %v642 = vld [vmem:[%s3 + $0x138] sm:$0xf]
      %v643 = vld [vmem:[%s3 + $0x13c] sm:$0xf]
      %v644 = vld [vmem:[%s3 + $0x140] sm:$0xf]
      %v645 = vld [vmem:[%s3 + $0x144] sm:$0xf]
      %v646 = vld [vmem:[%s3 + $0x148] sm:$0xf]
      %v647 = vld [vmem:[%s3 + $0x14c] sm:$0xf]
      %v648 = vld [vmem:[%s3 + $0x150] sm:$0xf]
      %v649 = vld [vmem:[%s3 + $0x154] sm:$0xf]
      %v650 = vld [vmem:[%s3 + $0x158] sm:$0xf]
      %v651 = vld [vmem:[%s3 + $0x15c] sm:$0xf]
      %v652 = vld [vmem:[%s3 + $0x160] sm:$0xf]
      %v653 = vld [vmem:[%s3 + $0x164] sm:$0xf]
      %v654 = vld [vmem:[%s3 + $0x168] sm:$0xf]
      %v655 = vld [vmem:[%s3 + $0x16c] sm:$0xf]
      %v656 = vld [vmem:[%s3 + $0x170] sm:$0xf]
      %v657 = vld [vmem:[%s3 + $0x174] sm:$0xf]
      %v658 = vld [vmem:[%s3 + $0x178] sm:$0xf]
      %v659 = vld [vmem:[%s3 + $0x17c] sm:$0xf]
      %v660 = vld [vmem:[%s3 + $0x180] sm:$0xf]
      %v661 = vld [vmem:[%s3 + $0x184] sm:$0xf]
      %v662 = vld [vmem:[%s3 + $0x188] sm:$0xf]
      %v663 = vld [vmem:[%s3 + $0x18c] sm:$0xf]
      %v664 = vld [vmem:[%s3 + $0x190] sm:$0xf]
      %v665 = vld [vmem:[%s3 + $0x194] sm:$0xf]
      %v666 = vld [vmem:[%s3 + $0x198] sm:$0xf]
      %v667 = vld [vmem:[%s3 + $0x19c] sm:$0xf]
      %v668 = vld [vmem:[%s3 + $0x1a0] sm:$0xf]
      %v669 = vld [vmem:[%s3 + $0x1a4] sm:$0xf]
      %v670 = vld [vmem:[%s3 + $0x1a8] sm:$0xf]
      %v671 = vld [vmem:[%s3 + $0x1ac] sm:$0xf]
      %v672 = vld [vmem:[%s3 + $0x1b0] sm:$0xf]
      %v673 = vld [vmem:[%s3 + $0x1b4] sm:$0xf]
      %v674 = vld [vmem:[%s3 + $0x1b8] sm:$0xf]
      %v675 = vld [vmem:[%s3 + $0x1bc] sm:$0xf]
      %v676 = vld [vmem:[%s3 + $0x1c0] sm:$0xf]
      %v677 = vld [vmem:[%s3 + $0x1c4] sm:$0xf]
      %v678 = vld [vmem:[%s3 + $0x1c8] sm:$0xf]
      %v679 = vld [vmem:[%s3 + $0x1cc] sm:$0xf]
      %v680 = vld [vmem:[%s3 + $0x1d0] sm:$0xf]
      %v681 = vld [vmem:[%s3 + $0x1d4] sm:$0xf]
      %v682 = vld [vmem:[%s3 + $0x1d8] sm:$0xf]
      %v683 = vld [vmem:[%s3 + $0x1dc] sm:$0xf]
      %v684 = vld [vmem:[%s3 + $0x1e0] sm:$0xf]
      %v685 = vld [vmem:[%s3 + $0x1e4] sm:$0xf]
      %v686 = vld [vmem:[%s3 + $0x1e8] sm:$0xf]
      %v687 = vld [vmem:[%s3 + $0x1ec] sm:$0xf]
      %v688 = vld [vmem:[%s3 + $0x1f0] sm:$0xf]
      %v689 = vld [vmem:[%s3 + $0x1f4] sm:$0xf]
      %v690 = vld [vmem:[%s3 + $0x1f8] sm:$0xf]
      %v691 = vld [vmem:[%s3 + $0x1fc] sm:$0xf]
      %v692 = vld [vmem:[%s3 + $0x200] sm:$0xf]
      %v693 = vld [vmem:[%s3 + $0x204] sm:$0xf]
      %v694 = vld [vmem:[%s3 + $0x208] sm:$0xf]
      %v695 = vld [vmem:[%s3 + $0x20c] sm:$0xf]
      %v696 = vld [vmem:[%s3 + $0x210] sm:$0xf]
      %v697 = vld [vmem:[%s3 + $0x214] sm:$0xf]
      %v698 = vld [vmem:[%s3 + $0x218] sm:$0xf]
      %v699 = vld [vmem:[%s3 + $0x21c] sm:$0xf]
      %v700 = vld [vmem:[%s3 + $0x220] sm:$0xf]
      %v701 = vld [vmem:[%s3 + $0x224] sm:$0xf]
      %v702 = vld [vmem:[%s3 + $0x228] sm:$0xf]
      %v703 = vld [vmem:[%s3 + $0x22c] sm:$0xf]
      %v704 = vld [vmem:[%s3 + $0x230] sm:$0xf]
      %v705 = vld [vmem:[%s3 + $0x234] sm:$0xf]
      %v706 = vld [vmem:[%s3 + $0x238] sm:$0xf]
      %v707 = vld [vmem:[%s3 + $0x23c] sm:$0xf]
      %v708 = vpack.c.bf16 %v545, %v544
      %v709 = vpack.c.bf16 %v547, %v546
      %v710 = vpack.c.bf16 %v549, %v548
      %v711 = vpack.c.bf16 %v551, %v550
      %v712 = vpack.c.bf16 %v553, %v552
      %v713 = vpack.c.bf16 %v555, %v554
      %v714 = vpack.c.bf16 %v557, %v556
      %v715 = vpack.c.bf16 %v559, %v558
      %v716 = vpack.c.bf16 %v561, %v560
      %v717 = vpack.c.bf16 %v563, %v562
      %v766 = vunpack.c.l.b16 %v564
      %v767 = vunpack.c.l.b16 %v565
      %v768 = vunpack.c.l.b16 %v566
      %v769 = vunpack.c.l.b16 %v567
      %v770 = vunpack.c.l.b16 %v568
      %v771 = vunpack.c.l.b16 %v569
      %v772 = vunpack.c.l.b16 %v570
      %v773 = vunpack.c.l.b16 %v571
      %v774 = vunpack.c.l.b16 %v572
      %v775 = vunpack.c.l.b16 %v573
      %v776 = vunpack.c.l.b16 %v574
      %v777 = vunpack.c.l.b16 %v575
      %v778 = vunpack.c.l.b16 %v576
      %v779 = vunpack.c.l.b16 %v577
      %v780 = vunpack.c.l.b16 %v578
      %v781 = vunpack.c.l.b16 %v579
      %v782 = vunpack.c.l.b16 %v580
      %v783 = vunpack.c.l.b16 %v581
      %v784 = vunpack.c.l.b16 %v582
      %v785 = vunpack.c.l.b16 %v583
      %v786 = vunpack.c.l.b16 %v584
      %v787 = vunpack.c.l.b16 %v585
      %v788 = vunpack.c.l.b16 %v586
      %v789 = vunpack.c.l.b16 %v587
      %v790 = vunpack.c.l.b16 %v588
      %v791 = vunpack.c.l.b16 %v589
      %v792 = vunpack.c.l.b16 %v590
      %v793 = vunpack.c.l.b16 %v591
      %v794 = vunpack.c.l.b16 %v592
      %v795 = vunpack.c.l.b16 %v593
      %v796 = vunpack.c.l.b16 %v594
      %v797 = vunpack.c.l.b16 %v595
      %v798 = vunpack.c.l.b16 %v596
      %v799 = vunpack.c.l.b16 %v597
      %v800 = vunpack.c.l.b16 %v598
      %v801 = vunpack.c.l.b16 %v599
      %v802 = vunpack.c.l.b16 %v600
      %v803 = vunpack.c.l.b16 %v601
      %v804 = vunpack.c.l.b16 %v602
      %v805 = vunpack.c.l.b16 %v603
      %v806 = vunpack.c.l.b16 %v604
      %v807 = vunpack.c.l.b16 %v605
      %v808 = vunpack.c.l.b16 %v606
      %v809 = vunpack.c.l.b16 %v607
      %v810 = vunpack.c.l.b16 %v608
      %v811 = vunpack.c.l.b16 %v609
      %v812 = vunpack.c.l.b16 %v610
      %v813 = vunpack.c.l.b16 %v611
      %v814 = vpack.c.b16 %v767, %v766
      %v815 = vpack.c.b16 %v769, %v768
      %v816 = vpack.c.b16 %v771, %v770
      %v817 = vpack.c.b16 %v773, %v772
      %v818 = vpack.c.b16 %v775, %v774
      %v819 = vpack.c.b16 %v777, %v776
      %v820 = vpack.c.b16 %v779, %v778
      %v821 = vpack.c.b16 %v781, %v780
      %v822 = vpack.c.b16 %v783, %v782
      %v823 = vpack.c.b16 %v785, %v784
      %v824 = vpack.c.b16 %v787, %v786
      %v825 = vpack.c.b16 %v789, %v788
      %v826 = vpack.c.b16 %v791, %v790
      %v827 = vpack.c.b16 %v793, %v792
      %v828 = vpack.c.b16 %v795, %v794
      %v829 = vpack.c.b16 %v797, %v796
      %v830 = vpack.c.b16 %v799, %v798
      %v831 = vpack.c.b16 %v801, %v800
      %v832 = vpack.c.b16 %v803, %v802
      %v833 = vpack.c.b16 %v805, %v804
      %v834 = vpack.c.b16 %v807, %v806
      %v835 = vpack.c.b16 %v809, %v808
      %v836 = vpack.c.b16 %v811, %v810
      %v837 = vpack.c.b16 %v813, %v812
      %862 = vmatprep.subr.bf16.mxu0 0
      %863 = vmatpush1.bf16.msra.mxu0 %v814
      %864 = vmatprep.subr.bf16.mxu0 0
      %865 = vmatpush1.bf16.msra.mxu0 %v815
      %866 = vmatprep.subr.bf16.mxu0 0
      %867 = vmatpush1.bf16.msra.mxu0 %v816
      %868 = vmatprep.subr.bf16.mxu0 0
      %869 = vmatpush1.bf16.msra.mxu0 %v817
      %870 = vmatprep.subr.bf16.mxu0 0
      %871 = vmatpush1.bf16.msra.mxu0 %v818
      %872 = vmatprep.subr.bf16.mxu0 0
      %873 = vmatpush1.bf16.msra.mxu0 %v819
      %874 = vmatprep.subr.bf16.mxu0 0
      %875 = vmatpush1.bf16.msra.mxu0 %v820
      %876 = vmatprep.subr.bf16.mxu0 0
      %877 = vmatpush1.bf16.msra.mxu0 %v821
      %878 = vmatprep.subr.bf16.mxu0 0
      %879 = vmatpush1.bf16.msra.mxu0 %v822
      %880 = vmatprep.subr.bf16.mxu0 0
      %881 = vmatpush1.bf16.msra.mxu0 %v823
      %882 = vmatprep.subr.bf16.mxu0 0
      %883 = vmatpush1.bf16.msra.mxu0 %v824
      %884 = vmatprep.subr.bf16.mxu0 0
      %885 = vmatpush1.bf16.msra.mxu0 %v825
      %886 = vmatprep.subr.bf16.mxu0 0
      %887 = vmatpush1.bf16.msra.mxu0 %v826
      %888 = vmatprep.subr.bf16.mxu0 0
      %889 = vmatpush1.bf16.msra.mxu0 %v827
      %890 = vmatprep.subr.bf16.mxu0 0
      %891 = vmatpush1.bf16.msra.mxu0 %v828
      %892 = vmatprep.subr.bf16.mxu0 0
      %893 = vmatpush1.bf16.msra.mxu0 %v829
      %894 = vmatprep.mubr.bf16.mxu0 %v709
      %895 = vmatmul.mubr.bf16.gmra.mrb[0].mxu0 %v708
      %v896 = vpop.f32.mrb[0].mxu0
      %v897 = vadd.f32 0.0, %v896
      %v898 = vpop.f32.mrb[0].mxu0
      %v899 = vpop.f32.mrb[0].mxu0
      %v900 = vadd.f32 0.0, %v899
      %v901 = vpop.f32.mrb[0].mxu0
      %902 = vmatprep.mubr.bf16.mxu0 %v710
      %903 = vmatmul.mubr.bf16.gmra.mrb[0].mxu0 %v709
      %v904 = vpop.f32.mrb[0].mxu0
      %v905 = vadd.f32 0.0, %v904
      %v906 = vpop.f32.mrb[0].mxu0
      %v907 = vpop.f32.mrb[0].mxu0
      %v908 = vadd.f32 0.0, %v907
      %v909 = vpop.f32.mrb[0].mxu0
      %910 = vmatprep.mubr.bf16.mxu0 %v711
      %911 = vmatmul.mubr.bf16.gmra.mrb[0].mxu0 %v710
      %v912 = vpop.f32.mrb[0].mxu0
      %v913 = vadd.f32 0.0, %v912
      %v914 = vpop.f32.mrb[0].mxu0
      %v915 = vpop.f32.mrb[0].mxu0
      %v916 = vadd.f32 0.0, %v915
      %v917 = vpop.f32.mrb[0].mxu0
      %918 = vmatprep.mubr.bf16.mxu0 %v712
      %919 = vmatmul.mubr.bf16.gmra.mrb[0].mxu0 %v711
      %v920 = vpop.f32.mrb[0].mxu0
      %v921 = vadd.f32 0.0, %v920
      %v922 = vpop.f32.mrb[0].mxu0
      %v923 = vpop.f32.mrb[0].mxu0
      %v924 = vadd.f32 0.0, %v923
      %v925 = vpop.f32.mrb[0].mxu0
      %926 = vmatprep.mubr.bf16.mxu0 %v713
      %927 = vmatmul.mubr.bf16.gmra.mrb[0].mxu0 %v712
      %v928 = vpop.f32.mrb[0].mxu0
      %v929 = vadd.f32 0.0, %v928
      %v930 = vpop.f32.mrb[0].mxu0
      %v931 = vpop.f32.mrb[0].mxu0
      %v932 = vadd.f32 0.0, %v931
      %v933 = vpop.f32.mrb[0].mxu0
      %934 = vmatprep.mubr.bf16.mxu0 %v714
      %935 = vmatmul.mubr.bf16.gmra.mrb[0].mxu0 %v713
      %v936 = vpop.f32.mrb[0].mxu0
      %v937 = vadd.f32 0.0, %v936
      %v938 = vpop.f32.mrb[0].mxu0
      %v939 = vpop.f32.mrb[0].mxu0
      %v940 = vadd.f32 0.0, %v939
      %v941 = vpop.f32.mrb[0].mxu0
      %942 = vmatprep.mubr.bf16.mxu0 %v715
      %943 = vmatmul.mubr.bf16.gmra.mrb[0].mxu0 %v714
      %v944 = vpop.f32.mrb[0].mxu0
      %v945 = vadd.f32 0.0, %v944
      %v946 = vpop.f32.mrb[0].mxu0
      %v947 = vpop.f32.mrb[0].mxu0
      %v948 = vadd.f32 0.0, %v947
      %v949 = vpop.f32.mrb[0].mxu0
      %950 = vmatprep.mubr.bf16.mxu0 %v716
      %951 = vmatmul.mubr.bf16.gmra.mrb[0].mxu0 %v715
      %v952 = vpop.f32.mrb[0].mxu0
      %v953 = vadd.f32 0.0, %v952
      %v954 = vpop.f32.mrb[0].mxu0
      %v955 = vpop.f32.mrb[0].mxu0
      %v956 = vadd.f32 0.0, %v955
      %v957 = vpop.f32.mrb[0].mxu0
      %958 = vdwg.mxu0
      %959 = vmatprep.subr.bf16.mxu0 0
      %960 = vmatpush1.bf16.msra.mxu0 %v830
      %961 = vmatprep.subr.bf16.mxu0 0
      %962 = vmatpush1.bf16.msra.mxu0 %v831
      %963 = vmatprep.subr.bf16.mxu0 0
      %964 = vmatpush1.bf16.msra.mxu0 %v832
      %965 = vmatprep.subr.bf16.mxu0 0
      %966 = vmatpush1.bf16.msra.mxu0 %v833
      %967 = vmatprep.subr.bf16.mxu0 0
      %968 = vmatpush1.bf16.msra.mxu0 %v834
      %969 = vmatprep.subr.bf16.mxu0 0
      %970 = vmatpush1.bf16.msra.mxu0 %v835
      %971 = vmatprep.subr.bf16.mxu0 0
      %972 = vmatpush1.bf16.msra.mxu0 %v836
      %973 = vmatprep.subr.bf16.mxu0 0
      %974 = vmatpush1.bf16.msra.mxu0 %v837
      %975 = vmatprep.subr.bf16.mxu0 0
      %976 = vmatpush1.bf16.msra.mxu0 0
      %977 = vmatprep.subr.bf16.mxu0 0
      %978 = vmatpush1.bf16.msra.mxu0 0
      %979 = vmatprep.subr.bf16.mxu0 0
      %980 = vmatpush1.bf16.msra.mxu0 0
      %981 = vmatprep.subr.bf16.mxu0 0
      %982 = vmatpush1.bf16.msra.mxu0 0
      %983 = vmatprep.subr.bf16.mxu0 0
      %984 = vmatpush1.bf16.msra.mxu0 0
      %985 = vmatprep.subr.bf16.mxu0 0
      %986 = vmatpush1.bf16.msra.mxu0 0
      %987 = vmatprep.subr.bf16.mxu0 0
      %988 = vmatpush1.bf16.msra.mxu0 0
      %989 = vmatprep.subr.bf16.mxu0 0
      %990 = vmatpush1.bf16.msra.mxu0 0
      %991 = vmatprep.mubr.bf16.mxu0 0
      %992 = vmatmul.mubr.bf16.gmra.mrb[0].mxu0 %v710
      %v993 = vpop.f32.mrb[0].mxu0
      %v994 = vadd.f32 %v897, %v993
      %v995 = vpop.f32.mrb[0].mxu0
      %v996 = vpop.f32.mrb[0].mxu0
      %v997 = vadd.f32 %v900, %v996
      %v998 = vpop.f32.mrb[0].mxu0
      %999 = vmatprep.mubr.bf16.mxu0 0
      %1000 = vmatmul.mubr.bf16.gmra.mrb[0].mxu0 %v711
      %v1001 = vpop.f32.mrb[0].mxu0
      %v1002 = vadd.f32 %v905, %v1001
      %v1003 = vpop.f32.mrb[0].mxu0
      %v1004 = vpop.f32.mrb[0].mxu0
      %v1005 = vadd.f32 %v908, %v1004
      %v1006 = vpop.f32.mrb[0].mxu0
      %1007 = vmatprep.mubr.bf16.mxu0 0
      %1008 = vmatmul.mubr.bf16.gmra.mrb[0].mxu0 %v712
      %v1009 = vpop.f32.mrb[0].mxu0
      %v1010 = vadd.f32 %v913, %v1009
      %v1011 = vpop.f32.mrb[0].mxu0
      %v1012 = vpop.f32.mrb[0].mxu0
      %v1013 = vadd.f32 %v916, %v1012
      %v1014 = vpop.f32.mrb[0].mxu0
      %1015 = vmatprep.mubr.bf16.mxu0 0
      %1016 = vmatmul.mubr.bf16.gmra.mrb[0].mxu0 %v713
      %v1017 = vpop.f32.mrb[0].mxu0
      %v1018 = vadd.f32 %v921, %v1017
      %v1019 = vpop.f32.mrb[0].mxu0
      %v1020 = vpop.f32.mrb[0].mxu0
      %v1021 = vadd.f32 %v924, %v1020
      %v1022 = vpop.f32.mrb[0].mxu0
      %1023 = vmatprep.mubr.bf16.mxu0 0
      %1024 = vmatmul.mubr.bf16.gmra.mrb[0].mxu0 %v714
      %v1025 = vpop.f32.mrb[0].mxu0
      %v1026 = vadd.f32 %v929, %v1025
      %v1027 = vpop.f32.mrb[0].mxu0
      %v1028 = vpop.f32.mrb[0].mxu0
      %v1029 = vadd.f32 %v932, %v1028
      %v1030 = vpop.f32.mrb[0].mxu0
      %1031 = vmatprep.mubr.bf16.mxu0 0
      %1032 = vmatmul.mubr.bf16.gmra.mrb[0].mxu0 %v715
      %v1033 = vpop.f32.mrb[0].mxu0
      %v1034 = vadd.f32 %v937, %v1033
      %v1035 = vpop.f32.mrb[0].mxu0
      %v1036 = vpop.f32.mrb[0].mxu0
      %v1037 = vadd.f32 %v940, %v1036
      %v1038 = vpop.f32.mrb[0].mxu0
      %1039 = vmatprep.mubr.bf16.mxu0 0
      %1040 = vmatmul.mubr.bf16.gmra.mrb[0].mxu0 %v716
      %v1041 = vpop.f32.mrb[0].mxu0
      %v1042 = vadd.f32 %v945, %v1041
      %v1043 = vpop.f32.mrb[0].mxu0
      %v1044 = vpop.f32.mrb[0].mxu0
      %v1045 = vadd.f32 %v948, %v1044
      %v1046 = vpop.f32.mrb[0].mxu0
      %1047 = vmatprep.mubr.bf16.mxu0 0
      %1048 = vmatmul.mubr.bf16.gmra.mrb[0].mxu0 %v717
      %v1049 = vpop.f32.mrb[0].mxu0
      %v1050 = vadd.f32 %v953, %v1049
      %v1051 = vpop.f32.mrb[0].mxu0
      %v1052 = vpop.f32.mrb[0].mxu0
      %v1053 = vadd.f32 %v956, %v1052
      %v1054 = vpop.f32.mrb[0].mxu0
      %1055 = vdwg.mxu0
      %vm1072 = vcmask 1040384
      %v1073 = vrot.slane %v994, 7
      %v1074 = vrot.slane %v997, 7
      %v1075 = vsel %vm1072, %v1073, %v1074
      %v1076 = vrot.slane %v1002, 7
      %v1077 = vrot.slane %v1005, 7
      %v1078 = vsel %vm1072, %v1076, %v1077
      %v1079 = vrot.slane %v1010, 7
      %v1080 = vrot.slane %v1013, 7
      %v1081 = vsel %vm1072, %v1079, %v1080
      %v1082 = vrot.slane %v1018, 7
      %v1083 = vrot.slane %v1021, 7
      %v1084 = vsel %vm1072, %v1082, %v1083
      %v1085 = vrot.slane %v1026, 7
      %v1086 = vrot.slane %v1029, 7
      %v1087 = vsel %vm1072, %v1085, %v1086
      %v1088 = vrot.slane %v1034, 7
      %v1089 = vrot.slane %v1037, 7
      %v1090 = vsel %vm1072, %v1088, %v1089
      %v1091 = vrot.slane %v1042, 7
      %v1092 = vrot.slane %v1045, 7
      %v1093 = vsel %vm1072, %v1091, %v1092
      %v1094 = vrot.slane %v1050, 7
      %v1095 = vrot.slane %v1053, 7
      %v1096 = vsel %vm1072, %v1094, %v1095
      %v1113 = vsel %vm1072, 0.0, %v1073
      %v1114 = vsel %vm1072, 0.0, %v1076
      %v1115 = vsel %vm1072, 0.0, %v1079
      %v1116 = vsel %vm1072, 0.0, %v1082
      %v1117 = vsel %vm1072, 0.0, %v1085
      %v1118 = vsel %vm1072, 0.0, %v1088
      %v1119 = vsel %vm1072, 0.0, %v1091
      %v1120 = vsel %vm1072, 0.0, %v1094
      %v1121 = vadd.f32 %v1113, 0.0
      %v1122 = vadd.f32 %v1075, 0.0
      %v1123 = vadd.f32 %v1114, 0.0
      %v1124 = vadd.f32 %v1078, 0.0
      %v1125 = vadd.f32 %v1115, 0.0
      %v1126 = vadd.f32 %v1081, 0.0
      %v1127 = vadd.f32 %v1116, 0.0
      %v1128 = vadd.f32 %v1084, 0.0
      %v1129 = vadd.f32 %v1117, 0.0
      %v1130 = vadd.f32 %v1087, 0.0
      %v1131 = vadd.f32 %v1118, 0.0
      %v1132 = vadd.f32 %v1090, 0.0
      %v1133 = vadd.f32 %v1119, 0.0
      %v1134 = vadd.f32 %v1093, 0.0
      %v1135 = vadd.f32 %v1120, 0.0
      %v1136 = vadd.f32 %v1096, 0.0
      %v1185 = vunpack.c.l.b16 %v612
      %v1186 = vunpack.c.l.b16 %v613
      %v1187 = vunpack.c.l.b16 %v614
      %v1188 = vunpack.c.l.b16 %v615
      %v1189 = vunpack.c.l.b16 %v616
      %v1190 = vunpack.c.l.b16 %v617
      %v1191 = vunpack.c.l.b16 %v618
      %v1192 = vunpack.c.l.b16 %v619
      %v1193 = vunpack.c.l.b16 %v620
      %v1194 = vunpack.c.l.b16 %v621
      %v1195 = vunpack.c.l.b16 %v622
      %v1196 = vunpack.c.l.b16 %v623
      %v1197 = vunpack.c.l.b16 %v624
      %v1198 = vunpack.c.l.b16 %v625
      %v1199 = vunpack.c.l.b16 %v626
      %v1200 = vunpack.c.l.b16 %v627
      %v1201 = vunpack.c.l.b16 %v628
      %v1202 = vunpack.c.l.b16 %v629
      %v1203 = vunpack.c.l.b16 %v630
      %v1204 = vunpack.c.l.b16 %v631
      %v1205 = vunpack.c.l.b16 %v632
      %v1206 = vunpack.c.l.b16 %v633
      %v1207 = vunpack.c.l.b16 %v634
      %v1208 = vunpack.c.l.b16 %v635
      %v1209 = vunpack.c.l.b16 %v636
      %v1210 = vunpack.c.l.b16 %v637
      %v1211 = vunpack.c.l.b16 %v638
      %v1212 = vunpack.c.l.b16 %v639
      %v1213 = vunpack.c.l.b16 %v640
      %v1214 = vunpack.c.l.b16 %v641
      %v1215 = vunpack.c.l.b16 %v642
      %v1216 = vunpack.c.l.b16 %v643
      %v1217 = vunpack.c.l.b16 %v644
      %v1218 = vunpack.c.l.b16 %v645
      %v1219 = vunpack.c.l.b16 %v646
      %v1220 = vunpack.c.l.b16 %v647
      %v1221 = vunpack.c.l.b16 %v648
      %v1222 = vunpack.c.l.b16 %v649
      %v1223 = vunpack.c.l.b16 %v650
      %v1224 = vunpack.c.l.b16 %v651
      %v1225 = vunpack.c.l.b16 %v652
      %v1226 = vunpack.c.l.b16 %v653
      %v1227 = vunpack.c.l.b16 %v654
      %v1228 = vunpack.c.l.b16 %v655
      %v1229 = vunpack.c.l.b16 %v656
      %v1230 = vunpack.c.l.b16 %v657
      %v1231 = vunpack.c.l.b16 %v658
      %v1232 = vunpack.c.l.b16 %v659
      %v1233 = vpack.c.b16 %v1186, %v1185
      %v1234 = vpack.c.b16 %v1188, %v1187
      %v1235 = vpack.c.b16 %v1190, %v1189
      %v1236 = vpack.c.b16 %v1192, %v1191
      %v1237 = vpack.c.b16 %v1194, %v1193
      %v1238 = vpack.c.b16 %v1196, %v1195
      %v1239 = vpack.c.b16 %v1198, %v1197
      %v1240 = vpack.c.b16 %v1200, %v1199
      %v1241 = vpack.c.b16 %v1202, %v1201
      %v1242 = vpack.c.b16 %v1204, %v1203
      %v1243 = vpack.c.b16 %v1206, %v1205
      %v1244 = vpack.c.b16 %v1208, %v1207
      %v1245 = vpack.c.b16 %v1210, %v1209
      %v1246 = vpack.c.b16 %v1212, %v1211
      %v1247 = vpack.c.b16 %v1214, %v1213
      %v1248 = vpack.c.b16 %v1216, %v1215
      %v1249 = vpack.c.b16 %v1218, %v1217
      %v1250 = vpack.c.b16 %v1220, %v1219
      %v1251 = vpack.c.b16 %v1222, %v1221
      %v1252 = vpack.c.b16 %v1224, %v1223
      %v1253 = vpack.c.b16 %v1226, %v1225
      %v1254 = vpack.c.b16 %v1228, %v1227
      %v1255 = vpack.c.b16 %v1230, %v1229
      %v1256 = vpack.c.b16 %v1232, %v1231
      %1281 = vmatprep.subr.bf16.mxu0 0
      %1282 = vmatpush1.bf16.msra.mxu0 %v1233
      %1283 = vmatprep.subr.bf16.mxu0 0
      %1284 = vmatpush1.bf16.msra.mxu0 %v1234
      %1285 = vmatprep.subr.bf16.mxu0 0
      %1286 = vmatpush1.bf16.msra.mxu0 %v1235
      %1287 = vmatprep.subr.bf16.mxu0 0
      %1288 = vmatpush1.bf16.msra.mxu0 %v1236
      %1289 = vmatprep.subr.bf16.mxu0 0
      %1290 = vmatpush1.bf16.msra.mxu0 %v1237
      %1291 = vmatprep.subr.bf16.mxu0 0
      %1292 = vmatpush1.bf16.msra.mxu0 %v1238
      %1293 = vmatprep.subr.bf16.mxu0 0
      %1294 = vmatpush1.bf16.msra.mxu0 %v1239
      %1295 = vmatprep.subr.bf16.mxu0 0
      %1296 = vmatpush1.bf16.msra.mxu0 %v1240
      %1297 = vmatprep.subr.bf16.mxu0 0
      %1298 = vmatpush1.bf16.msra.mxu0 %v1241
      %1299 = vmatprep.subr.bf16.mxu0 0
      %1300 = vmatpush1.bf16.msra.mxu0 %v1242
      %1301 = vmatprep.subr.bf16.mxu0 0
      %1302 = vmatpush1.bf16.msra.mxu0 %v1243
      %1303 = vmatprep.subr.bf16.mxu0 0
      %1304 = vmatpush1.bf16.msra.mxu0 %v1244
      %1305 = vmatprep.subr.bf16.mxu0 0
      %1306 = vmatpush1.bf16.msra.mxu0 %v1245
      %1307 = vmatprep.subr.bf16.mxu0 0
      %1308 = vmatpush1.bf16.msra.mxu0 %v1246
      %1309 = vmatprep.subr.bf16.mxu0 0
      %1310 = vmatpush1.bf16.msra.mxu0 %v1247
      %1311 = vmatprep.subr.bf16.mxu0 0
      %1312 = vmatpush1.bf16.msra.mxu0 %v1248
      %1313 = vmatprep.mubr.bf16.mxu0 %v709
      %1314 = vmatmul.mubr.bf16.gmra.mrb[0].mxu0 %v708
      %v1315 = vpop.f32.mrb[0].mxu0
      %v1316 = vadd.f32 0.0, %v1315
      %v1317 = vpop.f32.mrb[0].mxu0
      %v1318 = vpop.f32.mrb[0].mxu0
      %v1319 = vadd.f32 0.0, %v1318
      %v1320 = vpop.f32.mrb[0].mxu0
      %1321 = vmatprep.mubr.bf16.mxu0 %v710
      %1322 = vmatmul.mubr.bf16.gmra.mrb[0].mxu0 %v709
      %v1323 = vpop.f32.mrb[0].mxu0
      %v1324 = vadd.f32 0.0, %v1323
      %v1325 = vpop.f32.mrb[0].mxu0
      %v1326 = vpop.f32.mrb[0].mxu0
      %v1327 = vadd.f32 0.0, %v1326
      %v1328 = vpop.f32.mrb[0].mxu0
      %1329 = vmatprep.mubr.bf16.mxu0 %v711
      %1330 = vmatmul.mubr.bf16.gmra.mrb[0].mxu0 %v710
      %v1331 = vpop.f32.mrb[0].mxu0
      %v1332 = vadd.f32 0.0, %v1331
      %v1333 = vpop.f32.mrb[0].mxu0
      %v1334 = vpop.f32.mrb[0].mxu0
      %v1335 = vadd.f32 0.0, %v1334
      %v1336 = vpop.f32.mrb[0].mxu0
      %1337 = vmatprep.mubr.bf16.mxu0 %v712
      %1338 = vmatmul.mubr.bf16.gmra.mrb[0].mxu0 %v711
      %v1339 = vpop.f32.mrb[0].mxu0
      %v1340 = vadd.f32 0.0, %v1339
      %v1341 = vpop.f32.mrb[0].mxu0
      %v1342 = vpop.f32.mrb[0].mxu0
      %v1343 = vadd.f32 0.0, %v1342
      %v1344 = vpop.f32.mrb[0].mxu0
      %1345 = vmatprep.mubr.bf16.mxu0 %v713
      %1346 = vmatmul.mubr.bf16.gmra.mrb[0].mxu0 %v712
      %v1347 = vpop.f32.mrb[0].mxu0
      %v1348 = vadd.f32 0.0, %v1347
      %v1349 = vpop.f32.mrb[0].mxu0
      %v1350 = vpop.f32.mrb[0].mxu0
      %v1351 = vadd.f32 0.0, %v1350
      %v1352 = vpop.f32.mrb[0].mxu0
      %1353 = vmatprep.mubr.bf16.mxu0 %v714
      %1354 = vmatmul.mubr.bf16.gmra.mrb[0].mxu0 %v713
      %v1355 = vpop.f32.mrb[0].mxu0
      %v1356 = vadd.f32 0.0, %v1355
      %v1357 = vpop.f32.mrb[0].mxu0
      %v1358 = vpop.f32.mrb[0].mxu0
      %v1359 = vadd.f32 0.0, %v1358
      %v1360 = vpop.f32.mrb[0].mxu0
      %1361 = vmatprep.mubr.bf16.mxu0 %v715
      %1362 = vmatmul.mubr.bf16.gmra.mrb[0].mxu0 %v714
      %v1363 = vpop.f32.mrb[0].mxu0
      %v1364 = vadd.f32 0.0, %v1363
      %v1365 = vpop.f32.mrb[0].mxu0
      %v1366 = vpop.f32.mrb[0].mxu0
      %v1367 = vadd.f32 0.0, %v1366
      %v1368 = vpop.f32.mrb[0].mxu0
      %1369 = vmatprep.mubr.bf16.mxu0 %v716
      %1370 = vmatmul.mubr.bf16.gmra.mrb[0].mxu0 %v715
      %v1371 = vpop.f32.mrb[0].mxu0
      %v1372 = vadd.f32 0.0, %v1371
      %v1373 = vpop.f32.mrb[0].mxu0
      %v1374 = vpop.f32.mrb[0].mxu0
      %v1375 = vadd.f32 0.0, %v1374
      %v1376 = vpop.f32.mrb[0].mxu0
      %1377 = vdwg.mxu0
      %1378 = vmatprep.subr.bf16.mxu0 0
      %1379 = vmatpush1.bf16.msra.mxu0 %v1249
      %1380 = vmatprep.subr.bf16.mxu0 0
      %1381 = vmatpush1.bf16.msra.mxu0 %v1250
      %1382 = vmatprep.subr.bf16.mxu0 0
      %1383 = vmatpush1.bf16.msra.mxu0 %v1251
      %1384 = vmatprep.subr.bf16.mxu0 0
      %1385 = vmatpush1.bf16.msra.mxu0 %v1252
      %1386 = vmatprep.subr.bf16.mxu0 0
      %1387 = vmatpush1.bf16.msra.mxu0 %v1253
      %1388 = vmatprep.subr.bf16.mxu0 0
      %1389 = vmatpush1.bf16.msra.mxu0 %v1254
      %1390 = vmatprep.subr.bf16.mxu0 0
      %1391 = vmatpush1.bf16.msra.mxu0 %v1255
      %1392 = vmatprep.subr.bf16.mxu0 0
      %1393 = vmatpush1.bf16.msra.mxu0 %v1256
      %1394 = vmatprep.subr.bf16.mxu0 0
      %1395 = vmatpush1.bf16.msra.mxu0 0
      %1396 = vmatprep.subr.bf16.mxu0 0
      %1397 = vmatpush1.bf16.msra.mxu0 0
      %1398 = vmatprep.subr.bf16.mxu0 0
      %1399 = vmatpush1.bf16.msra.mxu0 0
      %1400 = vmatprep.subr.bf16.mxu0 0
      %1401 = vmatpush1.bf16.msra.mxu0 0
      %1402 = vmatprep.subr.bf16.mxu0 0
      %1403 = vmatpush1.bf16.msra.mxu0 0
      %1404 = vmatprep.subr.bf16.mxu0 0
      %1405 = vmatpush1.bf16.msra.mxu0 0
      %1406 = vmatprep.subr.bf16.mxu0 0
      %1407 = vmatpush1.bf16.msra.mxu0 0
      %1408 = vmatprep.subr.bf16.mxu0 0
      %1409 = vmatpush1.bf16.msra.mxu0 0
      %1410 = vmatprep.mubr.bf16.mxu0 0
      %1411 = vmatmul.mubr.bf16.gmra.mrb[0].mxu0 %v710
      %v1412 = vpop.f32.mrb[0].mxu0
      %v1413 = vadd.f32 %v1316, %v1412
      %v1414 = vpop.f32.mrb[0].mxu0
      %v1415 = vpop.f32.mrb[0].mxu0
      %v1416 = vadd.f32 %v1319, %v1415
      %v1417 = vpop.f32.mrb[0].mxu0
      %1418 = vmatprep.mubr.bf16.mxu0 0
      %1419 = vmatmul.mubr.bf16.gmra.mrb[0].mxu0 %v711
      %v1420 = vpop.f32.mrb[0].mxu0
      %v1421 = vadd.f32 %v1324, %v1420
      %v1422 = vpop.f32.mrb[0].mxu0
      %v1423 = vpop.f32.mrb[0].mxu0
      %v1424 = vadd.f32 %v1327, %v1423
      %v1425 = vpop.f32.mrb[0].mxu0
      %1426 = vmatprep.mubr.bf16.mxu0 0
      %1427 = vmatmul.mubr.bf16.gmra.mrb[0].mxu0 %v712
      %v1428 = vpop.f32.mrb[0].mxu0
      %v1429 = vadd.f32 %v1332, %v1428
      %v1430 = vpop.f32.mrb[0].mxu0
      %v1431 = vpop.f32.mrb[0].mxu0
      %v1432 = vadd.f32 %v1335, %v1431
      %v1433 = vpop.f32.mrb[0].mxu0
      %1434 = vmatprep.mubr.bf16.mxu0 0
      %1435 = vmatmul.mubr.bf16.gmra.mrb[0].mxu0 %v713
      %v1436 = vpop.f32.mrb[0].mxu0
      %v1437 = vadd.f32 %v1340, %v1436
      %v1438 = vpop.f32.mrb[0].mxu0
      %v1439 = vpop.f32.mrb[0].mxu0
      %v1440 = vadd.f32 %v1343, %v1439
      %v1441 = vpop.f32.mrb[0].mxu0
      %1442 = vmatprep.mubr.bf16.mxu0 0
      %1443 = vmatmul.mubr.bf16.gmra.mrb[0].mxu0 %v714
      %v1444 = vpop.f32.mrb[0].mxu0
      %v1445 = vadd.f32 %v1348, %v1444
      %v1446 = vpop.f32.mrb[0].mxu0
      %v1447 = vpop.f32.mrb[0].mxu0
      %v1448 = vadd.f32 %v1351, %v1447
      %v1449 = vpop.f32.mrb[0].mxu0
      %1450 = vmatprep.mubr.bf16.mxu0 0
      %1451 = vmatmul.mubr.bf16.gmra.mrb[0].mxu0 %v715
      %v1452 = vpop.f32.mrb[0].mxu0
      %v1453 = vadd.f32 %v1356, %v1452
      %v1454 = vpop.f32.mrb[0].mxu0
      %v1455 = vpop.f32.mrb[0].mxu0
      %v1456 = vadd.f32 %v1359, %v1455
      %v1457 = vpop.f32.mrb[0].mxu0
      %1458 = vmatprep.mubr.bf16.mxu0 0
      %1459 = vmatmul.mubr.bf16.gmra.mrb[0].mxu0 %v716
      %v1460 = vpop.f32.mrb[0].mxu0
      %v1461 = vadd.f32 %v1364, %v1460
      %v1462 = vpop.f32.mrb[0].mxu0
      %v1463 = vpop.f32.mrb[0].mxu0
      %v1464 = vadd.f32 %v1367, %v1463
      %v1465 = vpop.f32.mrb[0].mxu0
      %1466 = vmatprep.mubr.bf16.mxu0 0
      %1467 = vmatmul.mubr.bf16.gmra.mrb[0].mxu0 %v717
      %v1468 = vpop.f32.mrb[0].mxu0
      %v1469 = vadd.f32 %v1372, %v1468
      %v1470 = vpop.f32.mrb[0].mxu0
      %v1471 = vpop.f32.mrb[0].mxu0
      %v1472 = vadd.f32 %v1375, %v1471
      %v1473 = vpop.f32.mrb[0].mxu0
      %1474 = vdwg.mxu0
      %v1475 = vadd.f32 %v1121, %v1413
      %v1476 = vadd.f32 %v1122, %v1416
      %v1477 = vadd.f32 %v1123, %v1421
      %v1478 = vadd.f32 %v1124, %v1424
      %v1479 = vadd.f32 %v1125, %v1429
      %v1480 = vadd.f32 %v1126, %v1432
      %v1481 = vadd.f32 %v1127, %v1437
      %v1482 = vadd.f32 %v1128, %v1440
      %v1483 = vadd.f32 %v1129, %v1445
      %v1484 = vadd.f32 %v1130, %v1448
      %v1485 = vadd.f32 %v1131, %v1453
      %v1486 = vadd.f32 %v1132, %v1456
      %v1487 = vadd.f32 %v1133, %v1461
      %v1488 = vadd.f32 %v1134, %v1464
      %v1489 = vadd.f32 %v1135, %v1469
      %v1490 = vadd.f32 %v1136, %v1472
      %v1539 = vunpack.c.l.b16 %v660
      %v1540 = vunpack.c.l.b16 %v661
      %v1541 = vunpack.c.l.b16 %v662
      %v1542 = vunpack.c.l.b16 %v663
      %v1543 = vunpack.c.l.b16 %v664
      %v1544 = vunpack.c.l.b16 %v665
      %v1545 = vunpack.c.l.b16 %v666
      %v1546 = vunpack.c.l.b16 %v667
      %v1547 = vunpack.c.l.b16 %v668
      %v1548 = vunpack.c.l.b16 %v669
      %v1549 = vunpack.c.l.b16 %v670
      %v1550 = vunpack.c.l.b16 %v671
      %v1551 = vunpack.c.l.b16 %v672
      %v1552 = vunpack.c.l.b16 %v673
      %v1553 = vunpack.c.l.b16 %v674
      %v1554 = vunpack.c.l.b16 %v675
      %v1555 = vunpack.c.l.b16 %v676
      %v1556 = vunpack.c.l.b16 %v677
      %v1557 = vunpack.c.l.b16 %v678
      %v1558 = vunpack.c.l.b16 %v679
      %v1559 = vunpack.c.l.b16 %v680
      %v1560 = vunpack.c.l.b16 %v681
      %v1561 = vunpack.c.l.b16 %v682
      %v1562 = vunpack.c.l.b16 %v683
      %v1563 = vunpack.c.l.b16 %v684
      %v1564 = vunpack.c.l.b16 %v685
      %v1565 = vunpack.c.l.b16 %v686
      %v1566 = vunpack.c.l.b16 %v687
      %v1567 = vunpack.c.l.b16 %v688
      %v1568 = vunpack.c.l.b16 %v689
      %v1569 = vunpack.c.l.b16 %v690
      %v1570 = vunpack.c.l.b16 %v691
      %v1571 = vunpack.c.l.b16 %v692
      %v1572 = vunpack.c.l.b16 %v693
      %v1573 = vunpack.c.l.b16 %v694
      %v1574 = vunpack.c.l.b16 %v695
      %v1575 = vunpack.c.l.b16 %v696
      %v1576 = vunpack.c.l.b16 %v697
      %v1577 = vunpack.c.l.b16 %v698
      %v1578 = vunpack.c.l.b16 %v699
      %v1579 = vunpack.c.l.b16 %v700
      %v1580 = vunpack.c.l.b16 %v701
      %v1581 = vunpack.c.l.b16 %v702
      %v1582 = vunpack.c.l.b16 %v703
      %v1583 = vunpack.c.l.b16 %v704
      %v1584 = vunpack.c.l.b16 %v705
      %v1585 = vunpack.c.l.b16 %v706
      %v1586 = vunpack.c.l.b16 %v707
      %v1587 = vpack.c.b16 %v1540, %v1539
      %v1588 = vpack.c.b16 %v1542, %v1541
      %v1589 = vpack.c.b16 %v1544, %v1543
      %v1590 = vpack.c.b16 %v1546, %v1545
      %v1591 = vpack.c.b16 %v1548, %v1547
      %v1592 = vpack.c.b16 %v1550, %v1549
      %v1593 = vpack.c.b16 %v1552, %v1551
      %v1594 = vpack.c.b16 %v1554, %v1553
      %v1595 = vpack.c.b16 %v1556, %v1555
      %v1596 = vpack.c.b16 %v1558, %v1557
      %v1597 = vpack.c.b16 %v1560, %v1559
      %v1598 = vpack.c.b16 %v1562, %v1561
      %v1599 = vpack.c.b16 %v1564, %v1563
      %v1600 = vpack.c.b16 %v1566, %v1565
      %v1601 = vpack.c.b16 %v1568, %v1567
      %v1602 = vpack.c.b16 %v1570, %v1569
      %v1603 = vpack.c.b16 %v1572, %v1571
      %v1604 = vpack.c.b16 %v1574, %v1573
      %v1605 = vpack.c.b16 %v1576, %v1575
      %v1606 = vpack.c.b16 %v1578, %v1577
      %v1607 = vpack.c.b16 %v1580, %v1579
      %v1608 = vpack.c.b16 %v1582, %v1581
      %v1609 = vpack.c.b16 %v1584, %v1583
      %v1610 = vpack.c.b16 %v1586, %v1585
      %1635 = vmatprep.subr.bf16.mxu0 0
      %1636 = vmatpush1.bf16.msra.mxu0 %v1587
      %1637 = vmatprep.subr.bf16.mxu0 0
      %1638 = vmatpush1.bf16.msra.mxu0 %v1588
      %1639 = vmatprep.subr.bf16.mxu0 0
      %1640 = vmatpush1.bf16.msra.mxu0 %v1589
      %1641 = vmatprep.subr.bf16.mxu0 0
      %1642 = vmatpush1.bf16.msra.mxu0 %v1590
      %1643 = vmatprep.subr.bf16.mxu0 0
      %1644 = vmatpush1.bf16.msra.mxu0 %v1591
      %1645 = vmatprep.subr.bf16.mxu0 0
      %1646 = vmatpush1.bf16.msra.mxu0 %v1592
      %1647 = vmatprep.subr.bf16.mxu0 0
      %1648 = vmatpush1.bf16.msra.mxu0 %v1593
      %1649 = vmatprep.subr.bf16.mxu0 0
      %1650 = vmatpush1.bf16.msra.mxu0 %v1594
      %1651 = vmatprep.subr.bf16.mxu0 0
      %1652 = vmatpush1.bf16.msra.mxu0 %v1595
      %1653 = vmatprep.subr.bf16.mxu0 0
      %1654 = vmatpush1.bf16.msra.mxu0 %v1596
      %1655 = vmatprep.subr.bf16.mxu0 0
      %1656 = vmatpush1.bf16.msra.mxu0 %v1597
      %1657 = vmatprep.subr.bf16.mxu0 0
      %1658 = vmatpush1.bf16.msra.mxu0 %v1598
      %1659 = vmatprep.subr.bf16.mxu0 0
      %1660 = vmatpush1.bf16.msra.mxu0 %v1599
      %1661 = vmatprep.subr.bf16.mxu0 0
      %1662 = vmatpush1.bf16.msra.mxu0 %v1600
      %1663 = vmatprep.subr.bf16.mxu0 0
      %1664 = vmatpush1.bf16.msra.mxu0 %v1601
      %1665 = vmatprep.subr.bf16.mxu0 0
      %1666 = vmatpush1.bf16.msra.mxu0 %v1602
      %1667 = vmatprep.mubr.bf16.mxu0 %v709
      %1668 = vmatmul.mubr.bf16.gmra.mrb[0].mxu0 %v708
      %v1669 = vpop.f32.mrb[0].mxu0
      %v1670 = vadd.f32 0.0, %v1669
      %v1671 = vpop.f32.mrb[0].mxu0
      %v1672 = vpop.f32.mrb[0].mxu0
      %v1673 = vadd.f32 0.0, %v1672
      %v1674 = vpop.f32.mrb[0].mxu0
      %1675 = vmatprep.mubr.bf16.mxu0 %v710
      %1676 = vmatmul.mubr.bf16.gmra.mrb[0].mxu0 %v709
      %v1677 = vpop.f32.mrb[0].mxu0
      %v1678 = vadd.f32 0.0, %v1677
      %v1679 = vpop.f32.mrb[0].mxu0
      %v1680 = vpop.f32.mrb[0].mxu0
      %v1681 = vadd.f32 0.0, %v1680
      %v1682 = vpop.f32.mrb[0].mxu0
      %1683 = vmatprep.mubr.bf16.mxu0 %v711
      %1684 = vmatmul.mubr.bf16.gmra.mrb[0].mxu0 %v710
      %v1685 = vpop.f32.mrb[0].mxu0
      %v1686 = vadd.f32 0.0, %v1685
      %v1687 = vpop.f32.mrb[0].mxu0
      %v1688 = vpop.f32.mrb[0].mxu0
      %v1689 = vadd.f32 0.0, %v1688
      %v1690 = vpop.f32.mrb[0].mxu0
      %1691 = vmatprep.mubr.bf16.mxu0 %v712
      %1692 = vmatmul.mubr.bf16.gmra.mrb[0].mxu0 %v711
      %v1693 = vpop.f32.mrb[0].mxu0
      %v1694 = vadd.f32 0.0, %v1693
      %v1695 = vpop.f32.mrb[0].mxu0
      %v1696 = vpop.f32.mrb[0].mxu0
      %v1697 = vadd.f32 0.0, %v1696
      %v1698 = vpop.f32.mrb[0].mxu0
      %1699 = vmatprep.mubr.bf16.mxu0 %v713
      %1700 = vmatmul.mubr.bf16.gmra.mrb[0].mxu0 %v712
      %v1701 = vpop.f32.mrb[0].mxu0
      %v1702 = vadd.f32 0.0, %v1701
      %v1703 = vpop.f32.mrb[0].mxu0
      %v1704 = vpop.f32.mrb[0].mxu0
      %v1705 = vadd.f32 0.0, %v1704
      %v1706 = vpop.f32.mrb[0].mxu0
      %1707 = vmatprep.mubr.bf16.mxu0 %v714
      %1708 = vmatmul.mubr.bf16.gmra.mrb[0].mxu0 %v713
      %v1709 = vpop.f32.mrb[0].mxu0
      %v1710 = vadd.f32 0.0, %v1709
      %v1711 = vpop.f32.mrb[0].mxu0
      %v1712 = vpop.f32.mrb[0].mxu0
      %v1713 = vadd.f32 0.0, %v1712
      %v1714 = vpop.f32.mrb[0].mxu0
      %1715 = vmatprep.mubr.bf16.mxu0 %v715
      %1716 = vmatmul.mubr.bf16.gmra.mrb[0].mxu0 %v714
      %v1717 = vpop.f32.mrb[0].mxu0
      %v1718 = vadd.f32 0.0, %v1717
      %v1719 = vpop.f32.mrb[0].mxu0
      %v1720 = vpop.f32.mrb[0].mxu0
      %v1721 = vadd.f32 0.0, %v1720
      %v1722 = vpop.f32.mrb[0].mxu0
      %1723 = vmatprep.mubr.bf16.mxu0 %v716
      %1724 = vmatmul.mubr.bf16.gmra.mrb[0].mxu0 %v715
      %v1725 = vpop.f32.mrb[0].mxu0
      %v1726 = vadd.f32 0.0, %v1725
      %v1727 = vpop.f32.mrb[0].mxu0
      %v1728 = vpop.f32.mrb[0].mxu0
      %v1729 = vadd.f32 0.0, %v1728
      %v1730 = vpop.f32.mrb[0].mxu0
      %1731 = vdwg.mxu0
      %1732 = vmatprep.subr.bf16.mxu0 0
      %1733 = vmatpush1.bf16.msra.mxu0 %v1603
      %1734 = vmatprep.subr.bf16.mxu0 0
      %1735 = vmatpush1.bf16.msra.mxu0 %v1604
      %1736 = vmatprep.subr.bf16.mxu0 0
      %1737 = vmatpush1.bf16.msra.mxu0 %v1605
      %1738 = vmatprep.subr.bf16.mxu0 0
      %1739 = vmatpush1.bf16.msra.mxu0 %v1606
      %1740 = vmatprep.subr.bf16.mxu0 0
      %1741 = vmatpush1.bf16.msra.mxu0 %v1607
      %1742 = vmatprep.subr.bf16.mxu0 0
      %1743 = vmatpush1.bf16.msra.mxu0 %v1608
      %1744 = vmatprep.subr.bf16.mxu0 0
      %1745 = vmatpush1.bf16.msra.mxu0 %v1609
      %1746 = vmatprep.subr.bf16.mxu0 0
      %1747 = vmatpush1.bf16.msra.mxu0 %v1610
      %1748 = vmatprep.subr.bf16.mxu0 0
      %1749 = vmatpush1.bf16.msra.mxu0 0
      %1750 = vmatprep.subr.bf16.mxu0 0
      %1751 = vmatpush1.bf16.msra.mxu0 0
      %1752 = vmatprep.subr.bf16.mxu0 0
      %1753 = vmatpush1.bf16.msra.mxu0 0
      %1754 = vmatprep.subr.bf16.mxu0 0
      %1755 = vmatpush1.bf16.msra.mxu0 0
      %1756 = vmatprep.subr.bf16.mxu0 0
      %1757 = vmatpush1.bf16.msra.mxu0 0
      %1758 = vmatprep.subr.bf16.mxu0 0
      %1759 = vmatpush1.bf16.msra.mxu0 0
      %1760 = vmatprep.subr.bf16.mxu0 0
      %1761 = vmatpush1.bf16.msra.mxu0 0
      %1762 = vmatprep.subr.bf16.mxu0 0
      %1763 = vmatpush1.bf16.msra.mxu0 0
      %1764 = vmatprep.mubr.bf16.mxu0 0
      %1765 = vmatmul.mubr.bf16.gmra.mrb[0].mxu0 %v710
      %v1766 = vpop.f32.mrb[0].mxu0
      %v1767 = vadd.f32 %v1670, %v1766
      %v1768 = vpop.f32.mrb[0].mxu0
      %v1769 = vpop.f32.mrb[0].mxu0
      %v1770 = vadd.f32 %v1673, %v1769
      %v1771 = vpop.f32.mrb[0].mxu0
      %1772 = vmatprep.mubr.bf16.mxu0 0
      %1773 = vmatmul.mubr.bf16.gmra.mrb[0].mxu0 %v711
      %v1774 = vpop.f32.mrb[0].mxu0
      %v1775 = vadd.f32 %v1678, %v1774
      %v1776 = vpop.f32.mrb[0].mxu0
      %v1777 = vpop.f32.mrb[0].mxu0
      %v1778 = vadd.f32 %v1681, %v1777
      %v1779 = vpop.f32.mrb[0].mxu0
      %1780 = vmatprep.mubr.bf16.mxu0 0
      %1781 = vmatmul.mubr.bf16.gmra.mrb[0].mxu0 %v712
      %v1782 = vpop.f32.mrb[0].mxu0
      %v1783 = vadd.f32 %v1686, %v1782
      %v1784 = vpop.f32.mrb[0].mxu0
      %v1785 = vpop.f32.mrb[0].mxu0
      %v1786 = vadd.f32 %v1689, %v1785
      %v1787 = vpop.f32.mrb[0].mxu0
      %1788 = vmatprep.mubr.bf16.mxu0 0
      %1789 = vmatmul.mubr.bf16.gmra.mrb[0].mxu0 %v713
      %v1790 = vpop.f32.mrb[0].mxu0
      %v1791 = vadd.f32 %v1694, %v1790
      %v1792 = vpop.f32.mrb[0].mxu0
      %v1793 = vpop.f32.mrb[0].mxu0
      %v1794 = vadd.f32 %v1697, %v1793
      %v1795 = vpop.f32.mrb[0].mxu0
      %1796 = vmatprep.mubr.bf16.mxu0 0
      %1797 = vmatmul.mubr.bf16.gmra.mrb[0].mxu0 %v714
      %v1798 = vpop.f32.mrb[0].mxu0
      %v1799 = vadd.f32 %v1702, %v1798
      %v1800 = vpop.f32.mrb[0].mxu0
      %v1801 = vpop.f32.mrb[0].mxu0
      %v1802 = vadd.f32 %v1705, %v1801
      %v1803 = vpop.f32.mrb[0].mxu0
      %1804 = vmatprep.mubr.bf16.mxu0 0
      %1805 = vmatmul.mubr.bf16.gmra.mrb[0].mxu0 %v715
      %v1806 = vpop.f32.mrb[0].mxu0
      %v1807 = vadd.f32 %v1710, %v1806
      %v1808 = vpop.f32.mrb[0].mxu0
      %v1809 = vpop.f32.mrb[0].mxu0
      %v1810 = vadd.f32 %v1713, %v1809
      %v1811 = vpop.f32.mrb[0].mxu0
      %1812 = vmatprep.mubr.bf16.mxu0 0
      %1813 = vmatmul.mubr.bf16.gmra.mrb[0].mxu0 %v716
      %v1814 = vpop.f32.mrb[0].mxu0
      %v1815 = vadd.f32 %v1718, %v1814
      %v1816 = vpop.f32.mrb[0].mxu0
      %v1817 = vpop.f32.mrb[0].mxu0
      %v1818 = vadd.f32 %v1721, %v1817
      %v1819 = vpop.f32.mrb[0].mxu0
      %1820 = vmatprep.mubr.bf16.mxu0 0
      %1821 = vmatmul.mubr.bf16.gmra.mrb[0].mxu0 %v717
      %v1822 = vpop.f32.mrb[0].mxu0
      %v1823 = vadd.f32 %v1726, %v1822
      %v1824 = vpop.f32.mrb[0].mxu0
      %v1825 = vpop.f32.mrb[0].mxu0
      %v1826 = vadd.f32 %v1729, %v1825
      %v1827 = vpop.f32.mrb[0].mxu0
      %1828 = vdwg.mxu0
      %vm1845 = vcmask 1046528
      %v1846 = vrot.slane %v1767, 1
      %v1847 = vrot.slane %v1770, 1
      %v1848 = vsel %vm1845, %v1846, %v1847
      %v1849 = vrot.slane %v1775, 1
      %v1850 = vrot.slane %v1778, 1
      %v1851 = vsel %vm1845, %v1849, %v1850
      %v1852 = vrot.slane %v1783, 1
      %v1853 = vrot.slane %v1786, 1
      %v1854 = vsel %vm1845, %v1852, %v1853
      %v1855 = vrot.slane %v1791, 1
      %v1856 = vrot.slane %v1794, 1
      %v1857 = vsel %vm1845, %v1855, %v1856
      %v1858 = vrot.slane %v1799, 1
      %v1859 = vrot.slane %v1802, 1
      %v1860 = vsel %vm1845, %v1858, %v1859
      %v1861 = vrot.slane %v1807, 1
      %v1862 = vrot.slane %v1810, 1
      %v1863 = vsel %vm1845, %v1861, %v1862
      %v1864 = vrot.slane %v1815, 1
      %v1865 = vrot.slane %v1818, 1
      %v1866 = vsel %vm1845, %v1864, %v1865
      %v1867 = vrot.slane %v1823, 1
      %v1868 = vrot.slane %v1826, 1
      %v1869 = vsel %vm1845, %v1867, %v1868
      %v1886 = vsel %vm1845, %v1847, 0.0
      %v1887 = vsel %vm1845, %v1850, 0.0
      %v1888 = vsel %vm1845, %v1853, 0.0
      %v1889 = vsel %vm1845, %v1856, 0.0
      %v1890 = vsel %vm1845, %v1859, 0.0
      %v1891 = vsel %vm1845, %v1862, 0.0
      %v1892 = vsel %vm1845, %v1865, 0.0
      %v1893 = vsel %vm1845, %v1868, 0.0
      %v1894 = vadd.f32 %v1475, %v1848
      %v1895 = vadd.f32 %v1476, %v1886
      %v1896 = vadd.f32 %v1477, %v1851
      %v1897 = vadd.f32 %v1478, %v1887
      %v1898 = vadd.f32 %v1479, %v1854
      %v1899 = vadd.f32 %v1480, %v1888
      %v1900 = vadd.f32 %v1481, %v1857
      %v1901 = vadd.f32 %v1482, %v1889
      %v1902 = vadd.f32 %v1483, %v1860
      %v1903 = vadd.f32 %v1484, %v1890
      %v1904 = vadd.f32 %v1485, %v1863
      %v1905 = vadd.f32 %v1486, %v1891
      %v1906 = vadd.f32 %v1487, %v1866
      %v1907 = vadd.f32 %v1488, %v1892
      %v1908 = vadd.f32 %v1489, %v1869
      %v1909 = vadd.f32 %v1490, %v1893
      %1910 = vst [vmem:[%s431] sm:$0xff] %v1894
      %1911 = vst [vmem:[%s431 + $0x8] sm:$0xff] %v1895
      %1912 = vst [vmem:[%s431 + $0x10] sm:$0xff] %v1896
      %1913 = vst [vmem:[%s431 + $0x18] sm:$0xff] %v1897
      %1914 = vst [vmem:[%s431 + $0x20] sm:$0xff] %v1898
      %1915 = vst [vmem:[%s431 + $0x28] sm:$0xff] %v1899
      %1916 = vst [vmem:[%s431 + $0x30] sm:$0xff] %v1900
      %1917 = vst [vmem:[%s431 + $0x38] sm:$0xff] %v1901
      %1918 = vst [vmem:[%s431 + $0x40] sm:$0xff] %v1902
      %1919 = vst [vmem:[%s431 + $0x48] sm:$0xff] %v1903
      %1920 = vst [vmem:[%s431 + $0x50] sm:$0xff] %v1904
      %1921 = vst [vmem:[%s431 + $0x58] sm:$0xff] %v1905
      %1922 = vst [vmem:[%s431 + $0x60] sm:$0xff] %v1906
      %1923 = vst [vmem:[%s431 + $0x68] sm:$0xff] %v1907
      %1924 = vst [vmem:[%s431 + $0x70] sm:$0xff] %v1908
      %1925 = vst [vmem:[%s431 + $0x78] sm:$0xff] %v1909
      %v1926 = vadd.f32 %v1894, %v1895
      %v1927 = vadd.f32 %v1926, %v1896
      %v1928 = vadd.f32 %v1927, %v1897
      %v1929 = vadd.f32 %v1928, %v1898
      %v1930 = vadd.f32 %v1929, %v1899
      %v1931 = vadd.f32 %v1930, %v1900
      %v1932 = vadd.f32 %v1931, %v1901
      %v1933 = vadd.f32 %v1932, %v1902
      %v1934 = vadd.f32 %v1933, %v1903
      %v1935 = vadd.f32 %v1934, %v1904
      %v1936 = vadd.f32 %v1935, %v1905
      %v1937 = vadd.f32 %v1936, %v1906
      %v1938 = vadd.f32 %v1937, %v1907
      %v1939 = vadd.f32 %v1938, %v1908
      %v1940 = vadd.f32 %v1939, %v1909
      %v1941 = vrot.slane %v1940, 4
      %v1942 = vadd.f32 %v1940, %v1941
      %v1943 = vrot.slane %v1942, 2
      %v1944 = vadd.f32 %v1942, %v1943
      %v1945 = vrot.slane %v1944, 1
      %v1946 = vadd.f32 %v1944, %v1945
      %v1947 = vmul.f32 %v1946, 0.0078125
      %v1948 = vsub.f32 %v1894, %v1947
      %v1949 = vsub.f32 %v1895, %v1947
      %v1950 = vsub.f32 %v1896, %v1947
      %v1951 = vsub.f32 %v1897, %v1947
      %v1952 = vsub.f32 %v1898, %v1947
      %v1953 = vsub.f32 %v1899, %v1947
      %v1954 = vsub.f32 %v1900, %v1947
      %v1955 = vsub.f32 %v1901, %v1947
      %v1956 = vsub.f32 %v1902, %v1947
      %v1957 = vsub.f32 %v1903, %v1947
      %v1958 = vsub.f32 %v1904, %v1947
      %v1959 = vsub.f32 %v1905, %v1947
      %v1960 = vsub.f32 %v1906, %v1947
      %v1961 = vsub.f32 %v1907, %v1947
      %v1962 = vsub.f32 %v1908, %v1947
      %v1963 = vsub.f32 %v1909, %v1947
      %v1964 = vmul.f32 %v1948, %v1948
      %v1965 = vmul.f32 %v1949, %v1949
      %v1966 = vmul.f32 %v1950, %v1950
      %v1967 = vmul.f32 %v1951, %v1951
      %v1968 = vmul.f32 %v1952, %v1952
      %v1969 = vmul.f32 %v1953, %v1953
      %v1970 = vmul.f32 %v1954, %v1954
      %v1971 = vmul.f32 %v1955, %v1955
      %v1972 = vmul.f32 %v1956, %v1956
      %v1973 = vmul.f32 %v1957, %v1957
      %v1974 = vmul.f32 %v1958, %v1958
      %v1975 = vmul.f32 %v1959, %v1959
      %v1976 = vmul.f32 %v1960, %v1960
      %v1977 = vmul.f32 %v1961, %v1961
      %v1978 = vmul.f32 %v1962, %v1962
      %v1979 = vmul.f32 %v1963, %v1963
      %v1980 = vadd.f32 %v1964, %v1965
      %v1981 = vadd.f32 %v1980, %v1966
      %v1982 = vadd.f32 %v1981, %v1967
      %v1983 = vadd.f32 %v1982, %v1968
      %v1984 = vadd.f32 %v1983, %v1969
      %v1985 = vadd.f32 %v1984, %v1970
      %v1986 = vadd.f32 %v1985, %v1971
      %v1987 = vadd.f32 %v1986, %v1972
      %v1988 = vadd.f32 %v1987, %v1973
      %v1989 = vadd.f32 %v1988, %v1974
      %v1990 = vadd.f32 %v1989, %v1975
      %v1991 = vadd.f32 %v1990, %v1976
      %v1992 = vadd.f32 %v1991, %v1977
      %v1993 = vadd.f32 %v1992, %v1978
      %v1994 = vadd.f32 %v1993, %v1979
      %v1995 = vrot.slane %v1994, 4
      %v1996 = vadd.f32 %v1994, %v1995
      %v1997 = vrot.slane %v1996, 2
      %v1998 = vadd.f32 %v1996, %v1997
      %v1999 = vrot.slane %v1998, 1
      %v2000 = vadd.f32 %v1998, %v1999
      %v2001 = vsel %vm1072, %v1946, %v2000
      %2002 = vst [vmem:[%s440] sm:$0x3] %v2001
      %s2003 = smul.u32 8, %s23
      %p2004 = scmp.lt.s32.totalorder %s22, 1
      %s2005 = scalar_select %p2004, %s22, 1
      %p2006 = scmp.lt.s32.totalorder %s2003, 15
      %s2007 = scalar_select %p2006, %s2003, 15
      %s2008 = smul.addr %s2007, 2
      %s2009 = smul.addr %s2005, 32
      %s2010 = sadd.s32 %s2008, %s2009
      %s2011 = smul.addr %s2010, 8
      %s2012 = scalar_lea.vmem %s5, %s2011
      %p2013 = scmp.lt.s32.totalorder %s22, 1
      %s2014 = scalar_select %p2013, %s22, 1
      %p2015 = scmp.lt.s32.totalorder %s23, 1
      %s2016 = scalar_select %p2015, %s23, 1
      %s2017 = smul.addr %s2014, 2
      %s2018 = sadd.s32 %s2016, %s2017
      %s2019 = smul.addr %s2018, 2
      %s2020 = scalar_lea.vmem %s6, %s2019
      // Predicated region
      $region41: #{residual_layer_forward.4} parent=39 // pred_check
        %p2021 = pneg %p192
      $region42: #{residual_layer_forward.4} parent=39 // pred_check_branch
        %2023 = sbr.rel (%p2021) target = $region44
      $region43: #{residual_layer_forward.4} parent=39 // pred_region
        %s2024 = smul.u32 8, %s23
      $region44: #{residual_layer_forward.4} parent=39 // pred_fallthru
        _
      // Predicated region
      $region45: #{residual_layer_forward.4} parent=39 // pred_check
        %p2025 = pneg %p220
      $region46: #{residual_layer_forward.4} parent=39 // pred_check_branch
        %2027 = sbr.rel (%p2025) target = $region48
      $region47: #{residual_layer_forward.4} parent=39 // pred_region
        _
      $region48: #{residual_layer_forward.4} parent=39 // pred_fallthru
        _
    $region40: #{residual_layer_forward.4} parent=5 // pred_fallthru
      _
    %p2028 = scmp.le.s32.totalorder 2, %s13
    // Predicated region
    $region49: #{residual_layer_forward.4} parent=5 // pred_check
      %p2029 = pneg %p2028
    $region50: #{residual_layer_forward.4} parent=5 // pred_check_branch
      %2031 = sbr.rel (%p2029) target = $region52
    $region51: #{residual_layer_forward.4} parent=5 // pred_region
      %s2032 = ssub.s32 %s13, 2
      // Predicated region
      $region53: #{residual_layer_forward.4} parent=51 // pred_check
        %p2033 = pneg %p198
      $region54: #{residual_layer_forward.4} parent=51 // pred_check_branch
        %2035 = sbr.rel (%p2033) target = $region56
      $region55: #{residual_layer_forward.4} parent=51 // pred_region
        %s2036 = smul.u32 8, %s25
        %p2037 = scmp.lt.s32.totalorder %s24, 1
        %s2038 = scalar_select %p2037, %s24, 1
        %p2039 = scmp.lt.s32.totalorder %s2036, 15
        %s2040 = scalar_select %p2039, %s2036, 15
        %s2041 = smul.addr %s2040, 2
        %s2042 = smul.addr %s2038, 32
        %s2043 = sadd.s32 %s2041, %s2042
        %s2044 = smul.addr %s2043, 8
        %s2045 = scalar_lea.vmem %s5, %s2044
      $region56: #{residual_layer_forward.4} parent=51 // pred_fallthru
        _
      // Predicated region
      $region57: #{residual_layer_forward.4} parent=51 // pred_check
        %p2046 = pneg %p226
      $region58: #{residual_layer_forward.4} parent=51 // pred_check_branch
        %2048 = sbr.rel (%p2046) target = $region60
      $region59: #{residual_layer_forward.4} parent=51 // pred_region
        %p2049 = scmp.lt.s32.totalorder %s24, 1
        %s2050 = scalar_select %p2049, %s24, 1
        %p2051 = scmp.lt.s32.totalorder %s25, 1
        %s2052 = scalar_select %p2051, %s25, 1
        %s2053 = smul.addr %s2050, 2
        %s2054 = sadd.s32 %s2052, %s2053
        %s2055 = smul.addr %s2054, 2
        %s2056 = scalar_lea.vmem %s6, %s2055
      $region60: #{residual_layer_forward.4} parent=51 // pred_fallthru
        _
    $region52: #{residual_layer_forward.4} parent=5 // pred_fallthru
      _
  $region6: #{residual_layer_forward.4} parent=0 // loop_footer
    %s17 = sadd.s32 1, %s13
  $region7: #{residual_layer_forward.4} parent=0 // loop_footer_branch
    %12 = sbr.rel target = $region3
  $region8: #{residual_layer_forward.4} parent=0 // loop_exit
    _

</llo_original>
